<compile_context>
chip_gen: v7x
topology: tpu7x:2x2x1
jax: 0.10.0
libtpu: 0.0.40
codegen_flags: <defaults>
</compile_context>

<pallas_src>
import math
import jax
import jax.numpy as jnp
from jax.experimental import pallas as pl
from jax.experimental.pallas import tpu as pltpu

# Model hyperparameters (small, consistent with the module).
D_MODEL = 32
N_HEAD = 4
HEAD_DIM = D_MODEL // N_HEAD
D_FF = 4 * D_MODEL
LN_EPS = 1e-5
N_LAYERS = 2

# Rows of the per-layer small-vector slab (width = D_FF = 128 lanes).
SLAB_W = D_FF
(SLAB_B1, SLAB_BO, SLAB_G1, SLAB_BE1, SLAB_B2, SLAB_G2, SLAB_BE2) = range(7)
SLAB_ROWS = 7


def _layernorm(x, gamma, beta, eps):
    mu = jnp.mean(x, axis=-1, keepdims=True)
    var = jnp.mean((x - mu) ** 2, axis=-1, keepdims=True)
    return (x - mu) * jax.lax.rsqrt(var + eps) * gamma + beta


def encoder_kernel(x_ref, wqkv_ref, bqkv_ref, wo_ref, w1_ref, w2_ref, slab_ref, o_ref):
    # x block: (1, T, D) -> one batch element per grid step, carried through all layers.
    x = x_ref[0]                                            # (T, D) f32
    T = x.shape[0]
    n_layers = wqkv_ref.shape[0]                            # static

    for l in range(n_layers):                               # statically unrolled layer loop
        wqkv = wqkv_ref[l]                                  # (H, D, 3*hd), Q scale pre-folded
        bqkv = bqkv_ref[l]                                  # (H, 1, 3*hd)
        wo = wo_ref[l]                                      # (H, hd, D)
        w1 = w1_ref[l]                                      # (D, D_FF)
        w2 = w2_ref[l]                                      # (D_FF, D)
        slab = slab_ref[l]                                  # (7, 128)

        b1 = slab[SLAB_B1:SLAB_B1 + 1, :D_FF]               # (1, D_FF)
        bo = slab[SLAB_BO:SLAB_BO + 1, :D_MODEL]            # (1, D)
        g1 = slab[SLAB_G1:SLAB_G1 + 1, :D_MODEL]
        be1 = slab[SLAB_BE1:SLAB_BE1 + 1, :D_MODEL]
        b2 = slab[SLAB_B2:SLAB_B2 + 1, :D_MODEL]
        g2 = slab[SLAB_G2:SLAB_G2 + 1, :D_MODEL]
        be2 = slab[SLAB_BE2:SLAB_BE2 + 1, :D_MODEL]

        # ---- fused QKV projection: one head-batched contraction (4 MXU dispatches) ----
        xb = jnp.broadcast_to(x, (N_HEAD, T, D_MODEL))       # leading-dim broadcast only
        qkv = jnp.einsum('htd,hdk->htk', xb, wqkv,
                         preferred_element_type=jnp.float32) + bqkv   # (H, T, 3*hd)
        q = qkv[:, :, :HEAD_DIM]                              # scale already folded into wqkv/bqkv
        k = qkv[:, :, HEAD_DIM:2 * HEAD_DIM]
        v = qkv[:, :, 2 * HEAD_DIM:]

        # ---- scaled dot-product attention (default attn_mask=None path) ----
        s = jnp.einsum('htd,hsd->hts', q, k, preferred_element_type=jnp.float32)   # (H, T, T)
        s = s - jnp.max(s, axis=-1, keepdims=True)
        p = jnp.exp(s)
        p = p * pl.reciprocal(jnp.sum(p, axis=-1, keepdims=True), approx=True)     # EUP slot
        ctx = jnp.einsum('hts,hsd->htd', p, v, preferred_element_type=jnp.float32)  # (H, T, hd)

        # ---- output projection: per-head partial projections summed over heads
        #      (== concat(heads) @ Wo.T, no lane slicing / concatenate) ----
        attn = jnp.sum(
            jnp.einsum('htd,hdk->htk', ctx, wo, preferred_element_type=jnp.float32),
            axis=0) + bo                                                             # (T, D)

        # ---- residual + LayerNorm1 (dropout is identity in eval mode) ----
        y = _layernorm(x + attn, g1, be1, LN_EPS)

        # ---- feed-forward: linear1 -> relu -> linear2 (weights pre-transposed: x @ W) ----
        h1 = jnp.maximum(
            jnp.dot(y, w1, preferred_element_type=jnp.float32) + b1, 0.0)            # (T, D_FF)
        ff = jnp.dot(h1, w2, preferred_element_type=jnp.float32) + b2                # (T, D)
        x = _layernorm(y + ff, g2, be2, LN_EPS)

    o_ref[0] = x.astype(o_ref.dtype)


_PACK_ORDER = ("wqkv", "bqkv", "wo", "w1", "w2", "slab")


def transformer_encoder(x, packed):
    """Single pallas_call over all layers.  `packed` holds layer-stacked kernel-layout params."""
    B, T, D = x.shape
    params = [packed[n] for n in _PACK_ORDER]

    def whole(a):  # whole-array, replicated over the grid (VMEM-resident, no re-DMA per step)
        r = a.ndim
        return pl.BlockSpec(a.shape, lambda b, _r=r: (0,) * _r)

    in_specs = [pl.BlockSpec((1, T, D), lambda b: (b, 0, 0))] + [whole(a) for a in params]

    return pl.pallas_call(
        encoder_kernel,
        out_shape=jax.ShapeDtypeStruct((B, T, D), x.dtype),
        grid_spec=pltpu.PrefetchScalarGridSpec(
            num_scalar_prefetch=0,
            grid=(B,),
            in_specs=in_specs,
            out_specs=pl.BlockSpec((1, T, D), lambda b: (b, 0, 0)),
        ),
        compiler_params=pltpu.CompilerParams(dimension_semantics=("parallel",)),
    )(x, *params)


# ---------------------------- parameter handling ----------------------------

def init_layer_params(key):
    """PyTorch-layout parameters for one TransformerEncoderLayer."""
    ks = jax.random.split(key, 8)

    def xavier(k, shape):
        fan_out, fan_in = shape
        bound = math.sqrt(6.0 / (fan_in + fan_out))
        return jax.random.uniform(k, shape, jnp.float32, -bound, bound)

    D = D_MODEL
    return {
        "in_proj_w": xavier(ks[0], (3 * D, D)),
        "in_proj_b": jax.random.normal(ks[1], (3 * D,), jnp.float32) * 0.02,
        "out_proj_w": xavier(ks[2], (D, D)),
        "out_proj_b": jax.random.normal(ks[3], (D,), jnp.float32) * 0.02,
        "ln1_g": jnp.ones((D,), jnp.float32),
        "ln1_b": jnp.zeros((D,), jnp.float32),
        "lin1_w": xavier(ks[4], (D_FF, D)),
        "lin1_b": jax.random.normal(ks[5], (D_FF,), jnp.float32) * 0.02,
        "lin2_w": xavier(ks[6], (D, D_FF)),
        "lin2_b": jax.random.normal(ks[7], (D,), jnp.float32) * 0.02,
        "ln2_g": jnp.ones((D,), jnp.float32),
        "ln2_b": jnp.zeros((D,), jnp.float32),
    }


def pack_params(layer_params):
    """PyTorch layout -> kernel layout (host-side, once):
      * Q/K/V fused head-major: wqkv (L,H,D,3hd), bqkv (L,H,1,3hd), 1/sqrt(hd) folded into Q.
      * wo head-major (L,H,hd,D); FFN weights pre-transposed (x @ W).
      * All small vectors packed into one (L, 7, 128) slab (one DMA instead of ~10)."""
    D, H, hd = D_MODEL, N_HEAD, HEAD_DIM
    scale = 1.0 / math.sqrt(hd)

    def to_heads(w):                      # (D_out, D_in) -> (H, D_in, hd), so x @ W.T per head
        return w.T.reshape(D, H, hd).transpose(1, 0, 2)

    def pad_row(v):
        return jnp.pad(v, (0, SLAB_W - v.shape[0]))

    wqkv_l, bqkv_l, wo_l, w1_l, w2_l, slab_l = [], [], [], [], [], []
    for p in layer_params:
        wq, wk, wv = p["in_proj_w"][:D], p["in_proj_w"][D:2 * D], p["in_proj_w"][2 * D:]
        bq, bk, bv = p["in_proj_b"][:D], p["in_proj_b"][D:2 * D], p["in_proj_b"][2 * D:]

        wqkv_l.append(jnp.concatenate(
            [to_heads(wq) * scale, to_heads(wk), to_heads(wv)], axis=-1))       # (H, D, 3hd)
        bqkv_l.append(jnp.concatenate(
            [bq.reshape(H, 1, hd) * scale,
             bk.reshape(H, 1, hd),
             bv.reshape(H, 1, hd)], axis=-1))                                    # (H, 1, 3hd)
        wo_l.append(p["out_proj_w"].T.reshape(H, hd, D))                         # (H, hd, D)
        w1_l.append(p["lin1_w"].T)                                               # (D, D_FF)
        w2_l.append(p["lin2_w"].T)                                               # (D_FF, D)

        rows = [None] * SLAB_ROWS
        rows[SLAB_B1] = pad_row(p["lin1_b"])
        rows[SLAB_BO] = pad_row(p["out_proj_b"])
        rows[SLAB_G1] = pad_row(p["ln1_g"])
        rows[SLAB_BE1] = pad_row(p["ln1_b"])
        rows[SLAB_B2] = pad_row(p["lin2_b"])
        rows[SLAB_G2] = pad_row(p["ln2_g"])
        rows[SLAB_BE2] = pad_row(p["ln2_b"])
        slab_l.append(jnp.stack(rows, axis=0))                                   # (7, 128)

    return {
        "wqkv": jnp.stack(wqkv_l),
        "bqkv": jnp.stack(bqkv_l),
        "wo": jnp.stack(wo_l),
        "w1": jnp.stack(w1_l),
        "w2": jnp.stack(w2_l),
        "slab": jnp.stack(slab_l),
    }


# ------------------------------- pure-JAX reference -------------------------------

def reference_layer(x, p):
    B, T, D = x.shape
    qkv = x @ p["in_proj_w"].T + p["in_proj_b"]
    q, k, v = jnp.split(qkv, 3, axis=-1)
    q = q.reshape(B, T, N_HEAD, HEAD_DIM)
    k = k.reshape(B, T, N_HEAD, HEAD_DIM)
    v = v.reshape(B, T, N_HEAD, HEAD_DIM)
    s = jnp.einsum('bthd,bshd->bhts', q, k) / math.sqrt(HEAD_DIM)
    a = jax.nn.softmax(s, axis=-1)
    o = jnp.einsum('bhts,bshd->bthd', a, v).reshape(B, T, D)
    o = o @ p["out_proj_w"].T + p["out_proj_b"]
    y = x + o
    y = (y - y.mean(-1, keepdims=True)) * jax.lax.rsqrt(y.var(-1, keepdims=True) + LN_EPS)
    y = y * p["ln1_g"] + p["ln1_b"]
    h = jax.nn.relu(y @ p["lin1_w"].T + p["lin1_b"])
    f = h @ p["lin2_w"].T + p["lin2_b"]
    z = y + f
    z = (z - z.mean(-1, keepdims=True)) * jax.lax.rsqrt(z.var(-1, keepdims=True) + LN_EPS)
    return z * p["ln2_g"] + p["ln2_b"]


def reference_forward(x, layer_params):
    for p in layer_params:
        x = reference_layer(x, p)
    return x


if __name__ == "__main__":
    key = jax.random.PRNGKey(0)
    kx, *kls = jax.random.split(key, 1 + N_LAYERS)
    B, T = 2, 8
    x = jax.random.normal(kx, (B, T, D_MODEL), jnp.float32)

    torch_layout_params = [init_layer_params(k) for k in kls]
    packed = pack_params(torch_layout_params)

    out = jax.block_until_ready(transformer_encoder(x, packed))
    ref = reference_forward(x, torch_layout_params)

    assert out.shape == (B, T, D_MODEL)
    max_err = float(jnp.max(jnp.abs(out - ref)))
    assert jnp.allclose(out, ref, rtol=2e-3, atol=2e-3), f"mismatch vs reference (max abs err {max_err})"
    print("KERNEL_OK")
</pallas_src>

<mosaic_0001>
module attributes {stable_mosaic.version = 11 : i64} {
  func.func @encoder_kernel(%arg0: i32, %arg1: memref<1x8x32xf32, #tpu.memory_space<vmem>>, %arg2: memref<2x4x32x24xf32, #tpu.memory_space<vmem>>, %arg3: memref<2x4x1x24xf32, #tpu.memory_space<vmem>>, %arg4: memref<2x4x8x32xf32, #tpu.memory_space<vmem>>, %arg5: memref<2x32x128xf32, #tpu.memory_space<vmem>>, %arg6: memref<2x128x32xf32, #tpu.memory_space<vmem>>, %arg7: memref<2x7x128xf32, #tpu.memory_space<vmem>>, %arg8: memref<1x8x32xf32, #tpu.memory_space<vmem>>) attributes {dimension_semantics = [#tpu.dimension_semantics<parallel>], iteration_bounds = array<i64: 2>, scalar_prefetch = 0 : i64, scratch_operands = 0 : i64, tpu.core_type = #tpu.core_type<tc>, window_params = [{transform_indices = @transform_0, window_bounds = array<i64: 1, 8, 32>}, {pipeline_mode = #tpu.pipeline_mode<synchronous>, transform_indices = @transform_1, window_bounds = array<i64: 2, 4, 32, 24>}, {pipeline_mode = #tpu.pipeline_mode<synchronous>, transform_indices = @transform_2, window_bounds = array<i64: 2, 4, 1, 24>}, {pipeline_mode = #tpu.pipeline_mode<synchronous>, transform_indices = @transform_3, window_bounds = array<i64: 2, 4, 8, 32>}, {pipeline_mode = #tpu.pipeline_mode<synchronous>, transform_indices = @transform_4, window_bounds = array<i64: 2, 32, 128>}, {pipeline_mode = #tpu.pipeline_mode<synchronous>, transform_indices = @transform_5, window_bounds = array<i64: 2, 128, 32>}, {pipeline_mode = #tpu.pipeline_mode<synchronous>, transform_indices = @transform_6, window_bounds = array<i64: 2, 7, 128>}, {transform_indices = @transform_7, window_bounds = array<i64: 1, 8, 32>}]} {
    %c0 = arith.constant 0 : index
    %c0_0 = arith.constant 0 : index
    %c0_1 = arith.constant 0 : index
    %0 = vector.load %arg1[%c0, %c0_0, %c0_1] : memref<1x8x32xf32, #tpu.memory_space<vmem>>, vector<1x8x32xf32>
    %1 = vector.shape_cast %0 : vector<1x8x32xf32> to vector<8x32xf32>
    %c0_2 = arith.constant 0 : index
    %c0_3 = arith.constant 0 : index
    %c0_4 = arith.constant 0 : index
    %c0_5 = arith.constant 0 : index
    %2 = vector.load %arg2[%c0_2, %c0_3, %c0_4, %c0_5] : memref<2x4x32x24xf32, #tpu.memory_space<vmem>>, vector<1x4x32x24xf32>
    %3 = vector.shape_cast %2 : vector<1x4x32x24xf32> to vector<4x32x24xf32>
    %c0_6 = arith.constant 0 : index
    %c0_7 = arith.constant 0 : index
    %c0_8 = arith.constant 0 : index
    %c0_9 = arith.constant 0 : index
    %4 = vector.load %arg3[%c0_6, %c0_7, %c0_8, %c0_9] : memref<2x4x1x24xf32, #tpu.memory_space<vmem>>, vector<1x4x1x24xf32>
    %5 = vector.shape_cast %4 : vector<1x4x1x24xf32> to vector<4x1x24xf32>
    %c0_10 = arith.constant 0 : index
    %c0_11 = arith.constant 0 : index
    %c0_12 = arith.constant 0 : index
    %c0_13 = arith.constant 0 : index
    %6 = vector.load %arg4[%c0_10, %c0_11, %c0_12, %c0_13] : memref<2x4x8x32xf32, #tpu.memory_space<vmem>>, vector<1x4x8x32xf32>
    %7 = vector.shape_cast %6 : vector<1x4x8x32xf32> to vector<4x8x32xf32>
    %c0_14 = arith.constant 0 : index
    %c0_15 = arith.constant 0 : index
    %c0_16 = arith.constant 0 : index
    %8 = vector.load %arg5[%c0_14, %c0_15, %c0_16] : memref<2x32x128xf32, #tpu.memory_space<vmem>>, vector<1x32x128xf32>
    %9 = vector.shape_cast %8 : vector<1x32x128xf32> to vector<32x128xf32>
    %c0_17 = arith.constant 0 : index
    %c0_18 = arith.constant 0 : index
    %c0_19 = arith.constant 0 : index
    %10 = vector.load %arg6[%c0_17, %c0_18, %c0_19] : memref<2x128x32xf32, #tpu.memory_space<vmem>>, vector<1x128x32xf32>
    %11 = vector.shape_cast %10 : vector<1x128x32xf32> to vector<128x32xf32>
    %c0_20 = arith.constant 0 : index
    %c0_21 = arith.constant 0 : index
    %c0_22 = arith.constant 0 : index
    %12 = vector.load %arg7[%c0_20, %c0_21, %c0_22] : memref<2x7x128xf32, #tpu.memory_space<vmem>>, vector<1x7x128xf32>
    %13 = vector.shape_cast %12 : vector<1x7x128xf32> to vector<7x128xf32>
    %14 = vector.extract_strided_slice %13 {offsets = [0, 0], sizes = [1, 128], strides = [1, 1]} : vector<7x128xf32> to vector<1x128xf32>
    %15 = vector.extract_strided_slice %13 {offsets = [1, 0], sizes = [1, 32], strides = [1, 1]} : vector<7x128xf32> to vector<1x32xf32>
    %16 = vector.extract_strided_slice %13 {offsets = [2, 0], sizes = [1, 32], strides = [1, 1]} : vector<7x128xf32> to vector<1x32xf32>
    %17 = vector.extract_strided_slice %13 {offsets = [3, 0], sizes = [1, 32], strides = [1, 1]} : vector<7x128xf32> to vector<1x32xf32>
    %18 = vector.extract_strided_slice %13 {offsets = [4, 0], sizes = [1, 32], strides = [1, 1]} : vector<7x128xf32> to vector<1x32xf32>
    %19 = vector.extract_strided_slice %13 {offsets = [5, 0], sizes = [1, 32], strides = [1, 1]} : vector<7x128xf32> to vector<1x32xf32>
    %20 = vector.extract_strided_slice %13 {offsets = [6, 0], sizes = [1, 32], strides = [1, 1]} : vector<7x128xf32> to vector<1x32xf32>
    %21 = vector.shape_cast %1 : vector<8x32xf32> to vector<1x8x32xf32>
    %22 = vector.broadcast %21 : vector<1x8x32xf32> to vector<4x8x32xf32>
    "tpu.trace_start"() <{level = 10 : i32, message = "htd,hdk->htk"}> : () -> ()
    %cst = arith.constant dense<0.000000e+00> : vector<4x8x24xf32>
    %23 = tpu.matmul %22, %3, %cst {dimension_numbers = #tpu.dot_dimension_numbers<[2], [1], [1], [2], [0, 0, 0, 1, 1, 2], [0], [0]>} : vector<4x8x32xf32>, vector<4x32x24xf32>, vector<4x8x24xf32> -> vector<4x8x24xf32>
    "tpu.trace_stop"() : () -> ()
    %24 = vector.broadcast %5 : vector<4x1x24xf32> to vector<4x8x24xf32>
    %25 = arith.addf %23, %24 : vector<4x8x24xf32>
    %26 = vector.extract_strided_slice %25 {offsets = [0, 0, 0], sizes = [4, 8, 8], strides = [1, 1, 1]} : vector<4x8x24xf32> to vector<4x8x8xf32>
    %27 = vector.extract_strided_slice %25 {offsets = [0, 0, 8], sizes = [4, 8, 8], strides = [1, 1, 1]} : vector<4x8x24xf32> to vector<4x8x8xf32>
    %28 = vector.extract_strided_slice %25 {offsets = [0, 0, 16], sizes = [4, 8, 8], strides = [1, 1, 1]} : vector<4x8x24xf32> to vector<4x8x8xf32>
    "tpu.trace_start"() <{level = 10 : i32, message = "htd,hsd->hts"}> : () -> ()
    %cst_23 = arith.constant dense<0.000000e+00> : vector<4x8x8xf32>
    %29 = tpu.matmul %26, %27, %cst_23 {dimension_numbers = #tpu.dot_dimension_numbers<[2], [2], [1], [1], [0, 0, 0, 1, 1, 1], [0], [0]>} : vector<4x8x8xf32>, vector<4x8x8xf32>, vector<4x8x8xf32> -> vector<4x8x8xf32>
    "tpu.trace_stop"() : () -> ()
    %cst_24 = arith.constant dense<0xFF800000> : vector<4x8xf32>
    %30 = vector.multi_reduction <maximumf>, %29, %cst_24 [2] : vector<4x8x8xf32> to vector<4x8xf32>
    %31 = vector.shape_cast %30 : vector<4x8xf32> to vector<4x8x1xf32>
    %32 = vector.broadcast %31 : vector<4x8x1xf32> to vector<4x8x8xf32>
    %33 = arith.subf %29, %32 : vector<4x8x8xf32>
    %34 = math.exp %33 : vector<4x8x8xf32>
    %cst_25 = arith.constant dense<0.000000e+00> : vector<4x8xf32>
    %35 = vector.multi_reduction <add>, %34, %cst_25 [2] : vector<4x8x8xf32> to vector<4x8xf32>
    %36 = vector.shape_cast %35 : vector<4x8xf32> to vector<4x8x1xf32>
    %37 = tpu.reciprocal %36 {approx = true} : vector<4x8x1xf32> -> vector<4x8x1xf32>
    %38 = vector.broadcast %37 : vector<4x8x1xf32> to vector<4x8x8xf32>
    %39 = arith.mulf %34, %38 : vector<4x8x8xf32>
    "tpu.trace_start"() <{level = 10 : i32, message = "hts,hsd->htd"}> : () -> ()
    %cst_26 = arith.constant dense<0.000000e+00> : vector<4x8x8xf32>
    %40 = tpu.matmul %39, %28, %cst_26 {dimension_numbers = #tpu.dot_dimension_numbers<[2], [1], [1], [2], [0, 0, 0, 1, 1, 2], [0], [0]>} : vector<4x8x8xf32>, vector<4x8x8xf32>, vector<4x8x8xf32> -> vector<4x8x8xf32>
    "tpu.trace_stop"() : () -> ()
    "tpu.trace_start"() <{level = 10 : i32, message = "htd,hdk->htk"}> : () -> ()
    %cst_27 = arith.constant dense<0.000000e+00> : vector<4x8x32xf32>
    %41 = tpu.matmul %40, %7, %cst_27 {dimension_numbers = #tpu.dot_dimension_numbers<[2], [1], [1], [2], [0, 0, 0, 1, 1, 2], [0], [0]>} : vector<4x8x8xf32>, vector<4x8x32xf32>, vector<4x8x32xf32> -> vector<4x8x32xf32>
    "tpu.trace_stop"() : () -> ()
    %cst_28 = arith.constant dense<0.000000e+00> : vector<8x32xf32>
    %42 = vector.multi_reduction <add>, %41, %cst_28 [0] : vector<4x8x32xf32> to vector<8x32xf32>
    %43 = vector.broadcast %15 : vector<1x32xf32> to vector<8x32xf32>
    %44 = arith.addf %42, %43 : vector<8x32xf32>
    %45 = arith.addf %1, %44 : vector<8x32xf32>
    %cst_29 = arith.constant dense<0.000000e+00> : vector<8xf32>
    %46 = vector.multi_reduction <add>, %45, %cst_29 [1] : vector<8x32xf32> to vector<8xf32>
    %47 = vector.shape_cast %46 : vector<8xf32> to vector<8x1xf32>
    %cst_30 = arith.constant 3.200000e+01 : f32
    %48 = vector.broadcast %cst_30 : f32 to vector<8x1xf32>
    %49 = arith.divf %47, %48 : vector<8x1xf32>
    %50 = vector.broadcast %49 : vector<8x1xf32> to vector<8x32xf32>
    %51 = arith.subf %45, %50 : vector<8x32xf32>
    %52 = arith.mulf %51, %51 : vector<8x32xf32>
    %cst_31 = arith.constant dense<0.000000e+00> : vector<8xf32>
    %53 = vector.multi_reduction <add>, %52, %cst_31 [1] : vector<8x32xf32> to vector<8xf32>
    %54 = vector.shape_cast %53 : vector<8xf32> to vector<8x1xf32>
    %cst_32 = arith.constant 3.200000e+01 : f32
    %55 = vector.broadcast %cst_32 : f32 to vector<8x1xf32>
    %56 = arith.divf %54, %55 : vector<8x1xf32>
    %57 = vector.broadcast %49 : vector<8x1xf32> to vector<8x32xf32>
    %58 = arith.subf %45, %57 : vector<8x32xf32>
    %cst_33 = arith.constant 9.99999974E-6 : f32
    %59 = vector.broadcast %cst_33 : f32 to vector<8x1xf32>
    %60 = arith.addf %56, %59 : vector<8x1xf32>
    %61 = math.rsqrt %60 : vector<8x1xf32>
    %62 = vector.broadcast %61 : vector<8x1xf32> to vector<8x32xf32>
    %63 = arith.mulf %58, %62 : vector<8x32xf32>
    %64 = vector.broadcast %16 : vector<1x32xf32> to vector<8x32xf32>
    %65 = arith.mulf %63, %64 : vector<8x32xf32>
    %66 = vector.broadcast %17 : vector<1x32xf32> to vector<8x32xf32>
    %67 = arith.addf %65, %66 : vector<8x32xf32>
    %cst_34 = arith.constant dense<0.000000e+00> : vector<8x128xf32>
    %68 = tpu.matmul %67, %9, %cst_34 {dimension_numbers = #tpu.dot_dimension_numbers<[1], [0], [0], [1], [0, 0, 1, 1], [], []>} : vector<8x32xf32>, vector<32x128xf32>, vector<8x128xf32> -> vector<8x128xf32>
    %69 = vector.broadcast %14 : vector<1x128xf32> to vector<8x128xf32>
    %70 = arith.addf %68, %69 : vector<8x128xf32>
    %cst_35 = arith.constant 0.000000e+00 : f32
    %71 = vector.broadcast %cst_35 : f32 to vector<8x128xf32>
    %72 = arith.maximumf %70, %71 : vector<8x128xf32>
    %cst_36 = arith.constant dense<0.000000e+00> : vector<8x32xf32>
    %73 = tpu.matmul %72, %11, %cst_36 {dimension_numbers = #tpu.dot_dimension_numbers<[1], [0], [0], [1], [0, 0, 1, 1], [], []>} : vector<8x128xf32>, vector<128x32xf32>, vector<8x32xf32> -> vector<8x32xf32>
    %74 = vector.broadcast %18 : vector<1x32xf32> to vector<8x32xf32>
    %75 = arith.addf %73, %74 : vector<8x32xf32>
    %76 = arith.addf %67, %75 : vector<8x32xf32>
    %cst_37 = arith.constant dense<0.000000e+00> : vector<8xf32>
    %77 = vector.multi_reduction <add>, %76, %cst_37 [1] : vector<8x32xf32> to vector<8xf32>
    %78 = vector.shape_cast %77 : vector<8xf32> to vector<8x1xf32>
    %cst_38 = arith.constant 3.200000e+01 : f32
    %79 = vector.broadcast %cst_38 : f32 to vector<8x1xf32>
    %80 = arith.divf %78, %79 : vector<8x1xf32>
    %81 = vector.broadcast %80 : vector<8x1xf32> to vector<8x32xf32>
    %82 = arith.subf %76, %81 : vector<8x32xf32>
    %83 = arith.mulf %82, %82 : vector<8x32xf32>
    %cst_39 = arith.constant dense<0.000000e+00> : vector<8xf32>
    %84 = vector.multi_reduction <add>, %83, %cst_39 [1] : vector<8x32xf32> to vector<8xf32>
    %85 = vector.shape_cast %84 : vector<8xf32> to vector<8x1xf32>
    %cst_40 = arith.constant 3.200000e+01 : f32
    %86 = vector.broadcast %cst_40 : f32 to vector<8x1xf32>
    %87 = arith.divf %85, %86 : vector<8x1xf32>
    %88 = vector.broadcast %80 : vector<8x1xf32> to vector<8x32xf32>
    %89 = arith.subf %76, %88 : vector<8x32xf32>
    %cst_41 = arith.constant 9.99999974E-6 : f32
    %90 = vector.broadcast %cst_41 : f32 to vector<8x1xf32>
    %91 = arith.addf %87, %90 : vector<8x1xf32>
    %92 = math.rsqrt %91 : vector<8x1xf32>
    %93 = vector.broadcast %92 : vector<8x1xf32> to vector<8x32xf32>
    %94 = arith.mulf %89, %93 : vector<8x32xf32>
    %95 = vector.broadcast %19 : vector<1x32xf32> to vector<8x32xf32>
    %96 = arith.mulf %94, %95 : vector<8x32xf32>
    %97 = vector.broadcast %20 : vector<1x32xf32> to vector<8x32xf32>
    %98 = arith.addf %96, %97 : vector<8x32xf32>
    %c1 = arith.constant 1 : index
    %c0_42 = arith.constant 0 : index
    %c0_43 = arith.constant 0 : index
    %c0_44 = arith.constant 0 : index
    %99 = vector.load %arg2[%c1, %c0_42, %c0_43, %c0_44] : memref<2x4x32x24xf32, #tpu.memory_space<vmem>>, vector<1x4x32x24xf32>
    %100 = vector.shape_cast %99 : vector<1x4x32x24xf32> to vector<4x32x24xf32>
    %c1_45 = arith.constant 1 : index
    %c0_46 = arith.constant 0 : index
    %c0_47 = arith.constant 0 : index
    %c0_48 = arith.constant 0 : index
    %101 = vector.load %arg3[%c1_45, %c0_46, %c0_47, %c0_48] : memref<2x4x1x24xf32, #tpu.memory_space<vmem>>, vector<1x4x1x24xf32>
    %102 = vector.shape_cast %101 : vector<1x4x1x24xf32> to vector<4x1x24xf32>
    %c1_49 = arith.constant 1 : index
    %c0_50 = arith.constant 0 : index
    %c0_51 = arith.constant 0 : index
    %c0_52 = arith.constant 0 : index
    %103 = vector.load %arg4[%c1_49, %c0_50, %c0_51, %c0_52] : memref<2x4x8x32xf32, #tpu.memory_space<vmem>>, vector<1x4x8x32xf32>
    %104 = vector.shape_cast %103 : vector<1x4x8x32xf32> to vector<4x8x32xf32>
    %c1_53 = arith.constant 1 : index
    %c0_54 = arith.constant 0 : index
    %c0_55 = arith.constant 0 : index
    %105 = vector.load %arg5[%c1_53, %c0_54, %c0_55] : memref<2x32x128xf32, #tpu.memory_space<vmem>>, vector<1x32x128xf32>
    %106 = vector.shape_cast %105 : vector<1x32x128xf32> to vector<32x128xf32>
    %c1_56 = arith.constant 1 : index
    %c0_57 = arith.constant 0 : index
    %c0_58 = arith.constant 0 : index
    %107 = vector.load %arg6[%c1_56, %c0_57, %c0_58] : memref<2x128x32xf32, #tpu.memory_space<vmem>>, vector<1x128x32xf32>
    %108 = vector.shape_cast %107 : vector<1x128x32xf32> to vector<128x32xf32>
    %c1_59 = arith.constant 1 : index
    %c0_60 = arith.constant 0 : index
    %c0_61 = arith.constant 0 : index
    %109 = vector.load %arg7[%c1_59, %c0_60, %c0_61] : memref<2x7x128xf32, #tpu.memory_space<vmem>>, vector<1x7x128xf32>
    %110 = vector.shape_cast %109 : vector<1x7x128xf32> to vector<7x128xf32>
    %111 = vector.extract_strided_slice %110 {offsets = [0, 0], sizes = [1, 128], strides = [1, 1]} : vector<7x128xf32> to vector<1x128xf32>
    %112 = vector.extract_strided_slice %110 {offsets = [1, 0], sizes = [1, 32], strides = [1, 1]} : vector<7x128xf32> to vector<1x32xf32>
    %113 = vector.extract_strided_slice %110 {offsets = [2, 0], sizes = [1, 32], strides = [1, 1]} : vector<7x128xf32> to vector<1x32xf32>
    %114 = vector.extract_strided_slice %110 {offsets = [3, 0], sizes = [1, 32], strides = [1, 1]} : vector<7x128xf32> to vector<1x32xf32>
    %115 = vector.extract_strided_slice %110 {offsets = [4, 0], sizes = [1, 32], strides = [1, 1]} : vector<7x128xf32> to vector<1x32xf32>
    %116 = vector.extract_strided_slice %110 {offsets = [5, 0], sizes = [1, 32], strides = [1, 1]} : vector<7x128xf32> to vector<1x32xf32>
    %117 = vector.extract_strided_slice %110 {offsets = [6, 0], sizes = [1, 32], strides = [1, 1]} : vector<7x128xf32> to vector<1x32xf32>
    %118 = vector.shape_cast %98 : vector<8x32xf32> to vector<1x8x32xf32>
    %119 = vector.broadcast %118 : vector<1x8x32xf32> to vector<4x8x32xf32>
    "tpu.trace_start"() <{level = 10 : i32, message = "htd,hdk->htk"}> : () -> ()
    %cst_62 = arith.constant dense<0.000000e+00> : vector<4x8x24xf32>
    %120 = tpu.matmul %119, %100, %cst_62 {dimension_numbers = #tpu.dot_dimension_numbers<[2], [1], [1], [2], [0, 0, 0, 1, 1, 2], [0], [0]>} : vector<4x8x32xf32>, vector<4x32x24xf32>, vector<4x8x24xf32> -> vector<4x8x24xf32>
    "tpu.trace_stop"() : () -> ()
    %121 = vector.broadcast %102 : vector<4x1x24xf32> to vector<4x8x24xf32>
    %122 = arith.addf %120, %121 : vector<4x8x24xf32>
    %123 = vector.extract_strided_slice %122 {offsets = [0, 0, 0], sizes = [4, 8, 8], strides = [1, 1, 1]} : vector<4x8x24xf32> to vector<4x8x8xf32>
    %124 = vector.extract_strided_slice %122 {offsets = [0, 0, 8], sizes = [4, 8, 8], strides = [1, 1, 1]} : vector<4x8x24xf32> to vector<4x8x8xf32>
    %125 = vector.extract_strided_slice %122 {offsets = [0, 0, 16], sizes = [4, 8, 8], strides = [1, 1, 1]} : vector<4x8x24xf32> to vector<4x8x8xf32>
    "tpu.trace_start"() <{level = 10 : i32, message = "htd,hsd->hts"}> : () -> ()
    %cst_63 = arith.constant dense<0.000000e+00> : vector<4x8x8xf32>
    %126 = tpu.matmul %123, %124, %cst_63 {dimension_numbers = #tpu.dot_dimension_numbers<[2], [2], [1], [1], [0, 0, 0, 1, 1, 1], [0], [0]>} : vector<4x8x8xf32>, vector<4x8x8xf32>, vector<4x8x8xf32> -> vector<4x8x8xf32>
    "tpu.trace_stop"() : () -> ()
    %cst_64 = arith.constant dense<0xFF800000> : vector<4x8xf32>
    %127 = vector.multi_reduction <maximumf>, %126, %cst_64 [2] : vector<4x8x8xf32> to vector<4x8xf32>
    %128 = vector.shape_cast %127 : vector<4x8xf32> to vector<4x8x1xf32>
    %129 = vector.broadcast %128 : vector<4x8x1xf32> to vector<4x8x8xf32>
    %130 = arith.subf %126, %129 : vector<4x8x8xf32>
    %131 = math.exp %130 : vector<4x8x8xf32>
    %cst_65 = arith.constant dense<0.000000e+00> : vector<4x8xf32>
    %132 = vector.multi_reduction <add>, %131, %cst_65 [2] : vector<4x8x8xf32> to vector<4x8xf32>
    %133 = vector.shape_cast %132 : vector<4x8xf32> to vector<4x8x1xf32>
    %134 = tpu.reciprocal %133 {approx = true} : vector<4x8x1xf32> -> vector<4x8x1xf32>
    %135 = vector.broadcast %134 : vector<4x8x1xf32> to vector<4x8x8xf32>
    %136 = arith.mulf %131, %135 : vector<4x8x8xf32>
    "tpu.trace_start"() <{level = 10 : i32, message = "hts,hsd->htd"}> : () -> ()
    %cst_66 = arith.constant dense<0.000000e+00> : vector<4x8x8xf32>
    %137 = tpu.matmul %136, %125, %cst_66 {dimension_numbers = #tpu.dot_dimension_numbers<[2], [1], [1], [2], [0, 0, 0, 1, 1, 2], [0], [0]>} : vector<4x8x8xf32>, vector<4x8x8xf32>, vector<4x8x8xf32> -> vector<4x8x8xf32>
    "tpu.trace_stop"() : () -> ()
    "tpu.trace_start"() <{level = 10 : i32, message = "htd,hdk->htk"}> : () -> ()
    %cst_67 = arith.constant dense<0.000000e+00> : vector<4x8x32xf32>
    %138 = tpu.matmul %137, %104, %cst_67 {dimension_numbers = #tpu.dot_dimension_numbers<[2], [1], [1], [2], [0, 0, 0, 1, 1, 2], [0], [0]>} : vector<4x8x8xf32>, vector<4x8x32xf32>, vector<4x8x32xf32> -> vector<4x8x32xf32>
    "tpu.trace_stop"() : () -> ()
    %cst_68 = arith.constant dense<0.000000e+00> : vector<8x32xf32>
    %139 = vector.multi_reduction <add>, %138, %cst_68 [0] : vector<4x8x32xf32> to vector<8x32xf32>
    %140 = vector.broadcast %112 : vector<1x32xf32> to vector<8x32xf32>
    %141 = arith.addf %139, %140 : vector<8x32xf32>
    %142 = arith.addf %98, %141 : vector<8x32xf32>
    %cst_69 = arith.constant dense<0.000000e+00> : vector<8xf32>
    %143 = vector.multi_reduction <add>, %142, %cst_69 [1] : vector<8x32xf32> to vector<8xf32>
    %144 = vector.shape_cast %143 : vector<8xf32> to vector<8x1xf32>
    %cst_70 = arith.constant 3.200000e+01 : f32
    %145 = vector.broadcast %cst_70 : f32 to vector<8x1xf32>
    %146 = arith.divf %144, %145 : vector<8x1xf32>
    %147 = vector.broadcast %146 : vector<8x1xf32> to vector<8x32xf32>
    %148 = arith.subf %142, %147 : vector<8x32xf32>
    %149 = arith.mulf %148, %148 : vector<8x32xf32>
    %cst_71 = arith.constant dense<0.000000e+00> : vector<8xf32>
    %150 = vector.multi_reduction <add>, %149, %cst_71 [1] : vector<8x32xf32> to vector<8xf32>
    %151 = vector.shape_cast %150 : vector<8xf32> to vector<8x1xf32>
    %cst_72 = arith.constant 3.200000e+01 : f32
    %152 = vector.broadcast %cst_72 : f32 to vector<8x1xf32>
    %153 = arith.divf %151, %152 : vector<8x1xf32>
    %154 = vector.broadcast %146 : vector<8x1xf32> to vector<8x32xf32>
    %155 = arith.subf %142, %154 : vector<8x32xf32>
    %cst_73 = arith.constant 9.99999974E-6 : f32
    %156 = vector.broadcast %cst_73 : f32 to vector<8x1xf32>
    %157 = arith.addf %153, %156 : vector<8x1xf32>
    %158 = math.rsqrt %157 : vector<8x1xf32>
    %159 = vector.broadcast %158 : vector<8x1xf32> to vector<8x32xf32>
    %160 = arith.mulf %155, %159 : vector<8x32xf32>
    %161 = vector.broadcast %113 : vector<1x32xf32> to vector<8x32xf32>
    %162 = arith.mulf %160, %161 : vector<8x32xf32>
    %163 = vector.broadcast %114 : vector<1x32xf32> to vector<8x32xf32>
    %164 = arith.addf %162, %163 : vector<8x32xf32>
    %cst_74 = arith.constant dense<0.000000e+00> : vector<8x128xf32>
    %165 = tpu.matmul %164, %106, %cst_74 {dimension_numbers = #tpu.dot_dimension_numbers<[1], [0], [0], [1], [0, 0, 1, 1], [], []>} : vector<8x32xf32>, vector<32x128xf32>, vector<8x128xf32> -> vector<8x128xf32>
    %166 = vector.broadcast %111 : vector<1x128xf32> to vector<8x128xf32>
    %167 = arith.addf %165, %166 : vector<8x128xf32>
    %cst_75 = arith.constant 0.000000e+00 : f32
    %168 = vector.broadcast %cst_75 : f32 to vector<8x128xf32>
    %169 = arith.maximumf %167, %168 : vector<8x128xf32>
    %cst_76 = arith.constant dense<0.000000e+00> : vector<8x32xf32>
    %170 = tpu.matmul %169, %108, %cst_76 {dimension_numbers = #tpu.dot_dimension_numbers<[1], [0], [0], [1], [0, 0, 1, 1], [], []>} : vector<8x128xf32>, vector<128x32xf32>, vector<8x32xf32> -> vector<8x32xf32>
    %171 = vector.broadcast %115 : vector<1x32xf32> to vector<8x32xf32>
    %172 = arith.addf %170, %171 : vector<8x32xf32>
    %173 = arith.addf %164, %172 : vector<8x32xf32>
    %cst_77 = arith.constant dense<0.000000e+00> : vector<8xf32>
    %174 = vector.multi_reduction <add>, %173, %cst_77 [1] : vector<8x32xf32> to vector<8xf32>
    %175 = vector.shape_cast %174 : vector<8xf32> to vector<8x1xf32>
    %cst_78 = arith.constant 3.200000e+01 : f32
    %176 = vector.broadcast %cst_78 : f32 to vector<8x1xf32>
    %177 = arith.divf %175, %176 : vector<8x1xf32>
    %178 = vector.broadcast %177 : vector<8x1xf32> to vector<8x32xf32>
    %179 = arith.subf %173, %178 : vector<8x32xf32>
    %180 = arith.mulf %179, %179 : vector<8x32xf32>
    %cst_79 = arith.constant dense<0.000000e+00> : vector<8xf32>
    %181 = vector.multi_reduction <add>, %180, %cst_79 [1] : vector<8x32xf32> to vector<8xf32>
    %182 = vector.shape_cast %181 : vector<8xf32> to vector<8x1xf32>
    %cst_80 = arith.constant 3.200000e+01 : f32
    %183 = vector.broadcast %cst_80 : f32 to vector<8x1xf32>
    %184 = arith.divf %182, %183 : vector<8x1xf32>
    %185 = vector.broadcast %177 : vector<8x1xf32> to vector<8x32xf32>
    %186 = arith.subf %173, %185 : vector<8x32xf32>
    %cst_81 = arith.constant 9.99999974E-6 : f32
    %187 = vector.broadcast %cst_81 : f32 to vector<8x1xf32>
    %188 = arith.addf %184, %187 : vector<8x1xf32>
    %189 = math.rsqrt %188 : vector<8x1xf32>
    %190 = vector.broadcast %189 : vector<8x1xf32> to vector<8x32xf32>
    %191 = arith.mulf %186, %190 : vector<8x32xf32>
    %192 = vector.broadcast %116 : vector<1x32xf32> to vector<8x32xf32>
    %193 = arith.mulf %191, %192 : vector<8x32xf32>
    %194 = vector.broadcast %117 : vector<1x32xf32> to vector<8x32xf32>
    %195 = arith.addf %193, %194 : vector<8x32xf32>
    %c0_82 = arith.constant 0 : index
    %c0_83 = arith.constant 0 : index
    %c0_84 = arith.constant 0 : index
    %196 = vector.load %arg8[%c0_82, %c0_83, %c0_84] : memref<1x8x32xf32, #tpu.memory_space<vmem>>, vector<1x8x32xf32>
    %197 = vector.shape_cast %196 : vector<1x8x32xf32> to vector<8x32xf32>
    %198 = vector.shape_cast %195 : vector<8x32xf32> to vector<1x8x32xf32>
    tpu.vector_store %arg8[%c0_82, %c0_83, %c0_84], %198 {strides = array<i32>} : memref<1x8x32xf32, #tpu.memory_space<vmem>>, vector<1x8x32xf32>,
    return
  }
  func.func @transform_0(%arg0: i32) -> (i32, i32, i32) {
    %c0_i32 = arith.constant 0 : i32
    %c0_i32_0 = arith.constant 0 : i32
    %c0_i32_1 = arith.constant 0 : i32
    return %arg0, %c0_i32, %c0_i32_0 : i32, i32, i32
  }
  func.func @transform_1(%arg0: i32) -> (i32, i32, i32, i32) {
    %c0_i32 = arith.constant 0 : i32
    %c0_i32_0 = arith.constant 0 : i32
    %c0_i32_1 = arith.constant 0 : i32
    %c0_i32_2 = arith.constant 0 : i32
    %c0_i32_3 = arith.constant 0 : i32
    return %c0_i32, %c0_i32_0, %c0_i32_1, %c0_i32_2 : i32, i32, i32, i32
  }
  func.func @transform_2(%arg0: i32) -> (i32, i32, i32, i32) {
    %c0_i32 = arith.constant 0 : i32
    %c0_i32_0 = arith.constant 0 : i32
    %c0_i32_1 = arith.constant 0 : i32
    %c0_i32_2 = arith.constant 0 : i32
    %c0_i32_3 = arith.constant 0 : i32
    return %c0_i32, %c0_i32_0, %c0_i32_1, %c0_i32_2 : i32, i32, i32, i32
  }
  func.func @transform_3(%arg0: i32) -> (i32, i32, i32, i32) {
    %c0_i32 = arith.constant 0 : i32
    %c0_i32_0 = arith.constant 0 : i32
    %c0_i32_1 = arith.constant 0 : i32
    %c0_i32_2 = arith.constant 0 : i32
    %c0_i32_3 = arith.constant 0 : i32
    return %c0_i32, %c0_i32_0, %c0_i32_1, %c0_i32_2 : i32, i32, i32, i32
  }
  func.func @transform_4(%arg0: i32) -> (i32, i32, i32) {
    %c0_i32 = arith.constant 0 : i32
    %c0_i32_0 = arith.constant 0 : i32
    %c0_i32_1 = arith.constant 0 : i32
    %c0_i32_2 = arith.constant 0 : i32
    return %c0_i32, %c0_i32_0, %c0_i32_1 : i32, i32, i32
  }
  func.func @transform_5(%arg0: i32) -> (i32, i32, i32) {
    %c0_i32 = arith.constant 0 : i32
    %c0_i32_0 = arith.constant 0 : i32
    %c0_i32_1 = arith.constant 0 : i32
    %c0_i32_2 = arith.constant 0 : i32
    return %c0_i32, %c0_i32_0, %c0_i32_1 : i32, i32, i32
  }
  func.func @transform_6(%arg0: i32) -> (i32, i32, i32) {
    %c0_i32 = arith.constant 0 : i32
    %c0_i32_0 = arith.constant 0 : i32
    %c0_i32_1 = arith.constant 0 : i32
    %c0_i32_2 = arith.constant 0 : i32
    return %c0_i32, %c0_i32_0, %c0_i32_1 : i32, i32, i32
  }
  func.func @transform_7(%arg0: i32) -> (i32, i32, i32) {
    %c0_i32 = arith.constant 0 : i32
    %c0_i32_0 = arith.constant 0 : i32
    %c0_i32_1 = arith.constant 0 : i32
    return %arg0, %c0_i32, %c0_i32_0 : i32, i32, i32
  }
}

</mosaic_0001>

<llo_original>
// kernel: tpu_custom_call.1
$region0: #{tpu_custom_call.1}
  #allocation0 [shape = 'u32[]', space=smem, size = 0x4, offset = 0x4, fixed_abs, tag = 'smem constant byte address 0x4 - core index']
  #allocation1 [shape = 'u32[144,128]{1,0:T(1,128)}', space=vmem, size = 0x12000, scoped, tag = 'internal scratch']
  %s0 = inlined_call_operand.vmem [shape: f32[2,8,32], index: 0, kind: input, shape index: {}]
  %s1 = inlined_call_operand.vmem [shape: f32[2,4,32,24], index: 1, kind: input, shape index: {}]
  %s2 = inlined_call_operand.vmem [shape: f32[2,4,1,24], index: 2, kind: input, shape index: {}]
  %s3 = inlined_call_operand.vmem [shape: f32[2,4,8,32], index: 3, kind: input, shape index: {}]
  %s4 = inlined_call_operand.vmem [shape: f32[2,32,128], index: 4, kind: input, shape index: {}]
  %s5 = inlined_call_operand.vmem [shape: f32[2,128,32], index: 5, kind: input, shape index: {}]
  %s6 = inlined_call_operand.vmem [shape: f32[2,7,128], index: 6, kind: input, shape index: {}]
  %s7 = inlined_call_operand.hbm [shape: f32[2,8,32], index: 7, kind: output, shape index: {}]
  %s8 = sld [smem:[#allocation0]]
  $region61: #{tpu_custom_call.1} parent=0
    _
  %s10 = ssub.s32 1, %s8
  %s11 = scalar_select 0, %s10, %s8
  $region1: #{tpu_custom_call.1} parent=0
    #allocation2 [shape = 'u8[8192]{0}', space=vmem, size = 0x2000, scoped, tag = 'output window, operand 0']
    #allocation3 [shape = 's32[2]{0}', space=sflag, size = 0x8, scoped, tag = 'scoped memory for tpu_custom_call.1']
    %12 = vsyncpa [#allocation3], 0
    %s13 = scalar_lea.sflag [#allocation3], 1
    %14 = vsyncpa %s13, 0
    loop: start=0, step=1, limit=4
    $region2: #{tpu_custom_call.1} parent=1 // loop_pre_header
      _
    $region3: #{tpu_custom_call.1} parent=1 // loop_header
      %s16 = sphi 0, %s20
      %p17 = scmp.ge.s32.totalorder %s16, 4
      %s26 = sphi 0, %s28
      %s29 = sphi 0, %s26
      %s30 = sphi 0, %s29
      %s46 = sphi 0, %s30
      %s50 = sphi 0, %s50
      %s52 = sphi 0, %s50
      %s53 = sphi 0, %s52
      %s67 = sphi 0, %s53
      %s71 = sphi 0, %s71
      %s73 = sphi 0, %s71
      %s74 = sphi 0, %s73
      %s88 = sphi 0, %s74
      %s92 = sphi 0, %s92
      %s94 = sphi 0, %s92
      %s95 = sphi 0, %s94
      %s109 = sphi 0, %s95
      %s113 = sphi 0, %s113
      %s115 = sphi 0, %s113
      %s116 = sphi 0, %s115
      %s130 = sphi 0, %s116
      %s134 = sphi 0, %s134
      %s136 = sphi 0, %s134
      %s137 = sphi 0, %s136
      %s151 = sphi 0, %s137
      %s155 = sphi 0, %s155
      %s157 = sphi 0, %s155
      %s158 = sphi 0, %s157
      %s172 = sphi 0, %s158
      %s178 = sphi 0, %s180
      %s181 = sphi 0, %s178
      %s182 = sphi 0, %s181
      %s198 = sphi 0, %s182
    $region4: #{tpu_custom_call.1} parent=1 // loop_header_branch
      %19 = sbr.rel (%p17) target = $region8
    $region5: #{tpu_custom_call.1} parent=1 // loop_body
      %s21 = ssub.s32 %s16, 1
      %s22 = ssub.s32 %s16, 2
      %s23 = sadd.s32 %s16, 1
      %s24 = ssub.s32 %s16, %s23
      %p25 = scmp.eq.s32.totalorder %s24, 0
      %s27 = sadd.s32 %s26, 1
      %s28 = scalar_select %p25, %s26, %s27
      %p31 = pneg %p25
      %p32 = scmp.eq.s32.totalorder %s16, 1
      %p33 = por %p31, %p32
      %p34 = scmp.ne.s32.totalorder %s26, %s29
      %p35 = scmp.eq.s32.totalorder %s16, 0
      %p36 = por %p34, %p35
      %p37 = scmp.ne.s32.totalorder %s26, %s29
      %p38 = scmp.eq.s32.totalorder %s21, 1
      %p39 = por %p37, %p38
      %p40 = scmp.ne.s32.totalorder %s29, %s30
      %p41 = scmp.eq.s32.totalorder %s21, 0
      %p42 = por %p40, %p41
      %p43 = scmp.ne.s32.totalorder %s29, %s30
      %p44 = scmp.eq.s32.totalorder %s22, 1
      %p45 = por %p43, %p44
      %p47 = scmp.ne.s32.totalorder %s30, %s46
      %p48 = scmp.eq.s32.totalorder %s22, 0
      %p49 = por %p47, %p48
      %s51 = sadd.s32 %s50, 1
      %p54 = scmp.eq.s32.totalorder %s16, 1
      %p55 = scmp.ne.s32.totalorder %s50, %s52
      %p56 = scmp.eq.s32.totalorder %s16, 0
      %p57 = por %p55, %p56
      %p58 = scmp.ne.s32.totalorder %s50, %s52
      %p59 = scmp.eq.s32.totalorder %s21, 1
      %p60 = por %p58, %p59
      %p61 = scmp.ne.s32.totalorder %s52, %s53
      %p62 = scmp.eq.s32.totalorder %s21, 0
      %p63 = por %p61, %p62
      %p64 = scmp.ne.s32.totalorder %s52, %s53
      %p65 = scmp.eq.s32.totalorder %s22, 1
      %p66 = por %p64, %p65
      %p68 = scmp.ne.s32.totalorder %s53, %s67
      %p69 = scmp.eq.s32.totalorder %s22, 0
      %p70 = por %p68, %p69
      %s72 = sadd.s32 %s71, 1
      %p75 = scmp.eq.s32.totalorder %s16, 1
      %p76 = scmp.ne.s32.totalorder %s71, %s73
      %p77 = scmp.eq.s32.totalorder %s16, 0
      %p78 = por %p76, %p77
      %p79 = scmp.ne.s32.totalorder %s71, %s73
      %p80 = scmp.eq.s32.totalorder %s21, 1
      %p81 = por %p79, %p80
      %p82 = scmp.ne.s32.totalorder %s73, %s74
      %p83 = scmp.eq.s32.totalorder %s21, 0
      %p84 = por %p82, %p83
      %p85 = scmp.ne.s32.totalorder %s73, %s74
      %p86 = scmp.eq.s32.totalorder %s22, 1
      %p87 = por %p85, %p86
      %p89 = scmp.ne.s32.totalorder %s74, %s88
      %p90 = scmp.eq.s32.totalorder %s22, 0
      %p91 = por %p89, %p90
      %s93 = sadd.s32 %s92, 1
      %p96 = scmp.eq.s32.totalorder %s16, 1
      %p97 = scmp.ne.s32.totalorder %s92, %s94
      %p98 = scmp.eq.s32.totalorder %s16, 0
      %p99 = por %p97, %p98
      %p100 = scmp.ne.s32.totalorder %s92, %s94
      %p101 = scmp.eq.s32.totalorder %s21, 1
      %p102 = por %p100, %p101
      %p103 = scmp.ne.s32.totalorder %s94, %s95
      %p104 = scmp.eq.s32.totalorder %s21, 0
      %p105 = por %p103, %p104
      %p106 = scmp.ne.s32.totalorder %s94, %s95
      %p107 = scmp.eq.s32.totalorder %s22, 1
      %p108 = por %p106, %p107
      %p110 = scmp.ne.s32.totalorder %s95, %s109
      %p111 = scmp.eq.s32.totalorder %s22, 0
      %p112 = por %p110, %p111
      %s114 = sadd.s32 %s113, 1
      %p117 = scmp.eq.s32.totalorder %s16, 1
      %p118 = scmp.ne.s32.totalorder %s113, %s115
      %p119 = scmp.eq.s32.totalorder %s16, 0
      %p120 = por %p118, %p119
      %p121 = scmp.ne.s32.totalorder %s113, %s115
      %p122 = scmp.eq.s32.totalorder %s21, 1
      %p123 = por %p121, %p122
      %p124 = scmp.ne.s32.totalorder %s115, %s116
      %p125 = scmp.eq.s32.totalorder %s21, 0
      %p126 = por %p124, %p125
      %p127 = scmp.ne.s32.totalorder %s115, %s116
      %p128 = scmp.eq.s32.totalorder %s22, 1
      %p129 = por %p127, %p128
      %p131 = scmp.ne.s32.totalorder %s116, %s130
      %p132 = scmp.eq.s32.totalorder %s22, 0
      %p133 = por %p131, %p132
      %s135 = sadd.s32 %s134, 1
      %p138 = scmp.eq.s32.totalorder %s16, 1
      %p139 = scmp.ne.s32.totalorder %s134, %s136
      %p140 = scmp.eq.s32.totalorder %s16, 0
      %p141 = por %p139, %p140
      %p142 = scmp.ne.s32.totalorder %s134, %s136
      %p143 = scmp.eq.s32.totalorder %s21, 1
      %p144 = por %p142, %p143
      %p145 = scmp.ne.s32.totalorder %s136, %s137
      %p146 = scmp.eq.s32.totalorder %s21, 0
      %p147 = por %p145, %p146
      %p148 = scmp.ne.s32.totalorder %s136, %s137
      %p149 = scmp.eq.s32.totalorder %s22, 1
      %p150 = por %p148, %p149
      %p152 = scmp.ne.s32.totalorder %s137, %s151
      %p153 = scmp.eq.s32.totalorder %s22, 0
      %p154 = por %p152, %p153
      %s156 = sadd.s32 %s155, 1
      %p159 = scmp.eq.s32.totalorder %s16, 1
      %p160 = scmp.ne.s32.totalorder %s155, %s157
      %p161 = scmp.eq.s32.totalorder %s16, 0
      %p162 = por %p160, %p161
      %p163 = scmp.ne.s32.totalorder %s155, %s157
      %p164 = scmp.eq.s32.totalorder %s21, 1
      %p165 = por %p163, %p164
      %p166 = scmp.ne.s32.totalorder %s157, %s158
      %p167 = scmp.eq.s32.totalorder %s21, 0
      %p168 = por %p166, %p167
      %p169 = scmp.ne.s32.totalorder %s157, %s158
      %p170 = scmp.eq.s32.totalorder %s22, 1
      %p171 = por %p169, %p170
      %p173 = scmp.ne.s32.totalorder %s158, %s172
      %p174 = scmp.eq.s32.totalorder %s22, 0
      %p175 = por %p173, %p174
      %s176 = ssub.s32 %s16, %s23
      %p177 = scmp.eq.s32.totalorder %s176, 0
      %s179 = sadd.s32 %s178, 1
      %s180 = scalar_select %p177, %s178, %s179
      %p183 = pneg %p177
      %p184 = scmp.eq.s32.totalorder %s16, 1
      %p185 = por %p183, %p184
      %p186 = scmp.ne.s32.totalorder %s178, %s181
      %p187 = scmp.eq.s32.totalorder %s16, 0
      %p188 = por %p186, %p187
      %p189 = scmp.ne.s32.totalorder %s178, %s181
      %p190 = scmp.eq.s32.totalorder %s21, 1
      %p191 = por %p189, %p190
      %p192 = scmp.ne.s32.totalorder %s181, %s182
      %p193 = scmp.eq.s32.totalorder %s21, 0
      %p194 = por %p192, %p193
      %p195 = scmp.ne.s32.totalorder %s181, %s182
      %p196 = scmp.eq.s32.totalorder %s22, 1
      %p197 = por %p195, %p196
      %p199 = scmp.ne.s32.totalorder %s182, %s198
      %p200 = scmp.eq.s32.totalorder %s22, 0
      %p201 = por %p199, %p200
      %p202 = scmp.le.s32.totalorder 1, %s16
      %p203 = scmp.lt.s32.totalorder %s16, 3
      %p204 = pnand %p202, %p203
      %p205 = pneg %p204
      // Predicated region
      $region9: #{tpu_custom_call.1} parent=5 // pred_check
        _
      $region10: #{tpu_custom_call.1} parent=5 // pred_check_branch
        %207 = sbr.rel (%p204) target = $region12
      $region11: #{tpu_custom_call.1} parent=5 // pred_region
        %s208 = ssub.s32 %s16, 1
        // Predicated region
        $region13: #{tpu_custom_call.1} parent=11 // pred_check
          %p209 = pneg %p63
        $region14: #{tpu_custom_call.1} parent=11 // pred_check_branch
          %211 = sbr.rel (%p209) target = $region16
        $region15: #{tpu_custom_call.1} parent=11 // pred_region
          _
        $region16: #{tpu_custom_call.1} parent=11 // pred_fallthru
          _
        // Predicated region
        $region17: #{tpu_custom_call.1} parent=11 // pred_check
          %p212 = pneg %p84
        $region18: #{tpu_custom_call.1} parent=11 // pred_check_branch
          %214 = sbr.rel (%p212) target = $region20
        $region19: #{tpu_custom_call.1} parent=11 // pred_region
          _
        $region20: #{tpu_custom_call.1} parent=11 // pred_fallthru
          _
        // Predicated region
        $region21: #{tpu_custom_call.1} parent=11 // pred_check
          %p215 = pneg %p105
        $region22: #{tpu_custom_call.1} parent=11 // pred_check_branch
          %217 = sbr.rel (%p215) target = $region24
        $region23: #{tpu_custom_call.1} parent=11 // pred_region
          _
        $region24: #{tpu_custom_call.1} parent=11 // pred_fallthru
          _
        // Predicated region
        $region25: #{tpu_custom_call.1} parent=11 // pred_check
          %p218 = pneg %p126
        $region26: #{tpu_custom_call.1} parent=11 // pred_check_branch
          %220 = sbr.rel (%p218) target = $region28
        $region27: #{tpu_custom_call.1} parent=11 // pred_region
          _
        $region28: #{tpu_custom_call.1} parent=11 // pred_fallthru
          _
        // Predicated region
        $region29: #{tpu_custom_call.1} parent=11 // pred_check
          %p221 = pneg %p147
        $region30: #{tpu_custom_call.1} parent=11 // pred_check_branch
          %223 = sbr.rel (%p221) target = $region32
        $region31: #{tpu_custom_call.1} parent=11 // pred_region
          _
        $region32: #{tpu_custom_call.1} parent=11 // pred_fallthru
          _
        // Predicated region
        $region33: #{tpu_custom_call.1} parent=11 // pred_check
          %p224 = pneg %p168
        $region34: #{tpu_custom_call.1} parent=11 // pred_check_branch
          %226 = sbr.rel (%p224) target = $region36
        $region35: #{tpu_custom_call.1} parent=11 // pred_region
          _
        $region36: #{tpu_custom_call.1} parent=11 // pred_fallthru
          _
      $region12: #{tpu_custom_call.1} parent=5 // pred_fallthru
        _
      %p227 = scmp.lt.s32.totalorder %s16, 2
      // Predicated region
      $region37: #{tpu_custom_call.1} parent=5 // pred_check
        %p228 = pneg %p227
      $region38: #{tpu_custom_call.1} parent=5 // pred_check_branch
        %230 = sbr.rel (%p228) target = $region40
      $region39: #{tpu_custom_call.1} parent=5 // pred_region
        // Predicated region
        $region41: #{tpu_custom_call.1} parent=39 // pred_check
          %p231 = pneg %p36
        $region42: #{tpu_custom_call.1} parent=39 // pred_check_branch
          %233 = sbr.rel (%p231) target = $region44
        $region43: #{tpu_custom_call.1} parent=39 // pred_region
          %p234 = scmp.lt.s32.totalorder %s16, 1
          %s235 = scalar_select %p234, %s16, 1
          %s236 = smul.addr %s235, 8
          %s237 = scalar_lea.vmem %s0, %s236
        $region44: #{tpu_custom_call.1} parent=39 // pred_fallthru
          _
      $region40: #{tpu_custom_call.1} parent=5 // pred_fallthru
        _
      %p238 = scmp.le.s32.totalorder 1, %s16
      %p239 = scmp.lt.s32.totalorder %s16, 3
      %p240 = pnand %p238, %p239
      %p241 = pneg %p240
      // Predicated region
      $region45: #{tpu_custom_call.1} parent=5 // pred_check
        _
      $region46: #{tpu_custom_call.1} parent=5 // pred_check_branch
        %243 = sbr.rel (%p240) target = $region48
      $region47: #{tpu_custom_call.1} parent=5 // pred_region
        %s244 = ssub.s32 %s16, 1
        %p245 = scmp.lt.s32.totalorder %s21, 1
        %s246 = scalar_select %p245, %s21, 1
        %s247 = smul.addr %s246, 8
        %s248 = scalar_lea.vmem %s0, %s247
        %p249 = pneg %p42
        %p250 = pneg %p39
        %p251 = pneg %p63
        %p252 = pneg %p60
        %p253 = pneg %p84
        %p254 = pneg %p81
        %p255 = pneg %p105
        %p256 = pneg %p102
        %p257 = pneg %p126
        %p258 = pneg %p123
        %p259 = pneg %p147
        %p260 = pneg %p144
        %p261 = pneg %p168
        %p262 = pneg %p165
        %p263 = pneg %p194
        %p264 = pneg %p191
        %s265 = sand.u32 %s181, 1
        %s266 = scalar_lea.sflag [#allocation3], %s265
        %s267 = sand.u32 %s181, 1
        %s268 = smul.addr %s267, 8
        %s269 = scalar_lea.vmem [#allocation2], %s268
        %p270 = scmp.lt.s32.totalorder %s21, 1
        %s271 = scalar_select %p270, %s21, 1
        %s272 = smul.addr %s271, 8
        %s273 = scalar_lea.vmem %s0, %s272
        %v274 = vld [vmem:[%s273] sm:$0xff]
        %v275 = vld [vmem:[%s1] sm:$0xff]
        %v276 = vld [vmem:[%s1 + $0x8] sm:$0xff]
        %v277 = vld [vmem:[%s1 + $0x10] sm:$0xff]
        %v278 = vld [vmem:[%s1 + $0x18] sm:$0xff]
        %v279 = vld [vmem:[%s1 + $0x20] sm:$0xff]
        %v280 = vld [vmem:[%s1 + $0x28] sm:$0xff]
        %v281 = vld [vmem:[%s1 + $0x30] sm:$0xff]
        %v282 = vld [vmem:[%s1 + $0x38] sm:$0xff]
        %v283 = vld [vmem:[%s1 + $0x40] sm:$0xff]
        %v284 = vld [vmem:[%s1 + $0x48] sm:$0xff]
        %v285 = vld [vmem:[%s1 + $0x50] sm:$0xff]
        %v286 = vld [vmem:[%s1 + $0x58] sm:$0xff]
        %v287 = vld [vmem:[%s1 + $0x60] sm:$0xff]
        %v288 = vld [vmem:[%s1 + $0x68] sm:$0xff]
        %v289 = vld [vmem:[%s1 + $0x70] sm:$0xff]
        %v290 = vld [vmem:[%s1 + $0x78] sm:$0xff]
        %v291 = vld [vmem:[%s2] sm:$0x1]
        %v292 = vld [vmem:[%s2 + $0x1] sm:$0x1]
        %v293 = vld [vmem:[%s2 + $0x2] sm:$0x1]
        %v294 = vld [vmem:[%s2 + $0x3] sm:$0x1]
        %v295 = vld [vmem:[%s3] sm:$0xff]
        %v296 = vld [vmem:[%s3 + $0x8] sm:$0xff]
        %v297 = vld [vmem:[%s3 + $0x10] sm:$0xff]
        %v298 = vld [vmem:[%s3 + $0x18] sm:$0xff]
        %v299 = vld [vmem:[%s4] sm:$0xff]
        %v300 = vld [vmem:[%s4 + $0x8] sm:$0xff]
        %v301 = vld [vmem:[%s4 + $0x10] sm:$0xff]
        %v302 = vld [vmem:[%s4 + $0x18] sm:$0xff]
        %v303 = vld [vmem:[%s5] sm:$0xff]
        %v304 = vld [vmem:[%s5 + $0x8] sm:$0xff]
        %v305 = vld [vmem:[%s5 + $0x10] sm:$0xff]
        %v306 = vld [vmem:[%s5 + $0x18] sm:$0xff]
        %v307 = vld [vmem:[%s5 + $0x20] sm:$0xff]
        %v308 = vld [vmem:[%s5 + $0x28] sm:$0xff]
        %v309 = vld [vmem:[%s5 + $0x30] sm:$0xff]
        %v310 = vld [vmem:[%s5 + $0x38] sm:$0xff]
        %v311 = vld [vmem:[%s5 + $0x40] sm:$0xff]
        %v312 = vld [vmem:[%s5 + $0x48] sm:$0xff]
        %v313 = vld [vmem:[%s5 + $0x50] sm:$0xff]
        %v314 = vld [vmem:[%s5 + $0x58] sm:$0xff]
        %v315 = vld [vmem:[%s5 + $0x60] sm:$0xff]
        %v316 = vld [vmem:[%s5 + $0x68] sm:$0xff]
        %v317 = vld [vmem:[%s5 + $0x70] sm:$0xff]
        %v318 = vld [vmem:[%s5 + $0x78] sm:$0xff]
        %v319 = vld [vmem:[%s6] sm:$0x7f]
        %v324 = vlaneseq
        %v325 = vshrl.u32 %v324, 7
        %v326 = vsub.s32 0, %v325
        %v327 = vrot.slane %v291, %v326
        %v328 = vlaneseq
        %v329 = vshrl.u32 %v328, 7
        %v330 = vsub.s32 0, %v329
        %v331 = vrot.slane %v292, %v330
        %v332 = vlaneseq
        %v333 = vshrl.u32 %v332, 7
        %v334 = vsub.s32 0, %v333
        %v335 = vrot.slane %v293, %v334
        %v336 = vlaneseq
        %v337 = vshrl.u32 %v336, 7
        %v338 = vsub.s32 0, %v337
        %v339 = vrot.slane %v294, %v338
        %vm344 = vcmask 261120
        %v346 = vsel %vm344, %v274, 0
        %348 = vmatprep.subr.mxu0 0.0
        %349 = vmatpush1.msra.mxu0 %v275
        %350 = vmatprep.subr.mxu0 0.0
        %351 = vmatpush1.msra.mxu0 %v276
        %352 = vmatprep.subr.mxu0 0.0
        %353 = vmatpush1.msra.mxu0 %v277
        %354 = vmatprep.subr.mxu0 0.0
        %355 = vmatpush1.msra.mxu0 %v278
        %356 = vmatprep.subr.mxu0 0.0
        %357 = vmatpush1.msra.mxu0 0.0
        %358 = vmatprep.subr.mxu0 0.0
        %359 = vmatpush1.msra.mxu0 0.0
        %360 = vmatprep.subr.mxu0 0.0
        %361 = vmatpush1.msra.mxu0 0.0
        %362 = vmatprep.subr.mxu0 0.0
        %363 = vmatpush1.msra.mxu0 0.0
        %364 = vmatprep.subr.mxu0 0.0
        %365 = vmatpush1.msra.mxu0 0.0
        %366 = vmatprep.subr.mxu0 0.0
        %367 = vmatpush1.msra.mxu0 0.0
        %368 = vmatprep.subr.mxu0 0.0
        %369 = vmatpush1.msra.mxu0 0.0
        %370 = vmatprep.subr.mxu0 0.0
        %371 = vmatpush1.msra.mxu0 0.0
        %372 = vmatprep.subr.mxu0 0.0
        %373 = vmatpush1.msra.mxu0 0.0
        %374 = vmatprep.subr.mxu0 0.0
        %375 = vmatpush1.msra.mxu0 0.0
        %376 = vmatprep.subr.mxu0 0.0
        %377 = vmatpush1.msra.mxu0 0.0
        %378 = vmatprep.subr.mxu0 0.0
        %379 = vmatpush1.msra.mxu0 0.0
        %380 = vmatprep.subr.mxu0 0.0
        %381 = vmatpush1.msra.mxu0 0.0
        %382 = vmatprep.subr.mxu0 0.0
        %383 = vmatpush1.msra.mxu0 0.0
        %384 = vmatprep.subr.mxu0 0.0
        %385 = vmatpush1.msra.mxu0 0.0
        %386 = vmatprep.subr.mxu0 0.0
        %387 = vmatpush1.msra.mxu0 0.0
        %388 = vmatprep.subr.mxu0 0.0
        %389 = vmatpush1.msra.mxu0 0.0
        %390 = vmatprep.subr.mxu0 0.0
        %391 = vmatpush1.msra.mxu0 0.0
        %392 = vmatprep.subr.mxu0 0.0
        %393 = vmatpush1.msra.mxu0 0.0
        %394 = vmatprep.subr.mxu0 0.0
        %395 = vmatpush1.msra.mxu0 0.0
        %396 = vmatprep.subr.mxu0 0.0
        %397 = vmatpush1.msra.mxu0 0.0
        %398 = vmatprep.subr.mxu0 0.0
        %399 = vmatpush1.msra.mxu0 0.0
        %400 = vmatprep.subr.mxu0 0.0
        %401 = vmatpush1.msra.mxu0 0.0
        %402 = vmatprep.subr.mxu0 0.0
        %403 = vmatpush1.msra.mxu0 0.0
        %404 = vmatprep.subr.mxu0 0.0
        %405 = vmatpush1.msra.mxu0 0.0
        %406 = vmatprep.subr.mxu0 0.0
        %407 = vmatpush1.msra.mxu0 0.0
        %408 = vmatprep.subr.mxu0 0.0
        %409 = vmatpush1.msra.mxu0 0.0
        %410 = vmatprep.subr.mxu0 0.0
        %411 = vmatpush1.msra.mxu0 0.0
        %412 = vmatprep.mubr.f32.mxu0 0.0
        %413 = vmatmul.mubr.f32.gmra.mrb[0].mxu0 %v346
        %v414 = vpop.f32.mrb[0].mxu0
        %v415 = vadd.f32 %v327, %v414
        %v416 = vpop.f32.mrb[0].mxu0
        %417 = vdwg.mxu0
        %418 = vmatprep.subr.mxu0 0.0
        %419 = vmatpush1.msra.mxu0 %v279
        %420 = vmatprep.subr.mxu0 0.0
        %421 = vmatpush1.msra.mxu0 %v280
        %422 = vmatprep.subr.mxu0 0.0
        %423 = vmatpush1.msra.mxu0 %v281
        %424 = vmatprep.subr.mxu0 0.0
        %425 = vmatpush1.msra.mxu0 %v282
        %426 = vmatprep.subr.mxu0 0.0
        %427 = vmatpush1.msra.mxu0 0.0
        %428 = vmatprep.subr.mxu0 0.0
        %429 = vmatpush1.msra.mxu0 0.0
        %430 = vmatprep.subr.mxu0 0.0
        %431 = vmatpush1.msra.mxu0 0.0
        %432 = vmatprep.subr.mxu0 0.0
        %433 = vmatpush1.msra.mxu0 0.0
        %434 = vmatprep.subr.mxu0 0.0
        %435 = vmatpush1.msra.mxu0 0.0
        %436 = vmatprep.subr.mxu0 0.0
        %437 = vmatpush1.msra.mxu0 0.0
        %438 = vmatprep.subr.mxu0 0.0
        %439 = vmatpush1.msra.mxu0 0.0
        %440 = vmatprep.subr.mxu0 0.0
        %441 = vmatpush1.msra.mxu0 0.0
        %442 = vmatprep.subr.mxu0 0.0
        %443 = vmatpush1.msra.mxu0 0.0
        %444 = vmatprep.subr.mxu0 0.0
        %445 = vmatpush1.msra.mxu0 0.0
        %446 = vmatprep.subr.mxu0 0.0
        %447 = vmatpush1.msra.mxu0 0.0
        %448 = vmatprep.subr.mxu0 0.0
        %449 = vmatpush1.msra.mxu0 0.0
        %450 = vmatprep.subr.mxu0 0.0
        %451 = vmatpush1.msra.mxu0 0.0
        %452 = vmatprep.subr.mxu0 0.0
        %453 = vmatpush1.msra.mxu0 0.0
        %454 = vmatprep.subr.mxu0 0.0
        %455 = vmatpush1.msra.mxu0 0.0
        %456 = vmatprep.subr.mxu0 0.0
        %457 = vmatpush1.msra.mxu0 0.0
        %458 = vmatprep.subr.mxu0 0.0
        %459 = vmatpush1.msra.mxu0 0.0
        %460 = vmatprep.subr.mxu0 0.0
        %461 = vmatpush1.msra.mxu0 0.0
        %462 = vmatprep.subr.mxu0 0.0
        %463 = vmatpush1.msra.mxu0 0.0
        %464 = vmatprep.subr.mxu0 0.0
        %465 = vmatpush1.msra.mxu0 0.0
        %466 = vmatprep.subr.mxu0 0.0
        %467 = vmatpush1.msra.mxu0 0.0
        %468 = vmatprep.subr.mxu0 0.0
        %469 = vmatpush1.msra.mxu0 0.0
        %470 = vmatprep.subr.mxu0 0.0
        %471 = vmatpush1.msra.mxu0 0.0
        %472 = vmatprep.subr.mxu0 0.0
        %473 = vmatpush1.msra.mxu0 0.0
        %474 = vmatprep.subr.mxu0 0.0
        %475 = vmatpush1.msra.mxu0 0.0
        %476 = vmatprep.subr.mxu0 0.0
        %477 = vmatpush1.msra.mxu0 0.0
        %478 = vmatprep.subr.mxu0 0.0
        %479 = vmatpush1.msra.mxu0 0.0
        %480 = vmatprep.subr.mxu0 0.0
        %481 = vmatpush1.msra.mxu0 0.0
        %482 = vmatprep.mubr.f32.mxu0 0.0
        %483 = vmatmul.mubr.f32.gmra.mrb[0].mxu0 %v346
        %v484 = vpop.f32.mrb[0].mxu0
        %v485 = vadd.f32 %v331, %v484
        %v486 = vpop.f32.mrb[0].mxu0
        %487 = vdwg.mxu0
        %488 = vmatprep.subr.mxu0 0.0
        %489 = vmatpush1.msra.mxu0 %v283
        %490 = vmatprep.subr.mxu0 0.0
        %491 = vmatpush1.msra.mxu0 %v284
        %492 = vmatprep.subr.mxu0 0.0
        %493 = vmatpush1.msra.mxu0 %v285
        %494 = vmatprep.subr.mxu0 0.0
        %495 = vmatpush1.msra.mxu0 %v286
        %496 = vmatprep.subr.mxu0 0.0
        %497 = vmatpush1.msra.mxu0 0.0
        %498 = vmatprep.subr.mxu0 0.0
        %499 = vmatpush1.msra.mxu0 0.0
        %500 = vmatprep.subr.mxu0 0.0
        %501 = vmatpush1.msra.mxu0 0.0
        %502 = vmatprep.subr.mxu0 0.0
        %503 = vmatpush1.msra.mxu0 0.0
        %504 = vmatprep.subr.mxu0 0.0
        %505 = vmatpush1.msra.mxu0 0.0
        %506 = vmatprep.subr.mxu0 0.0
        %507 = vmatpush1.msra.mxu0 0.0
        %508 = vmatprep.subr.mxu0 0.0
        %509 = vmatpush1.msra.mxu0 0.0
        %510 = vmatprep.subr.mxu0 0.0
        %511 = vmatpush1.msra.mxu0 0.0
        %512 = vmatprep.subr.mxu0 0.0
        %513 = vmatpush1.msra.mxu0 0.0
        %514 = vmatprep.subr.mxu0 0.0
        %515 = vmatpush1.msra.mxu0 0.0
        %516 = vmatprep.subr.mxu0 0.0
        %517 = vmatpush1.msra.mxu0 0.0
        %518 = vmatprep.subr.mxu0 0.0
        %519 = vmatpush1.msra.mxu0 0.0
        %520 = vmatprep.subr.mxu0 0.0
        %521 = vmatpush1.msra.mxu0 0.0
        %522 = vmatprep.subr.mxu0 0.0
        %523 = vmatpush1.msra.mxu0 0.0
        %524 = vmatprep.subr.mxu0 0.0
        %525 = vmatpush1.msra.mxu0 0.0
        %526 = vmatprep.subr.mxu0 0.0
        %527 = vmatpush1.msra.mxu0 0.0
        %528 = vmatprep.subr.mxu0 0.0
        %529 = vmatpush1.msra.mxu0 0.0
        %530 = vmatprep.subr.mxu0 0.0
        %531 = vmatpush1.msra.mxu0 0.0
        %532 = vmatprep.subr.mxu0 0.0
        %533 = vmatpush1.msra.mxu0 0.0
        %534 = vmatprep.subr.mxu0 0.0
        %535 = vmatpush1.msra.mxu0 0.0
        %536 = vmatprep.subr.mxu0 0.0
        %537 = vmatpush1.msra.mxu0 0.0
        %538 = vmatprep.subr.mxu0 0.0
        %539 = vmatpush1.msra.mxu0 0.0
        %540 = vmatprep.subr.mxu0 0.0
        %541 = vmatpush1.msra.mxu0 0.0
        %542 = vmatprep.subr.mxu0 0.0
        %543 = vmatpush1.msra.mxu0 0.0
        %544 = vmatprep.subr.mxu0 0.0
        %545 = vmatpush1.msra.mxu0 0.0
        %546 = vmatprep.subr.mxu0 0.0
        %547 = vmatpush1.msra.mxu0 0.0
        %548 = vmatprep.subr.mxu0 0.0
        %549 = vmatpush1.msra.mxu0 0.0
        %550 = vmatprep.subr.mxu0 0.0
        %551 = vmatpush1.msra.mxu0 0.0
        %552 = vmatprep.mubr.f32.mxu0 0.0
        %553 = vmatmul.mubr.f32.gmra.mrb[0].mxu0 %v346
        %v554 = vpop.f32.mrb[0].mxu0
        %v555 = vadd.f32 %v335, %v554
        %v556 = vpop.f32.mrb[0].mxu0
        %557 = vdwg.mxu0
        %558 = vmatprep.subr.mxu0 0.0
        %559 = vmatpush1.msra.mxu0 %v287
        %560 = vmatprep.subr.mxu0 0.0
        %561 = vmatpush1.msra.mxu0 %v288
        %562 = vmatprep.subr.mxu0 0.0
        %563 = vmatpush1.msra.mxu0 %v289
        %564 = vmatprep.subr.mxu0 0.0
        %565 = vmatpush1.msra.mxu0 %v290
        %566 = vmatprep.subr.mxu0 0.0
        %567 = vmatpush1.msra.mxu0 0.0
        %568 = vmatprep.subr.mxu0 0.0
        %569 = vmatpush1.msra.mxu0 0.0
        %570 = vmatprep.subr.mxu0 0.0
        %571 = vmatpush1.msra.mxu0 0.0
        %572 = vmatprep.subr.mxu0 0.0
        %573 = vmatpush1.msra.mxu0 0.0
        %574 = vmatprep.subr.mxu0 0.0
        %575 = vmatpush1.msra.mxu0 0.0
        %576 = vmatprep.subr.mxu0 0.0
        %577 = vmatpush1.msra.mxu0 0.0
        %578 = vmatprep.subr.mxu0 0.0
        %579 = vmatpush1.msra.mxu0 0.0
        %580 = vmatprep.subr.mxu0 0.0
        %581 = vmatpush1.msra.mxu0 0.0
        %582 = vmatprep.subr.mxu0 0.0
        %583 = vmatpush1.msra.mxu0 0.0
        %584 = vmatprep.subr.mxu0 0.0
        %585 = vmatpush1.msra.mxu0 0.0
        %586 = vmatprep.subr.mxu0 0.0
        %587 = vmatpush1.msra.mxu0 0.0
        %588 = vmatprep.subr.mxu0 0.0
        %589 = vmatpush1.msra.mxu0 0.0
        %590 = vmatprep.subr.mxu0 0.0
        %591 = vmatpush1.msra.mxu0 0.0
        %592 = vmatprep.subr.mxu0 0.0
        %593 = vmatpush1.msra.mxu0 0.0
        %594 = vmatprep.subr.mxu0 0.0
        %595 = vmatpush1.msra.mxu0 0.0
        %596 = vmatprep.subr.mxu0 0.0
        %597 = vmatpush1.msra.mxu0 0.0
        %598 = vmatprep.subr.mxu0 0.0
        %599 = vmatpush1.msra.mxu0 0.0
        %600 = vmatprep.subr.mxu0 0.0
        %601 = vmatpush1.msra.mxu0 0.0
        %602 = vmatprep.subr.mxu0 0.0
        %603 = vmatpush1.msra.mxu0 0.0
        %604 = vmatprep.subr.mxu0 0.0
        %605 = vmatpush1.msra.mxu0 0.0
        %606 = vmatprep.subr.mxu0 0.0
        %607 = vmatpush1.msra.mxu0 0.0
        %608 = vmatprep.subr.mxu0 0.0
        %609 = vmatpush1.msra.mxu0 0.0
        %610 = vmatprep.subr.mxu0 0.0
        %611 = vmatpush1.msra.mxu0 0.0
        %612 = vmatprep.subr.mxu0 0.0
        %613 = vmatpush1.msra.mxu0 0.0
        %614 = vmatprep.subr.mxu0 0.0
        %615 = vmatpush1.msra.mxu0 0.0
        %616 = vmatprep.subr.mxu0 0.0
        %617 = vmatpush1.msra.mxu0 0.0
        %618 = vmatprep.subr.mxu0 0.0
        %619 = vmatpush1.msra.mxu0 0.0
        %620 = vmatprep.subr.mxu0 0.0
        %621 = vmatpush1.msra.mxu0 0.0
        %622 = vmatprep.mubr.f32.mxu0 0.0
        %623 = vmatmul.mubr.f32.gmra.mrb[0].mxu0 %v346
        %v624 = vpop.f32.mrb[0].mxu0
        %v625 = vadd.f32 %v339, %v624
        %v626 = vpop.f32.mrb[0].mxu0
        %627 = vdwg.mxu0
        %629 = vrot.lane.b32.xlu0 %v415, 120
        %v630 = vpop.permute.xlu0 %629
        %vm631 = vcmask 64512
        %v632 = vsel %vm631, %v415, 0
        %v634 = vsel %vm631, %v630, 0
        %636 = vmatprep.subr.mxu0 0.0
        %637 = vmatpush1.xpose.msra.mxu0 %v634
        %638 = vmatprep.subr.mxu0 0.0
        %639 = vmatpush1.xpose.msra.mxu0 0.0
        %640 = vmatprep.subr.mxu0 0.0
        %641 = vmatpush1.xpose.msra.mxu0 0.0
        %642 = vmatprep.subr.mxu0 0.0
        %643 = vmatpush1.xpose.msra.mxu0 0.0
        %644 = vmatprep.subr.mxu0 0.0
        %645 = vmatpush1.xpose.msra.mxu0 0.0
        %646 = vmatprep.subr.mxu0 0.0
        %647 = vmatpush1.xpose.msra.mxu0 0.0
        %648 = vmatprep.subr.mxu0 0.0
        %649 = vmatpush1.xpose.msra.mxu0 0.0
        %650 = vmatprep.subr.mxu0 0.0
        %651 = vmatpush1.xpose.msra.mxu0 0.0
        %652 = vmatprep.subr.mxu0 0.0
        %653 = vmatpush1.xpose.msra.mxu0 0.0
        %654 = vmatprep.subr.mxu0 0.0
        %655 = vmatpush1.xpose.msra.mxu0 0.0
        %656 = vmatprep.subr.mxu0 0.0
        %657 = vmatpush1.xpose.msra.mxu0 0.0
        %658 = vmatprep.subr.mxu0 0.0
        %659 = vmatpush1.xpose.msra.mxu0 0.0
        %660 = vmatprep.subr.mxu0 0.0
        %661 = vmatpush1.xpose.msra.mxu0 0.0
        %662 = vmatprep.subr.mxu0 0.0
        %663 = vmatpush1.xpose.msra.mxu0 0.0
        %664 = vmatprep.subr.mxu0 0.0
        %665 = vmatpush1.xpose.msra.mxu0 0.0
        %666 = vmatprep.subr.mxu0 0.0
        %667 = vmatpush1.xpose.msra.mxu0 0.0
        %668 = vmatprep.subr.mxu0 0.0
        %669 = vmatpush1.xpose.msra.mxu0 0.0
        %670 = vmatprep.subr.mxu0 0.0
        %671 = vmatpush1.xpose.msra.mxu0 0.0
        %672 = vmatprep.subr.mxu0 0.0
        %673 = vmatpush1.xpose.msra.mxu0 0.0
        %674 = vmatprep.subr.mxu0 0.0
        %675 = vmatpush1.xpose.msra.mxu0 0.0
        %676 = vmatprep.subr.mxu0 0.0
        %677 = vmatpush1.xpose.msra.mxu0 0.0
        %678 = vmatprep.subr.mxu0 0.0
        %679 = vmatpush1.xpose.msra.mxu0 0.0
        %680 = vmatprep.subr.mxu0 0.0
        %681 = vmatpush1.xpose.msra.mxu0 0.0
        %682 = vmatprep.subr.mxu0 0.0
        %683 = vmatpush1.xpose.msra.mxu0 0.0
        %684 = vmatprep.subr.mxu0 0.0
        %685 = vmatpush1.xpose.msra.mxu0 0.0
        %686 = vmatprep.subr.mxu0 0.0
        %687 = vmatpush1.xpose.msra.mxu0 0.0
        %688 = vmatprep.subr.mxu0 0.0
        %689 = vmatpush1.xpose.msra.mxu0 0.0
        %690 = vmatprep.subr.mxu0 0.0
        %691 = vmatpush1.xpose.msra.mxu0 0.0
        %692 = vmatprep.subr.mxu0 0.0
        %693 = vmatpush1.xpose.msra.mxu0 0.0
        %694 = vmatprep.subr.mxu0 0.0
        %695 = vmatpush1.xpose.msra.mxu0 0.0
        %696 = vmatprep.subr.mxu0 0.0
        %697 = vmatpush1.xpose.msra.mxu0 0.0
        %698 = vmatprep.subr.mxu0 0.0
        %699 = vmatpush1.xpose.msra.mxu0 0.0
        %700 = vmatprep.mubr.f32.mxu0 0.0
        %701 = vmatmul.mubr.f32.gmra.mrb[0].mxu0 %v632
        %v702 = vpop.f32.mrb[0].mxu0
        %v703 = vadd.f32 0.0, %v702
        %v704 = vpop.f32.mrb[0].mxu0
        %705 = vdwg.mxu0
        %707 = vrot.lane.b32.xlu0 %v485, 120
        %v708 = vpop.permute.xlu0 %707
        %v709 = vsel %vm631, %v485, 0
        %v711 = vsel %vm631, %v708, 0
        %713 = vmatprep.subr.mxu0 0.0
        %714 = vmatpush1.xpose.msra.mxu0 %v711
        %715 = vmatprep.subr.mxu0 0.0
        %716 = vmatpush1.xpose.msra.mxu0 0.0
        %717 = vmatprep.subr.mxu0 0.0
        %718 = vmatpush1.xpose.msra.mxu0 0.0
        %719 = vmatprep.subr.mxu0 0.0
        %720 = vmatpush1.xpose.msra.mxu0 0.0
        %721 = vmatprep.subr.mxu0 0.0
        %722 = vmatpush1.xpose.msra.mxu0 0.0
        %723 = vmatprep.subr.mxu0 0.0
        %724 = vmatpush1.xpose.msra.mxu0 0.0
        %725 = vmatprep.subr.mxu0 0.0
        %726 = vmatpush1.xpose.msra.mxu0 0.0
        %727 = vmatprep.subr.mxu0 0.0
        %728 = vmatpush1.xpose.msra.mxu0 0.0
        %729 = vmatprep.subr.mxu0 0.0
        %730 = vmatpush1.xpose.msra.mxu0 0.0
        %731 = vmatprep.subr.mxu0 0.0
        %732 = vmatpush1.xpose.msra.mxu0 0.0
        %733 = vmatprep.subr.mxu0 0.0
        %734 = vmatpush1.xpose.msra.mxu0 0.0
        %735 = vmatprep.subr.mxu0 0.0
        %736 = vmatpush1.xpose.msra.mxu0 0.0
        %737 = vmatprep.subr.mxu0 0.0
        %738 = vmatpush1.xpose.msra.mxu0 0.0
        %739 = vmatprep.subr.mxu0 0.0
        %740 = vmatpush1.xpose.msra.mxu0 0.0
        %741 = vmatprep.subr.mxu0 0.0
        %742 = vmatpush1.xpose.msra.mxu0 0.0
        %743 = vmatprep.subr.mxu0 0.0
        %744 = vmatpush1.xpose.msra.mxu0 0.0
        %745 = vmatprep.subr.mxu0 0.0
        %746 = vmatpush1.xpose.msra.mxu0 0.0
        %747 = vmatprep.subr.mxu0 0.0
        %748 = vmatpush1.xpose.msra.mxu0 0.0
        %749 = vmatprep.subr.mxu0 0.0
        %750 = vmatpush1.xpose.msra.mxu0 0.0
        %751 = vmatprep.subr.mxu0 0.0
        %752 = vmatpush1.xpose.msra.mxu0 0.0
        %753 = vmatprep.subr.mxu0 0.0
        %754 = vmatpush1.xpose.msra.mxu0 0.0
        %755 = vmatprep.subr.mxu0 0.0
        %756 = vmatpush1.xpose.msra.mxu0 0.0
        %757 = vmatprep.subr.mxu0 0.0
        %758 = vmatpush1.xpose.msra.mxu0 0.0
        %759 = vmatprep.subr.mxu0 0.0
        %760 = vmatpush1.xpose.msra.mxu0 0.0
        %761 = vmatprep.subr.mxu0 0.0
        %762 = vmatpush1.xpose.msra.mxu0 0.0
        %763 = vmatprep.subr.mxu0 0.0
        %764 = vmatpush1.xpose.msra.mxu0 0.0
        %765 = vmatprep.subr.mxu0 0.0
        %766 = vmatpush1.xpose.msra.mxu0 0.0
        %767 = vmatprep.subr.mxu0 0.0
        %768 = vmatpush1.xpose.msra.mxu0 0.0
        %769 = vmatprep.subr.mxu0 0.0
        %770 = vmatpush1.xpose.msra.mxu0 0.0
        %771 = vmatprep.subr.mxu0 0.0
        %772 = vmatpush1.xpose.msra.mxu0 0.0
        %773 = vmatprep.subr.mxu0 0.0
        %774 = vmatpush1.xpose.msra.mxu0 0.0
        %775 = vmatprep.subr.mxu0 0.0
        %776 = vmatpush1.xpose.msra.mxu0 0.0
        %777 = vmatprep.mubr.f32.mxu0 0.0
        %778 = vmatmul.mubr.f32.gmra.mrb[0].mxu0 %v709
        %v779 = vpop.f32.mrb[0].mxu0
        %v780 = vadd.f32 0.0, %v779
        %v781 = vpop.f32.mrb[0].mxu0
        %782 = vdwg.mxu0
        %784 = vrot.lane.b32.xlu0 %v555, 120
        %v785 = vpop.permute.xlu0 %784
        %v786 = vsel %vm631, %v555, 0
        %v788 = vsel %vm631, %v785, 0
        %790 = vmatprep.subr.mxu0 0.0
        %791 = vmatpush1.xpose.msra.mxu0 %v788
        %792 = vmatprep.subr.mxu0 0.0
        %793 = vmatpush1.xpose.msra.mxu0 0.0
        %794 = vmatprep.subr.mxu0 0.0
        %795 = vmatpush1.xpose.msra.mxu0 0.0
        %796 = vmatprep.subr.mxu0 0.0
        %797 = vmatpush1.xpose.msra.mxu0 0.0
        %798 = vmatprep.subr.mxu0 0.0
        %799 = vmatpush1.xpose.msra.mxu0 0.0
        %800 = vmatprep.subr.mxu0 0.0
        %801 = vmatpush1.xpose.msra.mxu0 0.0
        %802 = vmatprep.subr.mxu0 0.0
        %803 = vmatpush1.xpose.msra.mxu0 0.0
        %804 = vmatprep.subr.mxu0 0.0
        %805 = vmatpush1.xpose.msra.mxu0 0.0
        %806 = vmatprep.subr.mxu0 0.0
        %807 = vmatpush1.xpose.msra.mxu0 0.0
        %808 = vmatprep.subr.mxu0 0.0
        %809 = vmatpush1.xpose.msra.mxu0 0.0
        %810 = vmatprep.subr.mxu0 0.0
        %811 = vmatpush1.xpose.msra.mxu0 0.0
        %812 = vmatprep.subr.mxu0 0.0
        %813 = vmatpush1.xpose.msra.mxu0 0.0
        %814 = vmatprep.subr.mxu0 0.0
        %815 = vmatpush1.xpose.msra.mxu0 0.0
        %816 = vmatprep.subr.mxu0 0.0
        %817 = vmatpush1.xpose.msra.mxu0 0.0
        %818 = vmatprep.subr.mxu0 0.0
        %819 = vmatpush1.xpose.msra.mxu0 0.0
        %820 = vmatprep.subr.mxu0 0.0
        %821 = vmatpush1.xpose.msra.mxu0 0.0
        %822 = vmatprep.subr.mxu0 0.0
        %823 = vmatpush1.xpose.msra.mxu0 0.0
        %824 = vmatprep.subr.mxu0 0.0
        %825 = vmatpush1.xpose.msra.mxu0 0.0
        %826 = vmatprep.subr.mxu0 0.0
        %827 = vmatpush1.xpose.msra.mxu0 0.0
        %828 = vmatprep.subr.mxu0 0.0
        %829 = vmatpush1.xpose.msra.mxu0 0.0
        %830 = vmatprep.subr.mxu0 0.0
        %831 = vmatpush1.xpose.msra.mxu0 0.0
        %832 = vmatprep.subr.mxu0 0.0
        %833 = vmatpush1.xpose.msra.mxu0 0.0
        %834 = vmatprep.subr.mxu0 0.0
        %835 = vmatpush1.xpose.msra.mxu0 0.0
        %836 = vmatprep.subr.mxu0 0.0
        %837 = vmatpush1.xpose.msra.mxu0 0.0
        %838 = vmatprep.subr.mxu0 0.0
        %839 = vmatpush1.xpose.msra.mxu0 0.0
        %840 = vmatprep.subr.mxu0 0.0
        %841 = vmatpush1.xpose.msra.mxu0 0.0
        %842 = vmatprep.subr.mxu0 0.0
        %843 = vmatpush1.xpose.msra.mxu0 0.0
        %844 = vmatprep.subr.mxu0 0.0
        %845 = vmatpush1.xpose.msra.mxu0 0.0
        %846 = vmatprep.subr.mxu0 0.0
        %847 = vmatpush1.xpose.msra.mxu0 0.0
        %848 = vmatprep.subr.mxu0 0.0
        %849 = vmatpush1.xpose.msra.mxu0 0.0
        %850 = vmatprep.subr.mxu0 0.0
        %851 = vmatpush1.xpose.msra.mxu0 0.0
        %852 = vmatprep.subr.mxu0 0.0
        %853 = vmatpush1.xpose.msra.mxu0 0.0
        %854 = vmatprep.mubr.f32.mxu0 0.0
        %855 = vmatmul.mubr.f32.gmra.mrb[0].mxu0 %v786
        %v856 = vpop.f32.mrb[0].mxu0
        %v857 = vadd.f32 0.0, %v856
        %v858 = vpop.f32.mrb[0].mxu0
        %859 = vdwg.mxu0
        %861 = vrot.lane.b32.xlu0 %v625, 120
        %v862 = vpop.permute.xlu0 %861
        %v863 = vsel %vm631, %v625, 0
        %v865 = vsel %vm631, %v862, 0
        %867 = vmatprep.subr.mxu0 0.0
        %868 = vmatpush1.xpose.msra.mxu0 %v865
        %869 = vmatprep.subr.mxu0 0.0
        %870 = vmatpush1.xpose.msra.mxu0 0.0
        %871 = vmatprep.subr.mxu0 0.0
        %872 = vmatpush1.xpose.msra.mxu0 0.0
        %873 = vmatprep.subr.mxu0 0.0
        %874 = vmatpush1.xpose.msra.mxu0 0.0
        %875 = vmatprep.subr.mxu0 0.0
        %876 = vmatpush1.xpose.msra.mxu0 0.0
        %877 = vmatprep.subr.mxu0 0.0
        %878 = vmatpush1.xpose.msra.mxu0 0.0
        %879 = vmatprep.subr.mxu0 0.0
        %880 = vmatpush1.xpose.msra.mxu0 0.0
        %881 = vmatprep.subr.mxu0 0.0
        %882 = vmatpush1.xpose.msra.mxu0 0.0
        %883 = vmatprep.subr.mxu0 0.0
        %884 = vmatpush1.xpose.msra.mxu0 0.0
        %885 = vmatprep.subr.mxu0 0.0
        %886 = vmatpush1.xpose.msra.mxu0 0.0
        %887 = vmatprep.subr.mxu0 0.0
        %888 = vmatpush1.xpose.msra.mxu0 0.0
        %889 = vmatprep.subr.mxu0 0.0
        %890 = vmatpush1.xpose.msra.mxu0 0.0
        %891 = vmatprep.subr.mxu0 0.0
        %892 = vmatpush1.xpose.msra.mxu0 0.0
        %893 = vmatprep.subr.mxu0 0.0
        %894 = vmatpush1.xpose.msra.mxu0 0.0
        %895 = vmatprep.subr.mxu0 0.0
        %896 = vmatpush1.xpose.msra.mxu0 0.0
        %897 = vmatprep.subr.mxu0 0.0
        %898 = vmatpush1.xpose.msra.mxu0 0.0
        %899 = vmatprep.subr.mxu0 0.0
        %900 = vmatpush1.xpose.msra.mxu0 0.0
        %901 = vmatprep.subr.mxu0 0.0
        %902 = vmatpush1.xpose.msra.mxu0 0.0
        %903 = vmatprep.subr.mxu0 0.0
        %904 = vmatpush1.xpose.msra.mxu0 0.0
        %905 = vmatprep.subr.mxu0 0.0
        %906 = vmatpush1.xpose.msra.mxu0 0.0
        %907 = vmatprep.subr.mxu0 0.0
        %908 = vmatpush1.xpose.msra.mxu0 0.0
        %909 = vmatprep.subr.mxu0 0.0
        %910 = vmatpush1.xpose.msra.mxu0 0.0
        %911 = vmatprep.subr.mxu0 0.0
        %912 = vmatpush1.xpose.msra.mxu0 0.0
        %913 = vmatprep.subr.mxu0 0.0
        %914 = vmatpush1.xpose.msra.mxu0 0.0
        %915 = vmatprep.subr.mxu0 0.0
        %916 = vmatpush1.xpose.msra.mxu0 0.0
        %917 = vmatprep.subr.mxu0 0.0
        %918 = vmatpush1.xpose.msra.mxu0 0.0
        %919 = vmatprep.subr.mxu0 0.0
        %920 = vmatpush1.xpose.msra.mxu0 0.0
        %921 = vmatprep.subr.mxu0 0.0
        %922 = vmatpush1.xpose.msra.mxu0 0.0
        %923 = vmatprep.subr.mxu0 0.0
        %924 = vmatpush1.xpose.msra.mxu0 0.0
        %925 = vmatprep.subr.mxu0 0.0
        %926 = vmatpush1.xpose.msra.mxu0 0.0
        %927 = vmatprep.subr.mxu0 0.0
        %928 = vmatpush1.xpose.msra.mxu0 0.0
        %929 = vmatprep.subr.mxu0 0.0
        %930 = vmatpush1.xpose.msra.mxu0 0.0
        %931 = vmatprep.mubr.f32.mxu0 0.0
        %932 = vmatmul.mubr.f32.gmra.mrb[0].mxu0 %v863
        %v933 = vpop.f32.mrb[0].mxu0
        %v934 = vadd.f32 0.0, %v933
        %v935 = vpop.f32.mrb[0].mxu0
        %936 = vdwg.mxu0
        %v937 = vsel %vm631, %v703, -inf
        %938 = vmax.xlane.f32.xlu0 %v937
        %v939 = vpop.xlane.xlu0 %938
        %v940 = vsel %vm631, %v780, -inf
        %941 = vmax.xlane.f32.xlu0 %v940
        %v942 = vpop.xlane.xlu0 %941
        %v943 = vsel %vm631, %v857, -inf
        %944 = vmax.xlane.f32.xlu0 %v943
        %v945 = vpop.xlane.xlu0 %944
        %v946 = vsel %vm631, %v934, -inf
        %947 = vmax.xlane.f32.xlu0 %v946
        %v948 = vpop.xlane.xlu0 %947
        %v949 = vsub.f32 %v703, %v939
        %v950 = vsub.f32 %v780, %v942
        %v951 = vsub.f32 %v857, %v945
        %v952 = vsub.f32 %v934, %v948
        %v953 = vmul.f32 %v949, 1.442695
        %v954 = vpow.pop %v953
        %v955 = vmul.f32 %v950, 1.442695
        %v956 = vpow.pop %v955
        %v957 = vmul.f32 %v951, 1.442695
        %v958 = vpow.pop %v957
        %v959 = vmul.f32 %v952, 1.442695
        %v960 = vpow.pop %v959
        %v961 = vsel %vm631, %v954, 0.0
        %962 = vadd.xlane.f32.xlu0 %v961
        %v963 = vpop.xlane.xlu0 %962
        %v964 = vsel %vm631, %v956, 0.0
        %965 = vadd.xlane.f32.xlu0 %v964
        %v966 = vpop.xlane.xlu0 %965
        %v967 = vsel %vm631, %v958, 0.0
        %968 = vadd.xlane.f32.xlu0 %v967
        %v969 = vpop.xlane.xlu0 %968
        %v970 = vsel %vm631, %v960, 0.0
        %971 = vadd.xlane.f32.xlu0 %v970
        %v972 = vpop.xlane.xlu0 %971
        %v973 = vrcp.pop %v963
        %v974 = vrcp.pop %v966
        %v975 = vrcp.pop %v969
        %v976 = vrcp.pop %v972
        %v977 = vmul.f32 %v954, %v973
        %v978 = vmul.f32 %v956, %v974
        %v979 = vmul.f32 %v958, %v975
        %v980 = vmul.f32 %v960, %v976
        %981 = vrot.lane.b32.xlu0 %v415, 112
        %v982 = vpop.permute.xlu0 %981
        %v985 = vsel %vm631, %v977, 0
        %987 = vmatprep.subr.mxu0 0.0
        %988 = vmatpush1.msra.mxu0 %v982
        %989 = vmatprep.subr.mxu0 0.0
        %990 = vmatpush1.msra.mxu0 0.0
        %991 = vmatprep.subr.mxu0 0.0
        %992 = vmatpush1.msra.mxu0 0.0
        %993 = vmatprep.subr.mxu0 0.0
        %994 = vmatpush1.msra.mxu0 0.0
        %995 = vmatprep.subr.mxu0 0.0
        %996 = vmatpush1.msra.mxu0 0.0
        %997 = vmatprep.subr.mxu0 0.0
        %998 = vmatpush1.msra.mxu0 0.0
        %999 = vmatprep.subr.mxu0 0.0
        %1000 = vmatpush1.msra.mxu0 0.0
        %1001 = vmatprep.subr.mxu0 0.0
        %1002 = vmatpush1.msra.mxu0 0.0
        %1003 = vmatprep.subr.mxu0 0.0
        %1004 = vmatpush1.msra.mxu0 0.0
        %1005 = vmatprep.subr.mxu0 0.0
        %1006 = vmatpush1.msra.mxu0 0.0
        %1007 = vmatprep.subr.mxu0 0.0
        %1008 = vmatpush1.msra.mxu0 0.0
        %1009 = vmatprep.subr.mxu0 0.0
        %1010 = vmatpush1.msra.mxu0 0.0
        %1011 = vmatprep.subr.mxu0 0.0
        %1012 = vmatpush1.msra.mxu0 0.0
        %1013 = vmatprep.subr.mxu0 0.0
        %1014 = vmatpush1.msra.mxu0 0.0
        %1015 = vmatprep.subr.mxu0 0.0
        %1016 = vmatpush1.msra.mxu0 0.0
        %1017 = vmatprep.subr.mxu0 0.0
        %1018 = vmatpush1.msra.mxu0 0.0
        %1019 = vmatprep.subr.mxu0 0.0
        %1020 = vmatpush1.msra.mxu0 0.0
        %1021 = vmatprep.subr.mxu0 0.0
        %1022 = vmatpush1.msra.mxu0 0.0
        %1023 = vmatprep.subr.mxu0 0.0
        %1024 = vmatpush1.msra.mxu0 0.0
        %1025 = vmatprep.subr.mxu0 0.0
        %1026 = vmatpush1.msra.mxu0 0.0
        %1027 = vmatprep.subr.mxu0 0.0
        %1028 = vmatpush1.msra.mxu0 0.0
        %1029 = vmatprep.subr.mxu0 0.0
        %1030 = vmatpush1.msra.mxu0 0.0
        %1031 = vmatprep.subr.mxu0 0.0
        %1032 = vmatpush1.msra.mxu0 0.0
        %1033 = vmatprep.subr.mxu0 0.0
        %1034 = vmatpush1.msra.mxu0 0.0
        %1035 = vmatprep.subr.mxu0 0.0
        %1036 = vmatpush1.msra.mxu0 0.0
        %1037 = vmatprep.subr.mxu0 0.0
        %1038 = vmatpush1.msra.mxu0 0.0
        %1039 = vmatprep.subr.mxu0 0.0
        %1040 = vmatpush1.msra.mxu0 0.0
        %1041 = vmatprep.subr.mxu0 0.0
        %1042 = vmatpush1.msra.mxu0 0.0
        %1043 = vmatprep.subr.mxu0 0.0
        %1044 = vmatpush1.msra.mxu0 0.0
        %1045 = vmatprep.subr.mxu0 0.0
        %1046 = vmatpush1.msra.mxu0 0.0
        %1047 = vmatprep.subr.mxu0 0.0
        %1048 = vmatpush1.msra.mxu0 0.0
        %1049 = vmatprep.subr.mxu0 0.0
        %1050 = vmatpush1.msra.mxu0 0.0
        %1051 = vmatprep.mubr.f32.mxu0 0.0
        %1052 = vmatmul.mubr.f32.gmra.mrb[0].mxu0 %v985
        %v1053 = vpop.f32.mrb[0].mxu0
        %v1054 = vadd.f32 0.0, %v1053
        %v1055 = vpop.f32.mrb[0].mxu0
        %1056 = vdwg.mxu0
        %1057 = vrot.lane.b32.xlu0 %v485, 112
        %v1058 = vpop.permute.xlu0 %1057
        %v1061 = vsel %vm631, %v978, 0
        %1063 = vmatprep.subr.mxu0 0.0
        %1064 = vmatpush1.msra.mxu0 %v1058
        %1065 = vmatprep.subr.mxu0 0.0
        %1066 = vmatpush1.msra.mxu0 0.0
        %1067 = vmatprep.subr.mxu0 0.0
        %1068 = vmatpush1.msra.mxu0 0.0
        %1069 = vmatprep.subr.mxu0 0.0
        %1070 = vmatpush1.msra.mxu0 0.0
        %1071 = vmatprep.subr.mxu0 0.0
        %1072 = vmatpush1.msra.mxu0 0.0
        %1073 = vmatprep.subr.mxu0 0.0
        %1074 = vmatpush1.msra.mxu0 0.0
        %1075 = vmatprep.subr.mxu0 0.0
        %1076 = vmatpush1.msra.mxu0 0.0
        %1077 = vmatprep.subr.mxu0 0.0
        %1078 = vmatpush1.msra.mxu0 0.0
        %1079 = vmatprep.subr.mxu0 0.0
        %1080 = vmatpush1.msra.mxu0 0.0
        %1081 = vmatprep.subr.mxu0 0.0
        %1082 = vmatpush1.msra.mxu0 0.0
        %1083 = vmatprep.subr.mxu0 0.0
        %1084 = vmatpush1.msra.mxu0 0.0
        %1085 = vmatprep.subr.mxu0 0.0
        %1086 = vmatpush1.msra.mxu0 0.0
        %1087 = vmatprep.subr.mxu0 0.0
        %1088 = vmatpush1.msra.mxu0 0.0
        %1089 = vmatprep.subr.mxu0 0.0
        %1090 = vmatpush1.msra.mxu0 0.0
        %1091 = vmatprep.subr.mxu0 0.0
        %1092 = vmatpush1.msra.mxu0 0.0
        %1093 = vmatprep.subr.mxu0 0.0
        %1094 = vmatpush1.msra.mxu0 0.0
        %1095 = vmatprep.subr.mxu0 0.0
        %1096 = vmatpush1.msra.mxu0 0.0
        %1097 = vmatprep.subr.mxu0 0.0
        %1098 = vmatpush1.msra.mxu0 0.0
        %1099 = vmatprep.subr.mxu0 0.0
        %1100 = vmatpush1.msra.mxu0 0.0
        %1101 = vmatprep.subr.mxu0 0.0
        %1102 = vmatpush1.msra.mxu0 0.0
        %1103 = vmatprep.subr.mxu0 0.0
        %1104 = vmatpush1.msra.mxu0 0.0
        %1105 = vmatprep.subr.mxu0 0.0
        %1106 = vmatpush1.msra.mxu0 0.0
        %1107 = vmatprep.subr.mxu0 0.0
        %1108 = vmatpush1.msra.mxu0 0.0
        %1109 = vmatprep.subr.mxu0 0.0
        %1110 = vmatpush1.msra.mxu0 0.0
        %1111 = vmatprep.subr.mxu0 0.0
        %1112 = vmatpush1.msra.mxu0 0.0
        %1113 = vmatprep.subr.mxu0 0.0
        %1114 = vmatpush1.msra.mxu0 0.0
        %1115 = vmatprep.subr.mxu0 0.0
        %1116 = vmatpush1.msra.mxu0 0.0
        %1117 = vmatprep.subr.mxu0 0.0
        %1118 = vmatpush1.msra.mxu0 0.0
        %1119 = vmatprep.subr.mxu0 0.0
        %1120 = vmatpush1.msra.mxu0 0.0
        %1121 = vmatprep.subr.mxu0 0.0
        %1122 = vmatpush1.msra.mxu0 0.0
        %1123 = vmatprep.subr.mxu0 0.0
        %1124 = vmatpush1.msra.mxu0 0.0
        %1125 = vmatprep.subr.mxu0 0.0
        %1126 = vmatpush1.msra.mxu0 0.0
        %1127 = vmatprep.mubr.f32.mxu0 0.0
        %1128 = vmatmul.mubr.f32.gmra.mrb[0].mxu0 %v1061
        %v1129 = vpop.f32.mrb[0].mxu0
        %v1130 = vadd.f32 0.0, %v1129
        %v1131 = vpop.f32.mrb[0].mxu0
        %1132 = vdwg.mxu0
        %1133 = vrot.lane.b32.xlu0 %v555, 112
        %v1134 = vpop.permute.xlu0 %1133
        %v1137 = vsel %vm631, %v979, 0
        %1139 = vmatprep.subr.mxu0 0.0
        %1140 = vmatpush1.msra.mxu0 %v1134
        %1141 = vmatprep.subr.mxu0 0.0
        %1142 = vmatpush1.msra.mxu0 0.0
        %1143 = vmatprep.subr.mxu0 0.0
        %1144 = vmatpush1.msra.mxu0 0.0
        %1145 = vmatprep.subr.mxu0 0.0
        %1146 = vmatpush1.msra.mxu0 0.0
        %1147 = vmatprep.subr.mxu0 0.0
        %1148 = vmatpush1.msra.mxu0 0.0
        %1149 = vmatprep.subr.mxu0 0.0
        %1150 = vmatpush1.msra.mxu0 0.0
        %1151 = vmatprep.subr.mxu0 0.0
        %1152 = vmatpush1.msra.mxu0 0.0
        %1153 = vmatprep.subr.mxu0 0.0
        %1154 = vmatpush1.msra.mxu0 0.0
        %1155 = vmatprep.subr.mxu0 0.0
        %1156 = vmatpush1.msra.mxu0 0.0
        %1157 = vmatprep.subr.mxu0 0.0
        %1158 = vmatpush1.msra.mxu0 0.0
        %1159 = vmatprep.subr.mxu0 0.0
        %1160 = vmatpush1.msra.mxu0 0.0
        %1161 = vmatprep.subr.mxu0 0.0
        %1162 = vmatpush1.msra.mxu0 0.0
        %1163 = vmatprep.subr.mxu0 0.0
        %1164 = vmatpush1.msra.mxu0 0.0
        %1165 = vmatprep.subr.mxu0 0.0
        %1166 = vmatpush1.msra.mxu0 0.0
        %1167 = vmatprep.subr.mxu0 0.0
        %1168 = vmatpush1.msra.mxu0 0.0
        %1169 = vmatprep.subr.mxu0 0.0
        %1170 = vmatpush1.msra.mxu0 0.0
        %1171 = vmatprep.subr.mxu0 0.0
        %1172 = vmatpush1.msra.mxu0 0.0
        %1173 = vmatprep.subr.mxu0 0.0
        %1174 = vmatpush1.msra.mxu0 0.0
        %1175 = vmatprep.subr.mxu0 0.0
        %1176 = vmatpush1.msra.mxu0 0.0
        %1177 = vmatprep.subr.mxu0 0.0
        %1178 = vmatpush1.msra.mxu0 0.0
        %1179 = vmatprep.subr.mxu0 0.0
        %1180 = vmatpush1.msra.mxu0 0.0
        %1181 = vmatprep.subr.mxu0 0.0
        %1182 = vmatpush1.msra.mxu0 0.0
        %1183 = vmatprep.subr.mxu0 0.0
        %1184 = vmatpush1.msra.mxu0 0.0
        %1185 = vmatprep.subr.mxu0 0.0
        %1186 = vmatpush1.msra.mxu0 0.0
        %1187 = vmatprep.subr.mxu0 0.0
        %1188 = vmatpush1.msra.mxu0 0.0
        %1189 = vmatprep.subr.mxu0 0.0
        %1190 = vmatpush1.msra.mxu0 0.0
        %1191 = vmatprep.subr.mxu0 0.0
        %1192 = vmatpush1.msra.mxu0 0.0
        %1193 = vmatprep.subr.mxu0 0.0
        %1194 = vmatpush1.msra.mxu0 0.0
        %1195 = vmatprep.subr.mxu0 0.0
        %1196 = vmatpush1.msra.mxu0 0.0
        %1197 = vmatprep.subr.mxu0 0.0
        %1198 = vmatpush1.msra.mxu0 0.0
        %1199 = vmatprep.subr.mxu0 0.0
        %1200 = vmatpush1.msra.mxu0 0.0
        %1201 = vmatprep.subr.mxu0 0.0
        %1202 = vmatpush1.msra.mxu0 0.0
        %1203 = vmatprep.mubr.f32.mxu0 0.0
        %1204 = vmatmul.mubr.f32.gmra.mrb[0].mxu0 %v1137
        %v1205 = vpop.f32.mrb[0].mxu0
        %v1206 = vadd.f32 0.0, %v1205
        %v1207 = vpop.f32.mrb[0].mxu0
        %1208 = vdwg.mxu0
        %1209 = vrot.lane.b32.xlu0 %v625, 112
        %v1210 = vpop.permute.xlu0 %1209
        %v1213 = vsel %vm631, %v980, 0
        %1215 = vmatprep.subr.mxu0 0.0
        %1216 = vmatpush1.msra.mxu0 %v1210
        %1217 = vmatprep.subr.mxu0 0.0
        %1218 = vmatpush1.msra.mxu0 0.0
        %1219 = vmatprep.subr.mxu0 0.0
        %1220 = vmatpush1.msra.mxu0 0.0
        %1221 = vmatprep.subr.mxu0 0.0
        %1222 = vmatpush1.msra.mxu0 0.0
        %1223 = vmatprep.subr.mxu0 0.0
        %1224 = vmatpush1.msra.mxu0 0.0
        %1225 = vmatprep.subr.mxu0 0.0
        %1226 = vmatpush1.msra.mxu0 0.0
        %1227 = vmatprep.subr.mxu0 0.0
        %1228 = vmatpush1.msra.mxu0 0.0
        %1229 = vmatprep.subr.mxu0 0.0
        %1230 = vmatpush1.msra.mxu0 0.0
        %1231 = vmatprep.subr.mxu0 0.0
        %1232 = vmatpush1.msra.mxu0 0.0
        %1233 = vmatprep.subr.mxu0 0.0
        %1234 = vmatpush1.msra.mxu0 0.0
        %1235 = vmatprep.subr.mxu0 0.0
        %1236 = vmatpush1.msra.mxu0 0.0
        %1237 = vmatprep.subr.mxu0 0.0
        %1238 = vmatpush1.msra.mxu0 0.0
        %1239 = vmatprep.subr.mxu0 0.0
        %1240 = vmatpush1.msra.mxu0 0.0
        %1241 = vmatprep.subr.mxu0 0.0
        %1242 = vmatpush1.msra.mxu0 0.0
        %1243 = vmatprep.subr.mxu0 0.0
        %1244 = vmatpush1.msra.mxu0 0.0
        %1245 = vmatprep.subr.mxu0 0.0
        %1246 = vmatpush1.msra.mxu0 0.0
        %1247 = vmatprep.subr.mxu0 0.0
        %1248 = vmatpush1.msra.mxu0 0.0
        %1249 = vmatprep.subr.mxu0 0.0
        %1250 = vmatpush1.msra.mxu0 0.0
        %1251 = vmatprep.subr.mxu0 0.0
        %1252 = vmatpush1.msra.mxu0 0.0
        %1253 = vmatprep.subr.mxu0 0.0
        %1254 = vmatpush1.msra.mxu0 0.0
        %1255 = vmatprep.subr.mxu0 0.0
        %1256 = vmatpush1.msra.mxu0 0.0
        %1257 = vmatprep.subr.mxu0 0.0
        %1258 = vmatpush1.msra.mxu0 0.0
        %1259 = vmatprep.subr.mxu0 0.0
        %1260 = vmatpush1.msra.mxu0 0.0
        %1261 = vmatprep.subr.mxu0 0.0
        %1262 = vmatpush1.msra.mxu0 0.0
        %1263 = vmatprep.subr.mxu0 0.0
        %1264 = vmatpush1.msra.mxu0 0.0
        %1265 = vmatprep.subr.mxu0 0.0
        %1266 = vmatpush1.msra.mxu0 0.0
        %1267 = vmatprep.subr.mxu0 0.0
        %1268 = vmatpush1.msra.mxu0 0.0
        %1269 = vmatprep.subr.mxu0 0.0
        %1270 = vmatpush1.msra.mxu0 0.0
        %1271 = vmatprep.subr.mxu0 0.0
        %1272 = vmatpush1.msra.mxu0 0.0
        %1273 = vmatprep.subr.mxu0 0.0
        %1274 = vmatpush1.msra.mxu0 0.0
        %1275 = vmatprep.subr.mxu0 0.0
        %1276 = vmatpush1.msra.mxu0 0.0
        %1277 = vmatprep.subr.mxu0 0.0
        %1278 = vmatpush1.msra.mxu0 0.0
        %1279 = vmatprep.mubr.f32.mxu0 0.0
        %1280 = vmatmul.mubr.f32.gmra.mrb[0].mxu0 %v1213
        %v1281 = vpop.f32.mrb[0].mxu0
        %v1282 = vadd.f32 0.0, %v1281
        %v1283 = vpop.f32.mrb[0].mxu0
        %1284 = vdwg.mxu0
        %v1286 = vsel %vm631, %v1054, 0
        %1288 = vmatprep.subr.mxu0 0.0
        %1289 = vmatpush1.msra.mxu0 %v295
        %1290 = vmatprep.subr.mxu0 0.0
        %1291 = vmatpush1.msra.mxu0 0.0
        %1292 = vmatprep.subr.mxu0 0.0
        %1293 = vmatpush1.msra.mxu0 0.0
        %1294 = vmatprep.subr.mxu0 0.0
        %1295 = vmatpush1.msra.mxu0 0.0
        %1296 = vmatprep.subr.mxu0 0.0
        %1297 = vmatpush1.msra.mxu0 0.0
        %1298 = vmatprep.subr.mxu0 0.0
        %1299 = vmatpush1.msra.mxu0 0.0
        %1300 = vmatprep.subr.mxu0 0.0
        %1301 = vmatpush1.msra.mxu0 0.0
        %1302 = vmatprep.subr.mxu0 0.0
        %1303 = vmatpush1.msra.mxu0 0.0
        %1304 = vmatprep.subr.mxu0 0.0
        %1305 = vmatpush1.msra.mxu0 0.0
        %1306 = vmatprep.subr.mxu0 0.0
        %1307 = vmatpush1.msra.mxu0 0.0
        %1308 = vmatprep.subr.mxu0 0.0
        %1309 = vmatpush1.msra.mxu0 0.0
        %1310 = vmatprep.subr.mxu0 0.0
        %1311 = vmatpush1.msra.mxu0 0.0
        %1312 = vmatprep.subr.mxu0 0.0
        %1313 = vmatpush1.msra.mxu0 0.0
        %1314 = vmatprep.subr.mxu0 0.0
        %1315 = vmatpush1.msra.mxu0 0.0
        %1316 = vmatprep.subr.mxu0 0.0
        %1317 = vmatpush1.msra.mxu0 0.0
        %1318 = vmatprep.subr.mxu0 0.0
        %1319 = vmatpush1.msra.mxu0 0.0
        %1320 = vmatprep.subr.mxu0 0.0
        %1321 = vmatpush1.msra.mxu0 0.0
        %1322 = vmatprep.subr.mxu0 0.0
        %1323 = vmatpush1.msra.mxu0 0.0
        %1324 = vmatprep.subr.mxu0 0.0
        %1325 = vmatpush1.msra.mxu0 0.0
        %1326 = vmatprep.subr.mxu0 0.0
        %1327 = vmatpush1.msra.mxu0 0.0
        %1328 = vmatprep.subr.mxu0 0.0
        %1329 = vmatpush1.msra.mxu0 0.0
        %1330 = vmatprep.subr.mxu0 0.0
        %1331 = vmatpush1.msra.mxu0 0.0
        %1332 = vmatprep.subr.mxu0 0.0
        %1333 = vmatpush1.msra.mxu0 0.0
        %1334 = vmatprep.subr.mxu0 0.0
        %1335 = vmatpush1.msra.mxu0 0.0
        %1336 = vmatprep.subr.mxu0 0.0
        %1337 = vmatpush1.msra.mxu0 0.0
        %1338 = vmatprep.subr.mxu0 0.0
        %1339 = vmatpush1.msra.mxu0 0.0
        %1340 = vmatprep.subr.mxu0 0.0
        %1341 = vmatpush1.msra.mxu0 0.0
        %1342 = vmatprep.subr.mxu0 0.0
        %1343 = vmatpush1.msra.mxu0 0.0
        %1344 = vmatprep.subr.mxu0 0.0
        %1345 = vmatpush1.msra.mxu0 0.0
        %1346 = vmatprep.subr.mxu0 0.0
        %1347 = vmatpush1.msra.mxu0 0.0
        %1348 = vmatprep.subr.mxu0 0.0
        %1349 = vmatpush1.msra.mxu0 0.0
        %1350 = vmatprep.subr.mxu0 0.0
        %1351 = vmatpush1.msra.mxu0 0.0
        %1352 = vmatprep.mubr.f32.mxu0 0.0
        %1353 = vmatmul.mubr.f32.gmra.mrb[0].mxu0 %v1286
        %v1354 = vpop.f32.mrb[0].mxu0
        %v1355 = vadd.f32 0.0, %v1354
        %v1356 = vpop.f32.mrb[0].mxu0
        %1357 = vdwg.mxu0
        %v1359 = vsel %vm631, %v1130, 0
        %1361 = vmatprep.subr.mxu0 0.0
        %1362 = vmatpush1.msra.mxu0 %v296
        %1363 = vmatprep.subr.mxu0 0.0
        %1364 = vmatpush1.msra.mxu0 0.0
        %1365 = vmatprep.subr.mxu0 0.0
        %1366 = vmatpush1.msra.mxu0 0.0
        %1367 = vmatprep.subr.mxu0 0.0
        %1368 = vmatpush1.msra.mxu0 0.0
        %1369 = vmatprep.subr.mxu0 0.0
        %1370 = vmatpush1.msra.mxu0 0.0
        %1371 = vmatprep.subr.mxu0 0.0
        %1372 = vmatpush1.msra.mxu0 0.0
        %1373 = vmatprep.subr.mxu0 0.0
        %1374 = vmatpush1.msra.mxu0 0.0
        %1375 = vmatprep.subr.mxu0 0.0
        %1376 = vmatpush1.msra.mxu0 0.0
        %1377 = vmatprep.subr.mxu0 0.0
        %1378 = vmatpush1.msra.mxu0 0.0
        %1379 = vmatprep.subr.mxu0 0.0
        %1380 = vmatpush1.msra.mxu0 0.0
        %1381 = vmatprep.subr.mxu0 0.0
        %1382 = vmatpush1.msra.mxu0 0.0
        %1383 = vmatprep.subr.mxu0 0.0
        %1384 = vmatpush1.msra.mxu0 0.0
        %1385 = vmatprep.subr.mxu0 0.0
        %1386 = vmatpush1.msra.mxu0 0.0
        %1387 = vmatprep.subr.mxu0 0.0
        %1388 = vmatpush1.msra.mxu0 0.0
        %1389 = vmatprep.subr.mxu0 0.0
        %1390 = vmatpush1.msra.mxu0 0.0
        %1391 = vmatprep.subr.mxu0 0.0
        %1392 = vmatpush1.msra.mxu0 0.0
        %1393 = vmatprep.subr.mxu0 0.0
        %1394 = vmatpush1.msra.mxu0 0.0
        %1395 = vmatprep.subr.mxu0 0.0
        %1396 = vmatpush1.msra.mxu0 0.0
        %1397 = vmatprep.subr.mxu0 0.0
        %1398 = vmatpush1.msra.mxu0 0.0
        %1399 = vmatprep.subr.mxu0 0.0
        %1400 = vmatpush1.msra.mxu0 0.0
        %1401 = vmatprep.subr.mxu0 0.0
        %1402 = vmatpush1.msra.mxu0 0.0
        %1403 = vmatprep.subr.mxu0 0.0
        %1404 = vmatpush1.msra.mxu0 0.0
        %1405 = vmatprep.subr.mxu0 0.0
        %1406 = vmatpush1.msra.mxu0 0.0
        %1407 = vmatprep.subr.mxu0 0.0
        %1408 = vmatpush1.msra.mxu0 0.0
        %1409 = vmatprep.subr.mxu0 0.0
        %1410 = vmatpush1.msra.mxu0 0.0
        %1411 = vmatprep.subr.mxu0 0.0
        %1412 = vmatpush1.msra.mxu0 0.0
        %1413 = vmatprep.subr.mxu0 0.0
        %1414 = vmatpush1.msra.mxu0 0.0
        %1415 = vmatprep.subr.mxu0 0.0
        %1416 = vmatpush1.msra.mxu0 0.0
        %1417 = vmatprep.subr.mxu0 0.0
        %1418 = vmatpush1.msra.mxu0 0.0
        %1419 = vmatprep.subr.mxu0 0.0
        %1420 = vmatpush1.msra.mxu0 0.0
        %1421 = vmatprep.subr.mxu0 0.0
        %1422 = vmatpush1.msra.mxu0 0.0
        %1423 = vmatprep.subr.mxu0 0.0
        %1424 = vmatpush1.msra.mxu0 0.0
        %1425 = vmatprep.mubr.f32.mxu0 0.0
        %1426 = vmatmul.mubr.f32.gmra.mrb[0].mxu0 %v1359
        %v1427 = vpop.f32.mrb[0].mxu0
        %v1428 = vadd.f32 0.0, %v1427
        %v1429 = vpop.f32.mrb[0].mxu0
        %1430 = vdwg.mxu0
        %v1432 = vsel %vm631, %v1206, 0
        %1434 = vmatprep.subr.mxu0 0.0
        %1435 = vmatpush1.msra.mxu0 %v297
        %1436 = vmatprep.subr.mxu0 0.0
        %1437 = vmatpush1.msra.mxu0 0.0
        %1438 = vmatprep.subr.mxu0 0.0
        %1439 = vmatpush1.msra.mxu0 0.0
        %1440 = vmatprep.subr.mxu0 0.0
        %1441 = vmatpush1.msra.mxu0 0.0
        %1442 = vmatprep.subr.mxu0 0.0
        %1443 = vmatpush1.msra.mxu0 0.0
        %1444 = vmatprep.subr.mxu0 0.0
        %1445 = vmatpush1.msra.mxu0 0.0
        %1446 = vmatprep.subr.mxu0 0.0
        %1447 = vmatpush1.msra.mxu0 0.0
        %1448 = vmatprep.subr.mxu0 0.0
        %1449 = vmatpush1.msra.mxu0 0.0
        %1450 = vmatprep.subr.mxu0 0.0
        %1451 = vmatpush1.msra.mxu0 0.0
        %1452 = vmatprep.subr.mxu0 0.0
        %1453 = vmatpush1.msra.mxu0 0.0
        %1454 = vmatprep.subr.mxu0 0.0
        %1455 = vmatpush1.msra.mxu0 0.0
        %1456 = vmatprep.subr.mxu0 0.0
        %1457 = vmatpush1.msra.mxu0 0.0
        %1458 = vmatprep.subr.mxu0 0.0
        %1459 = vmatpush1.msra.mxu0 0.0
        %1460 = vmatprep.subr.mxu0 0.0
        %1461 = vmatpush1.msra.mxu0 0.0
        %1462 = vmatprep.subr.mxu0 0.0
        %1463 = vmatpush1.msra.mxu0 0.0
        %1464 = vmatprep.subr.mxu0 0.0
        %1465 = vmatpush1.msra.mxu0 0.0
        %1466 = vmatprep.subr.mxu0 0.0
        %1467 = vmatpush1.msra.mxu0 0.0
        %1468 = vmatprep.subr.mxu0 0.0
        %1469 = vmatpush1.msra.mxu0 0.0
        %1470 = vmatprep.subr.mxu0 0.0
        %1471 = vmatpush1.msra.mxu0 0.0
        %1472 = vmatprep.subr.mxu0 0.0
        %1473 = vmatpush1.msra.mxu0 0.0
        %1474 = vmatprep.subr.mxu0 0.0
        %1475 = vmatpush1.msra.mxu0 0.0
        %1476 = vmatprep.subr.mxu0 0.0
        %1477 = vmatpush1.msra.mxu0 0.0
        %1478 = vmatprep.subr.mxu0 0.0
        %1479 = vmatpush1.msra.mxu0 0.0
        %1480 = vmatprep.subr.mxu0 0.0
        %1481 = vmatpush1.msra.mxu0 0.0
        %1482 = vmatprep.subr.mxu0 0.0
        %1483 = vmatpush1.msra.mxu0 0.0
        %1484 = vmatprep.subr.mxu0 0.0
        %1485 = vmatpush1.msra.mxu0 0.0
        %1486 = vmatprep.subr.mxu0 0.0
        %1487 = vmatpush1.msra.mxu0 0.0
        %1488 = vmatprep.subr.mxu0 0.0
        %1489 = vmatpush1.msra.mxu0 0.0
        %1490 = vmatprep.subr.mxu0 0.0
        %1491 = vmatpush1.msra.mxu0 0.0
        %1492 = vmatprep.subr.mxu0 0.0
        %1493 = vmatpush1.msra.mxu0 0.0
        %1494 = vmatprep.subr.mxu0 0.0
        %1495 = vmatpush1.msra.mxu0 0.0
        %1496 = vmatprep.subr.mxu0 0.0
        %1497 = vmatpush1.msra.mxu0 0.0
        %1498 = vmatprep.mubr.f32.mxu0 0.0
        %1499 = vmatmul.mubr.f32.gmra.mrb[0].mxu0 %v1432
        %v1500 = vpop.f32.mrb[0].mxu0
        %v1501 = vadd.f32 0.0, %v1500
        %v1502 = vpop.f32.mrb[0].mxu0
        %1503 = vdwg.mxu0
        %v1505 = vsel %vm631, %v1282, 0
        %1507 = vmatprep.subr.mxu0 0.0
        %1508 = vmatpush1.msra.mxu0 %v298
        %1509 = vmatprep.subr.mxu0 0.0
        %1510 = vmatpush1.msra.mxu0 0.0
        %1511 = vmatprep.subr.mxu0 0.0
        %1512 = vmatpush1.msra.mxu0 0.0
        %1513 = vmatprep.subr.mxu0 0.0
        %1514 = vmatpush1.msra.mxu0 0.0
        %1515 = vmatprep.subr.mxu0 0.0
        %1516 = vmatpush1.msra.mxu0 0.0
        %1517 = vmatprep.subr.mxu0 0.0
        %1518 = vmatpush1.msra.mxu0 0.0
        %1519 = vmatprep.subr.mxu0 0.0
        %1520 = vmatpush1.msra.mxu0 0.0
        %1521 = vmatprep.subr.mxu0 0.0
        %1522 = vmatpush1.msra.mxu0 0.0
        %1523 = vmatprep.subr.mxu0 0.0
        %1524 = vmatpush1.msra.mxu0 0.0
        %1525 = vmatprep.subr.mxu0 0.0
        %1526 = vmatpush1.msra.mxu0 0.0
        %1527 = vmatprep.subr.mxu0 0.0
        %1528 = vmatpush1.msra.mxu0 0.0
        %1529 = vmatprep.subr.mxu0 0.0
        %1530 = vmatpush1.msra.mxu0 0.0
        %1531 = vmatprep.subr.mxu0 0.0
        %1532 = vmatpush1.msra.mxu0 0.0
        %1533 = vmatprep.subr.mxu0 0.0
        %1534 = vmatpush1.msra.mxu0 0.0
        %1535 = vmatprep.subr.mxu0 0.0
        %1536 = vmatpush1.msra.mxu0 0.0
        %1537 = vmatprep.subr.mxu0 0.0
        %1538 = vmatpush1.msra.mxu0 0.0
        %1539 = vmatprep.subr.mxu0 0.0
        %1540 = vmatpush1.msra.mxu0 0.0
        %1541 = vmatprep.subr.mxu0 0.0
        %1542 = vmatpush1.msra.mxu0 0.0
        %1543 = vmatprep.subr.mxu0 0.0
        %1544 = vmatpush1.msra.mxu0 0.0
        %1545 = vmatprep.subr.mxu0 0.0
        %1546 = vmatpush1.msra.mxu0 0.0
        %1547 = vmatprep.subr.mxu0 0.0
        %1548 = vmatpush1.msra.mxu0 0.0
        %1549 = vmatprep.subr.mxu0 0.0
        %1550 = vmatpush1.msra.mxu0 0.0
        %1551 = vmatprep.subr.mxu0 0.0
        %1552 = vmatpush1.msra.mxu0 0.0
        %1553 = vmatprep.subr.mxu0 0.0
        %1554 = vmatpush1.msra.mxu0 0.0
        %1555 = vmatprep.subr.mxu0 0.0
        %1556 = vmatpush1.msra.mxu0 0.0
        %1557 = vmatprep.subr.mxu0 0.0
        %1558 = vmatpush1.msra.mxu0 0.0
        %1559 = vmatprep.subr.mxu0 0.0
        %1560 = vmatpush1.msra.mxu0 0.0
        %1561 = vmatprep.subr.mxu0 0.0
        %1562 = vmatpush1.msra.mxu0 0.0
        %1563 = vmatprep.subr.mxu0 0.0
        %1564 = vmatpush1.msra.mxu0 0.0
        %1565 = vmatprep.subr.mxu0 0.0
        %1566 = vmatpush1.msra.mxu0 0.0
        %1567 = vmatprep.subr.mxu0 0.0
        %1568 = vmatpush1.msra.mxu0 0.0
        %1569 = vmatprep.subr.mxu0 0.0
        %1570 = vmatpush1.msra.mxu0 0.0
        %1571 = vmatprep.mubr.f32.mxu0 0.0
        %1572 = vmatmul.mubr.f32.gmra.mrb[0].mxu0 %v1505
        %v1573 = vpop.f32.mrb[0].mxu0
        %v1574 = vadd.f32 0.0, %v1573
        %v1575 = vpop.f32.mrb[0].mxu0
        %1576 = vdwg.mxu0
        %v1577 = vsel %vm344, %v1355, 0.0
        %v1578 = vsel %vm344, %v1428, 0.0
        %v1579 = vadd.f32 %v1577, %v1578
        %v1580 = vsel %vm344, %v1501, 0.0
        %v1581 = vadd.f32 %v1579, %v1580
        %v1582 = vsel %vm344, %v1574, 0.0
        %v1583 = vadd.f32 %v1581, %v1582
        %v1584 = vlaneseq
        %v1585 = vshrl.u32 %v1584, 7
        %v1586 = vsub.s32 1, %v1585
        %v1587 = vrot.slane %v319, %v1586
        %v1588 = vadd.f32 %v1583, %v1587
        %v1589 = vadd.f32 %v274, %v1588
        %v1590 = vsel %vm344, %v1589, 0.0
        %1591 = vadd.xlane.f32.xlu0 %v1590
        %v1592 = vpop.xlane.xlu0 %1591
        %v1593 = vrcp.pop 32.0
        %v1594 = vmul.f32 %v1592, %v1593
        %v1595 = vsub.f32 %v1589, %v1594
        %v1596 = vmul.f32 %v1595, %v1595
        %v1597 = vsel %vm344, %v1596, 0.0
        %1598 = vadd.xlane.f32.xlu0 %v1597
        %v1599 = vpop.xlane.xlu0 %1598
        %v1600 = vmul.f32 %v1599, %v1593
        %v1601 = vadd.f32 %v1600, 1e-05
        %v1602 = vrsqrt.pop %v1601
        %v1603 = vmul.f32 %v1595, %v1602
        %v1604 = vlaneseq
        %v1605 = vshrl.u32 %v1604, 7
        %v1606 = vsub.s32 2, %v1605
        %v1607 = vrot.slane %v319, %v1606
        %v1608 = vmul.f32 %v1603, %v1607
        %v1609 = vlaneseq
        %v1610 = vshrl.u32 %v1609, 7
        %v1611 = vsub.s32 3, %v1610
        %v1612 = vrot.slane %v319, %v1611
        %v1613 = vadd.f32 %v1608, %v1612
        %v1614 = vlaneseq
        %v1615 = vshrl.u32 %v1614, 7
        %v1616 = vsub.s32 0, %v1615
        %v1617 = vrot.slane %v319, %v1616
        %v1619 = vsel %vm344, %v1613, 0
        %1621 = vmatprep.subr.mxu0 0.0
        %1622 = vmatpush1.msra.mxu0 %v299
        %1623 = vmatprep.subr.mxu0 0.0
        %1624 = vmatpush1.msra.mxu0 %v300
        %1625 = vmatprep.subr.mxu0 0.0
        %1626 = vmatpush1.msra.mxu0 %v301
        %1627 = vmatprep.subr.mxu0 0.0
        %1628 = vmatpush1.msra.mxu0 %v302
        %1629 = vmatprep.subr.mxu0 0.0
        %1630 = vmatpush1.msra.mxu0 0.0
        %1631 = vmatprep.subr.mxu0 0.0
        %1632 = vmatpush1.msra.mxu0 0.0
        %1633 = vmatprep.subr.mxu0 0.0
        %1634 = vmatpush1.msra.mxu0 0.0
        %1635 = vmatprep.subr.mxu0 0.0
        %1636 = vmatpush1.msra.mxu0 0.0
        %1637 = vmatprep.subr.mxu0 0.0
        %1638 = vmatpush1.msra.mxu0 0.0
        %1639 = vmatprep.subr.mxu0 0.0
        %1640 = vmatpush1.msra.mxu0 0.0
        %1641 = vmatprep.subr.mxu0 0.0
        %1642 = vmatpush1.msra.mxu0 0.0
        %1643 = vmatprep.subr.mxu0 0.0
        %1644 = vmatpush1.msra.mxu0 0.0
        %1645 = vmatprep.subr.mxu0 0.0
        %1646 = vmatpush1.msra.mxu0 0.0
        %1647 = vmatprep.subr.mxu0 0.0
        %1648 = vmatpush1.msra.mxu0 0.0
        %1649 = vmatprep.subr.mxu0 0.0
        %1650 = vmatpush1.msra.mxu0 0.0
        %1651 = vmatprep.subr.mxu0 0.0
        %1652 = vmatpush1.msra.mxu0 0.0
        %1653 = vmatprep.subr.mxu0 0.0
        %1654 = vmatpush1.msra.mxu0 0.0
        %1655 = vmatprep.subr.mxu0 0.0
        %1656 = vmatpush1.msra.mxu0 0.0
        %1657 = vmatprep.subr.mxu0 0.0
        %1658 = vmatpush1.msra.mxu0 0.0
        %1659 = vmatprep.subr.mxu0 0.0
        %1660 = vmatpush1.msra.mxu0 0.0
        %1661 = vmatprep.subr.mxu0 0.0
        %1662 = vmatpush1.msra.mxu0 0.0
        %1663 = vmatprep.subr.mxu0 0.0
        %1664 = vmatpush1.msra.mxu0 0.0
        %1665 = vmatprep.subr.mxu0 0.0
        %1666 = vmatpush1.msra.mxu0 0.0
        %1667 = vmatprep.subr.mxu0 0.0
        %1668 = vmatpush1.msra.mxu0 0.0
        %1669 = vmatprep.subr.mxu0 0.0
        %1670 = vmatpush1.msra.mxu0 0.0
        %1671 = vmatprep.subr.mxu0 0.0
        %1672 = vmatpush1.msra.mxu0 0.0
        %1673 = vmatprep.subr.mxu0 0.0
        %1674 = vmatpush1.msra.mxu0 0.0
        %1675 = vmatprep.subr.mxu0 0.0
        %1676 = vmatpush1.msra.mxu0 0.0
        %1677 = vmatprep.subr.mxu0 0.0
        %1678 = vmatpush1.msra.mxu0 0.0
        %1679 = vmatprep.subr.mxu0 0.0
        %1680 = vmatpush1.msra.mxu0 0.0
        %1681 = vmatprep.subr.mxu0 0.0
        %1682 = vmatpush1.msra.mxu0 0.0
        %1683 = vmatprep.subr.mxu0 0.0
        %1684 = vmatpush1.msra.mxu0 0.0
        %1685 = vmatprep.mubr.f32.mxu0 0.0
        %1686 = vmatmul.mubr.f32.gmra.mrb[0].mxu0 %v1619
        %v1687 = vpop.f32.mrb[0].mxu0
        %v1688 = vadd.f32 %v1617, %v1687
        %v1689 = vpop.f32.mrb[0].mxu0
        %1690 = vdwg.mxu0
        %v1691 = vmax.f32 %v1688, 0.0
        %v1692 = vlaneseq
        %v1693 = vshrl.u32 %v1692, 7
        %v1694 = vsub.s32 4, %v1693
        %v1695 = vrot.slane %v319, %v1694
        %1696 = vmatprep.subr.mxu0 0.0
        %1697 = vmatpush1.msra.mxu0 %v303
        %1698 = vmatprep.subr.mxu0 0.0
        %1699 = vmatpush1.msra.mxu0 %v304
        %1700 = vmatprep.subr.mxu0 0.0
        %1701 = vmatpush1.msra.mxu0 %v305
        %1702 = vmatprep.subr.mxu0 0.0
        %1703 = vmatpush1.msra.mxu0 %v306
        %1704 = vmatprep.subr.mxu0 0.0
        %1705 = vmatpush1.msra.mxu0 %v307
        %1706 = vmatprep.subr.mxu0 0.0
        %1707 = vmatpush1.msra.mxu0 %v308
        %1708 = vmatprep.subr.mxu0 0.0
        %1709 = vmatpush1.msra.mxu0 %v309
        %1710 = vmatprep.subr.mxu0 0.0
        %1711 = vmatpush1.msra.mxu0 %v310
        %1712 = vmatprep.subr.mxu0 0.0
        %1713 = vmatpush1.msra.mxu0 %v311
        %1714 = vmatprep.subr.mxu0 0.0
        %1715 = vmatpush1.msra.mxu0 %v312
        %1716 = vmatprep.subr.mxu0 0.0
        %1717 = vmatpush1.msra.mxu0 %v313
        %1718 = vmatprep.subr.mxu0 0.0
        %1719 = vmatpush1.msra.mxu0 %v314
        %1720 = vmatprep.subr.mxu0 0.0
        %1721 = vmatpush1.msra.mxu0 %v315
        %1722 = vmatprep.subr.mxu0 0.0
        %1723 = vmatpush1.msra.mxu0 %v316
        %1724 = vmatprep.subr.mxu0 0.0
        %1725 = vmatpush1.msra.mxu0 %v317
        %1726 = vmatprep.subr.mxu0 0.0
        %1727 = vmatpush1.msra.mxu0 %v318
        %1728 = vmatprep.subr.mxu0 0.0
        %1729 = vmatpush1.msra.mxu0 0.0
        %1730 = vmatprep.subr.mxu0 0.0
        %1731 = vmatpush1.msra.mxu0 0.0
        %1732 = vmatprep.subr.mxu0 0.0
        %1733 = vmatpush1.msra.mxu0 0.0
        %1734 = vmatprep.subr.mxu0 0.0
        %1735 = vmatpush1.msra.mxu0 0.0
        %1736 = vmatprep.subr.mxu0 0.0
        %1737 = vmatpush1.msra.mxu0 0.0
        %1738 = vmatprep.subr.mxu0 0.0
        %1739 = vmatpush1.msra.mxu0 0.0
        %1740 = vmatprep.subr.mxu0 0.0
        %1741 = vmatpush1.msra.mxu0 0.0
        %1742 = vmatprep.subr.mxu0 0.0
        %1743 = vmatpush1.msra.mxu0 0.0
        %1744 = vmatprep.subr.mxu0 0.0
        %1745 = vmatpush1.msra.mxu0 0.0
        %1746 = vmatprep.subr.mxu0 0.0
        %1747 = vmatpush1.msra.mxu0 0.0
        %1748 = vmatprep.subr.mxu0 0.0
        %1749 = vmatpush1.msra.mxu0 0.0
        %1750 = vmatprep.subr.mxu0 0.0
        %1751 = vmatpush1.msra.mxu0 0.0
        %1752 = vmatprep.subr.mxu0 0.0
        %1753 = vmatpush1.msra.mxu0 0.0
        %1754 = vmatprep.subr.mxu0 0.0
        %1755 = vmatpush1.msra.mxu0 0.0
        %1756 = vmatprep.subr.mxu0 0.0
        %1757 = vmatpush1.msra.mxu0 0.0
        %1758 = vmatprep.subr.mxu0 0.0
        %1759 = vmatpush1.msra.mxu0 0.0
        %1760 = vmatprep.mubr.f32.mxu0 0.0
        %1761 = vmatmul.mubr.f32.gmra.mrb[0].mxu0 %v1691
        %v1762 = vpop.f32.mrb[0].mxu0
        %v1763 = vadd.f32 %v1695, %v1762
        %v1764 = vpop.f32.mrb[0].mxu0
        %1765 = vdwg.mxu0
        %v1766 = vadd.f32 %v1613, %v1763
        %v1767 = vsel %vm344, %v1766, 0.0
        %1768 = vadd.xlane.f32.xlu0 %v1767
        %v1769 = vpop.xlane.xlu0 %1768
        %v1770 = vmul.f32 %v1769, %v1593
        %v1771 = vsub.f32 %v1766, %v1770
        %v1772 = vmul.f32 %v1771, %v1771
        %v1773 = vsel %vm344, %v1772, 0.0
        %1774 = vadd.xlane.f32.xlu0 %v1773
        %v1775 = vpop.xlane.xlu0 %1774
        %v1776 = vmul.f32 %v1775, %v1593
        %v1777 = vadd.f32 %v1776, 1e-05
        %v1778 = vrsqrt.pop %v1777
        %v1779 = vmul.f32 %v1771, %v1778
        %v1780 = vlaneseq
        %v1781 = vshrl.u32 %v1780, 7
        %v1782 = vsub.s32 5, %v1781
        %v1783 = vrot.slane %v319, %v1782
        %v1784 = vmul.f32 %v1779, %v1783
        %v1785 = vlaneseq
        %v1786 = vshrl.u32 %v1785, 7
        %v1787 = vsub.s32 6, %v1786
        %v1788 = vrot.slane %v319, %v1787
        %v1789 = vadd.f32 %v1784, %v1788
        %s1790 = scalar_lea.vmem %s1, 128
        %v1791 = vld [vmem:[%s1790] sm:$0xff]
        %v1792 = vld [vmem:[%s1790 + $0x8] sm:$0xff]
        %v1793 = vld [vmem:[%s1790 + $0x10] sm:$0xff]
        %v1794 = vld [vmem:[%s1790 + $0x18] sm:$0xff]
        %v1795 = vld [vmem:[%s1790 + $0x20] sm:$0xff]
        %v1796 = vld [vmem:[%s1790 + $0x28] sm:$0xff]
        %v1797 = vld [vmem:[%s1790 + $0x30] sm:$0xff]
        %v1798 = vld [vmem:[%s1790 + $0x38] sm:$0xff]
        %v1799 = vld [vmem:[%s1790 + $0x40] sm:$0xff]
        %v1800 = vld [vmem:[%s1790 + $0x48] sm:$0xff]
        %v1801 = vld [vmem:[%s1790 + $0x50] sm:$0xff]
        %v1802 = vld [vmem:[%s1790 + $0x58] sm:$0xff]
        %v1803 = vld [vmem:[%s1790 + $0x60] sm:$0xff]
        %v1804 = vld [vmem:[%s1790 + $0x68] sm:$0xff]
        %v1805 = vld [vmem:[%s1790 + $0x70] sm:$0xff]
        %v1806 = vld [vmem:[%s1790 + $0x78] sm:$0xff]
        %s1807 = scalar_lea.vmem %s2, 4
        %v1808 = vld [vmem:[%s1807] sm:$0x1]
        %v1809 = vld [vmem:[%s1807 + $0x1] sm:$0x1]
        %v1810 = vld [vmem:[%s1807 + $0x2] sm:$0x1]
        %v1811 = vld [vmem:[%s1807 + $0x3] sm:$0x1]
        %s1812 = scalar_lea.vmem %s3, 32
        %v1813 = vld [vmem:[%s1812] sm:$0xff]
        %v1814 = vld [vmem:[%s1812 + $0x8] sm:$0xff]
        %v1815 = vld [vmem:[%s1812 + $0x10] sm:$0xff]
        %v1816 = vld [vmem:[%s1812 + $0x18] sm:$0xff]
        %s1817 = scalar_lea.vmem %s4, 32
        %v1818 = vld [vmem:[%s1817] sm:$0xff]
        %v1819 = vld [vmem:[%s1817 + $0x8] sm:$0xff]
        %v1820 = vld [vmem:[%s1817 + $0x10] sm:$0xff]
        %v1821 = vld [vmem:[%s1817 + $0x18] sm:$0xff]
        %s1822 = scalar_lea.vmem %s5, 128
        %v1823 = vld [vmem:[%s1822] sm:$0xff]
        %v1824 = vld [vmem:[%s1822 + $0x8] sm:$0xff]
        %v1825 = vld [vmem:[%s1822 + $0x10] sm:$0xff]
        %v1826 = vld [vmem:[%s1822 + $0x18] sm:$0xff]
        %v1827 = vld [vmem:[%s1822 + $0x20] sm:$0xff]
        %v1828 = vld [vmem:[%s1822 + $0x28] sm:$0xff]
        %v1829 = vld [vmem:[%s1822 + $0x30] sm:$0xff]
        %v1830 = vld [vmem:[%s1822 + $0x38] sm:$0xff]
        %v1831 = vld [vmem:[%s1822 + $0x40] sm:$0xff]
        %v1832 = vld [vmem:[%s1822 + $0x48] sm:$0xff]
        %v1833 = vld [vmem:[%s1822 + $0x50] sm:$0xff]
        %v1834 = vld [vmem:[%s1822 + $0x58] sm:$0xff]
        %v1835 = vld [vmem:[%s1822 + $0x60] sm:$0xff]
        %v1836 = vld [vmem:[%s1822 + $0x68] sm:$0xff]
        %v1837 = vld [vmem:[%s1822 + $0x70] sm:$0xff]
        %v1838 = vld [vmem:[%s1822 + $0x78] sm:$0xff]
        %s1839 = scalar_lea.vmem %s6, 8
        %v1840 = vld [vmem:[%s1839] sm:$0x7f]
        %v1845 = vlaneseq
        %v1846 = vshrl.u32 %v1845, 7
        %v1847 = vsub.s32 0, %v1846
        %v1848 = vrot.slane %v1808, %v1847
        %v1849 = vlaneseq
        %v1850 = vshrl.u32 %v1849, 7
        %v1851 = vsub.s32 0, %v1850
        %v1852 = vrot.slane %v1809, %v1851
        %v1853 = vlaneseq
        %v1854 = vshrl.u32 %v1853, 7
        %v1855 = vsub.s32 0, %v1854
        %v1856 = vrot.slane %v1810, %v1855
        %v1857 = vlaneseq
        %v1858 = vshrl.u32 %v1857, 7
        %v1859 = vsub.s32 0, %v1858
        %v1860 = vrot.slane %v1811, %v1859
        %v1866 = vsel %vm344, %v1789, 0
        %1868 = vmatprep.subr.mxu0 0.0
        %1869 = vmatpush1.msra.mxu0 %v1791
        %1870 = vmatprep.subr.mxu0 0.0
        %1871 = vmatpush1.msra.mxu0 %v1792
        %1872 = vmatprep.subr.mxu0 0.0
        %1873 = vmatpush1.msra.mxu0 %v1793
        %1874 = vmatprep.subr.mxu0 0.0
        %1875 = vmatpush1.msra.mxu0 %v1794
        %1876 = vmatprep.subr.mxu0 0.0
        %1877 = vmatpush1.msra.mxu0 0.0
        %1878 = vmatprep.subr.mxu0 0.0
        %1879 = vmatpush1.msra.mxu0 0.0
        %1880 = vmatprep.subr.mxu0 0.0
        %1881 = vmatpush1.msra.mxu0 0.0
        %1882 = vmatprep.subr.mxu0 0.0
        %1883 = vmatpush1.msra.mxu0 0.0
        %1884 = vmatprep.subr.mxu0 0.0
        %1885 = vmatpush1.msra.mxu0 0.0
        %1886 = vmatprep.subr.mxu0 0.0
        %1887 = vmatpush1.msra.mxu0 0.0
        %1888 = vmatprep.subr.mxu0 0.0
        %1889 = vmatpush1.msra.mxu0 0.0
        %1890 = vmatprep.subr.mxu0 0.0
        %1891 = vmatpush1.msra.mxu0 0.0
        %1892 = vmatprep.subr.mxu0 0.0
        %1893 = vmatpush1.msra.mxu0 0.0
        %1894 = vmatprep.subr.mxu0 0.0
        %1895 = vmatpush1.msra.mxu0 0.0
        %1896 = vmatprep.subr.mxu0 0.0
        %1897 = vmatpush1.msra.mxu0 0.0
        %1898 = vmatprep.subr.mxu0 0.0
        %1899 = vmatpush1.msra.mxu0 0.0
        %1900 = vmatprep.subr.mxu0 0.0
        %1901 = vmatpush1.msra.mxu0 0.0
        %1902 = vmatprep.subr.mxu0 0.0
        %1903 = vmatpush1.msra.mxu0 0.0
        %1904 = vmatprep.subr.mxu0 0.0
        %1905 = vmatpush1.msra.mxu0 0.0
        %1906 = vmatprep.subr.mxu0 0.0
        %1907 = vmatpush1.msra.mxu0 0.0
        %1908 = vmatprep.subr.mxu0 0.0
        %1909 = vmatpush1.msra.mxu0 0.0
        %1910 = vmatprep.subr.mxu0 0.0
        %1911 = vmatpush1.msra.mxu0 0.0
        %1912 = vmatprep.subr.mxu0 0.0
        %1913 = vmatpush1.msra.mxu0 0.0
        %1914 = vmatprep.subr.mxu0 0.0
        %1915 = vmatpush1.msra.mxu0 0.0
        %1916 = vmatprep.subr.mxu0 0.0
        %1917 = vmatpush1.msra.mxu0 0.0
        %1918 = vmatprep.subr.mxu0 0.0
        %1919 = vmatpush1.msra.mxu0 0.0
        %1920 = vmatprep.subr.mxu0 0.0
        %1921 = vmatpush1.msra.mxu0 0.0
        %1922 = vmatprep.subr.mxu0 0.0
        %1923 = vmatpush1.msra.mxu0 0.0
        %1924 = vmatprep.subr.mxu0 0.0
        %1925 = vmatpush1.msra.mxu0 0.0
        %1926 = vmatprep.subr.mxu0 0.0
        %1927 = vmatpush1.msra.mxu0 0.0
        %1928 = vmatprep.subr.mxu0 0.0
        %1929 = vmatpush1.msra.mxu0 0.0
        %1930 = vmatprep.subr.mxu0 0.0
        %1931 = vmatpush1.msra.mxu0 0.0
        %1932 = vmatprep.mubr.f32.mxu0 0.0
        %1933 = vmatmul.mubr.f32.gmra.mrb[0].mxu0 %v1866
        %v1934 = vpop.f32.mrb[0].mxu0
        %v1935 = vadd.f32 %v1848, %v1934
        %v1936 = vpop.f32.mrb[0].mxu0
        %1937 = vdwg.mxu0
        %1938 = vmatprep.subr.mxu0 0.0
        %1939 = vmatpush1.msra.mxu0 %v1795
        %1940 = vmatprep.subr.mxu0 0.0
        %1941 = vmatpush1.msra.mxu0 %v1796
        %1942 = vmatprep.subr.mxu0 0.0
        %1943 = vmatpush1.msra.mxu0 %v1797
        %1944 = vmatprep.subr.mxu0 0.0
        %1945 = vmatpush1.msra.mxu0 %v1798
        %1946 = vmatprep.subr.mxu0 0.0
        %1947 = vmatpush1.msra.mxu0 0.0
        %1948 = vmatprep.subr.mxu0 0.0
        %1949 = vmatpush1.msra.mxu0 0.0
        %1950 = vmatprep.subr.mxu0 0.0
        %1951 = vmatpush1.msra.mxu0 0.0
        %1952 = vmatprep.subr.mxu0 0.0
        %1953 = vmatpush1.msra.mxu0 0.0
        %1954 = vmatprep.subr.mxu0 0.0
        %1955 = vmatpush1.msra.mxu0 0.0
        %1956 = vmatprep.subr.mxu0 0.0
        %1957 = vmatpush1.msra.mxu0 0.0
        %1958 = vmatprep.subr.mxu0 0.0
        %1959 = vmatpush1.msra.mxu0 0.0
        %1960 = vmatprep.subr.mxu0 0.0
        %1961 = vmatpush1.msra.mxu0 0.0
        %1962 = vmatprep.subr.mxu0 0.0
        %1963 = vmatpush1.msra.mxu0 0.0
        %1964 = vmatprep.subr.mxu0 0.0
        %1965 = vmatpush1.msra.mxu0 0.0
        %1966 = vmatprep.subr.mxu0 0.0
        %1967 = vmatpush1.msra.mxu0 0.0
        %1968 = vmatprep.subr.mxu0 0.0
        %1969 = vmatpush1.msra.mxu0 0.0
        %1970 = vmatprep.subr.mxu0 0.0
        %1971 = vmatpush1.msra.mxu0 0.0
        %1972 = vmatprep.subr.mxu0 0.0
        %1973 = vmatpush1.msra.mxu0 0.0
        %1974 = vmatprep.subr.mxu0 0.0
        %1975 = vmatpush1.msra.mxu0 0.0
        %1976 = vmatprep.subr.mxu0 0.0
        %1977 = vmatpush1.msra.mxu0 0.0
        %1978 = vmatprep.subr.mxu0 0.0
        %1979 = vmatpush1.msra.mxu0 0.0
        %1980 = vmatprep.subr.mxu0 0.0
        %1981 = vmatpush1.msra.mxu0 0.0
        %1982 = vmatprep.subr.mxu0 0.0
        %1983 = vmatpush1.msra.mxu0 0.0
        %1984 = vmatprep.subr.mxu0 0.0
        %1985 = vmatpush1.msra.mxu0 0.0
        %1986 = vmatprep.subr.mxu0 0.0
        %1987 = vmatpush1.msra.mxu0 0.0
        %1988 = vmatprep.subr.mxu0 0.0
        %1989 = vmatpush1.msra.mxu0 0.0
        %1990 = vmatprep.subr.mxu0 0.0
        %1991 = vmatpush1.msra.mxu0 0.0
        %1992 = vmatprep.subr.mxu0 0.0
        %1993 = vmatpush1.msra.mxu0 0.0
        %1994 = vmatprep.subr.mxu0 0.0
        %1995 = vmatpush1.msra.mxu0 0.0
        %1996 = vmatprep.subr.mxu0 0.0
        %1997 = vmatpush1.msra.mxu0 0.0
        %1998 = vmatprep.subr.mxu0 0.0
        %1999 = vmatpush1.msra.mxu0 0.0
        %2000 = vmatprep.subr.mxu0 0.0
        %2001 = vmatpush1.msra.mxu0 0.0
        %2002 = vmatprep.mubr.f32.mxu0 0.0
        %2003 = vmatmul.mubr.f32.gmra.mrb[0].mxu0 %v1866
        %v2004 = vpop.f32.mrb[0].mxu0
        %v2005 = vadd.f32 %v1852, %v2004
        %v2006 = vpop.f32.mrb[0].mxu0
        %2007 = vdwg.mxu0
        %2008 = vmatprep.subr.mxu0 0.0
        %2009 = vmatpush1.msra.mxu0 %v1799
        %2010 = vmatprep.subr.mxu0 0.0
        %2011 = vmatpush1.msra.mxu0 %v1800
        %2012 = vmatprep.subr.mxu0 0.0
        %2013 = vmatpush1.msra.mxu0 %v1801
        %2014 = vmatprep.subr.mxu0 0.0
        %2015 = vmatpush1.msra.mxu0 %v1802
        %2016 = vmatprep.subr.mxu0 0.0
        %2017 = vmatpush1.msra.mxu0 0.0
        %2018 = vmatprep.subr.mxu0 0.0
        %2019 = vmatpush1.msra.mxu0 0.0
        %2020 = vmatprep.subr.mxu0 0.0
        %2021 = vmatpush1.msra.mxu0 0.0
        %2022 = vmatprep.subr.mxu0 0.0
        %2023 = vmatpush1.msra.mxu0 0.0
        %2024 = vmatprep.subr.mxu0 0.0
        %2025 = vmatpush1.msra.mxu0 0.0
        %2026 = vmatprep.subr.mxu0 0.0
        %2027 = vmatpush1.msra.mxu0 0.0
        %2028 = vmatprep.subr.mxu0 0.0
        %2029 = vmatpush1.msra.mxu0 0.0
        %2030 = vmatprep.subr.mxu0 0.0
        %2031 = vmatpush1.msra.mxu0 0.0
        %2032 = vmatprep.subr.mxu0 0.0
        %2033 = vmatpush1.msra.mxu0 0.0
        %2034 = vmatprep.subr.mxu0 0.0
        %2035 = vmatpush1.msra.mxu0 0.0
        %2036 = vmatprep.subr.mxu0 0.0
        %2037 = vmatpush1.msra.mxu0 0.0
        %2038 = vmatprep.subr.mxu0 0.0
        %2039 = vmatpush1.msra.mxu0 0.0
        %2040 = vmatprep.subr.mxu0 0.0
        %2041 = vmatpush1.msra.mxu0 0.0
        %2042 = vmatprep.subr.mxu0 0.0
        %2043 = vmatpush1.msra.mxu0 0.0
        %2044 = vmatprep.subr.mxu0 0.0
        %2045 = vmatpush1.msra.mxu0 0.0
        %2046 = vmatprep.subr.mxu0 0.0
        %2047 = vmatpush1.msra.mxu0 0.0
        %2048 = vmatprep.subr.mxu0 0.0
        %2049 = vmatpush1.msra.mxu0 0.0
        %2050 = vmatprep.subr.mxu0 0.0
        %2051 = vmatpush1.msra.mxu0 0.0
        %2052 = vmatprep.subr.mxu0 0.0
        %2053 = vmatpush1.msra.mxu0 0.0
        %2054 = vmatprep.subr.mxu0 0.0
        %2055 = vmatpush1.msra.mxu0 0.0
        %2056 = vmatprep.subr.mxu0 0.0
        %2057 = vmatpush1.msra.mxu0 0.0
        %2058 = vmatprep.subr.mxu0 0.0
        %2059 = vmatpush1.msra.mxu0 0.0
        %2060 = vmatprep.subr.mxu0 0.0
        %2061 = vmatpush1.msra.mxu0 0.0
        %2062 = vmatprep.subr.mxu0 0.0
        %2063 = vmatpush1.msra.mxu0 0.0
        %2064 = vmatprep.subr.mxu0 0.0
        %2065 = vmatpush1.msra.mxu0 0.0
        %2066 = vmatprep.subr.mxu0 0.0
        %2067 = vmatpush1.msra.mxu0 0.0
        %2068 = vmatprep.subr.mxu0 0.0
        %2069 = vmatpush1.msra.mxu0 0.0
        %2070 = vmatprep.subr.mxu0 0.0
        %2071 = vmatpush1.msra.mxu0 0.0
        %2072 = vmatprep.mubr.f32.mxu0 0.0
        %2073 = vmatmul.mubr.f32.gmra.mrb[0].mxu0 %v1866
        %v2074 = vpop.f32.mrb[0].mxu0
        %v2075 = vadd.f32 %v1856, %v2074
        %v2076 = vpop.f32.mrb[0].mxu0
        %2077 = vdwg.mxu0
        %2078 = vmatprep.subr.mxu0 0.0
        %2079 = vmatpush1.msra.mxu0 %v1803
        %2080 = vmatprep.subr.mxu0 0.0
        %2081 = vmatpush1.msra.mxu0 %v1804
        %2082 = vmatprep.subr.mxu0 0.0
        %2083 = vmatpush1.msra.mxu0 %v1805
        %2084 = vmatprep.subr.mxu0 0.0
        %2085 = vmatpush1.msra.mxu0 %v1806
        %2086 = vmatprep.subr.mxu0 0.0
        %2087 = vmatpush1.msra.mxu0 0.0
        %2088 = vmatprep.subr.mxu0 0.0
        %2089 = vmatpush1.msra.mxu0 0.0
        %2090 = vmatprep.subr.mxu0 0.0
        %2091 = vmatpush1.msra.mxu0 0.0
        %2092 = vmatprep.subr.mxu0 0.0
        %2093 = vmatpush1.msra.mxu0 0.0
        %2094 = vmatprep.subr.mxu0 0.0
        %2095 = vmatpush1.msra.mxu0 0.0
        %2096 = vmatprep.subr.mxu0 0.0
        %2097 = vmatpush1.msra.mxu0 0.0
        %2098 = vmatprep.subr.mxu0 0.0
        %2099 = vmatpush1.msra.mxu0 0.0
        %2100 = vmatprep.subr.mxu0 0.0
        %2101 = vmatpush1.msra.mxu0 0.0
        %2102 = vmatprep.subr.mxu0 0.0
        %2103 = vmatpush1.msra.mxu0 0.0
        %2104 = vmatprep.subr.mxu0 0.0
        %2105 = vmatpush1.msra.mxu0 0.0
        %2106 = vmatprep.subr.mxu0 0.0
        %2107 = vmatpush1.msra.mxu0 0.0
        %2108 = vmatprep.subr.mxu0 0.0
        %2109 = vmatpush1.msra.mxu0 0.0
        %2110 = vmatprep.subr.mxu0 0.0
        %2111 = vmatpush1.msra.mxu0 0.0
        %2112 = vmatprep.subr.mxu0 0.0
        %2113 = vmatpush1.msra.mxu0 0.0
        %2114 = vmatprep.subr.mxu0 0.0
        %2115 = vmatpush1.msra.mxu0 0.0
        %2116 = vmatprep.subr.mxu0 0.0
        %2117 = vmatpush1.msra.mxu0 0.0
        %2118 = vmatprep.subr.mxu0 0.0
        %2119 = vmatpush1.msra.mxu0 0.0
        %2120 = vmatprep.subr.mxu0 0.0
        %2121 = vmatpush1.msra.mxu0 0.0
        %2122 = vmatprep.subr.mxu0 0.0
        %2123 = vmatpush1.msra.mxu0 0.0
        %2124 = vmatprep.subr.mxu0 0.0
        %2125 = vmatpush1.msra.mxu0 0.0
        %2126 = vmatprep.subr.mxu0 0.0
        %2127 = vmatpush1.msra.mxu0 0.0
        %2128 = vmatprep.subr.mxu0 0.0
        %2129 = vmatpush1.msra.mxu0 0.0
        %2130 = vmatprep.subr.mxu0 0.0
        %2131 = vmatpush1.msra.mxu0 0.0
        %2132 = vmatprep.subr.mxu0 0.0
        %2133 = vmatpush1.msra.mxu0 0.0
        %2134 = vmatprep.subr.mxu0 0.0
        %2135 = vmatpush1.msra.mxu0 0.0
        %2136 = vmatprep.subr.mxu0 0.0
        %2137 = vmatpush1.msra.mxu0 0.0
        %2138 = vmatprep.subr.mxu0 0.0
        %2139 = vmatpush1.msra.mxu0 0.0
        %2140 = vmatprep.subr.mxu0 0.0
        %2141 = vmatpush1.msra.mxu0 0.0
        %2142 = vmatprep.mubr.f32.mxu0 0.0
        %2143 = vmatmul.mubr.f32.gmra.mrb[0].mxu0 %v1866
        %v2144 = vpop.f32.mrb[0].mxu0
        %v2145 = vadd.f32 %v1860, %v2144
        %v2146 = vpop.f32.mrb[0].mxu0
        %2147 = vdwg.mxu0
        %2149 = vrot.lane.b32.xlu0 %v1935, 120
        %v2150 = vpop.permute.xlu0 %2149
        %v2151 = vsel %vm631, %v1935, 0
        %v2153 = vsel %vm631, %v2150, 0
        %2155 = vmatprep.subr.mxu0 0.0
        %2156 = vmatpush1.xpose.msra.mxu0 %v2153
        %2157 = vmatprep.subr.mxu0 0.0
        %2158 = vmatpush1.xpose.msra.mxu0 0.0
        %2159 = vmatprep.subr.mxu0 0.0
        %2160 = vmatpush1.xpose.msra.mxu0 0.0
        %2161 = vmatprep.subr.mxu0 0.0
        %2162 = vmatpush1.xpose.msra.mxu0 0.0
        %2163 = vmatprep.subr.mxu0 0.0
        %2164 = vmatpush1.xpose.msra.mxu0 0.0
        %2165 = vmatprep.subr.mxu0 0.0
        %2166 = vmatpush1.xpose.msra.mxu0 0.0
        %2167 = vmatprep.subr.mxu0 0.0
        %2168 = vmatpush1.xpose.msra.mxu0 0.0
        %2169 = vmatprep.subr.mxu0 0.0
        %2170 = vmatpush1.xpose.msra.mxu0 0.0
        %2171 = vmatprep.subr.mxu0 0.0
        %2172 = vmatpush1.xpose.msra.mxu0 0.0
        %2173 = vmatprep.subr.mxu0 0.0
        %2174 = vmatpush1.xpose.msra.mxu0 0.0
        %2175 = vmatprep.subr.mxu0 0.0
        %2176 = vmatpush1.xpose.msra.mxu0 0.0
        %2177 = vmatprep.subr.mxu0 0.0
        %2178 = vmatpush1.xpose.msra.mxu0 0.0
        %2179 = vmatprep.subr.mxu0 0.0
        %2180 = vmatpush1.xpose.msra.mxu0 0.0
        %2181 = vmatprep.subr.mxu0 0.0
        %2182 = vmatpush1.xpose.msra.mxu0 0.0
        %2183 = vmatprep.subr.mxu0 0.0
        %2184 = vmatpush1.xpose.msra.mxu0 0.0
        %2185 = vmatprep.subr.mxu0 0.0
        %2186 = vmatpush1.xpose.msra.mxu0 0.0
        %2187 = vmatprep.subr.mxu0 0.0
        %2188 = vmatpush1.xpose.msra.mxu0 0.0
        %2189 = vmatprep.subr.mxu0 0.0
        %2190 = vmatpush1.xpose.msra.mxu0 0.0
        %2191 = vmatprep.subr.mxu0 0.0
        %2192 = vmatpush1.xpose.msra.mxu0 0.0
        %2193 = vmatprep.subr.mxu0 0.0
        %2194 = vmatpush1.xpose.msra.mxu0 0.0
        %2195 = vmatprep.subr.mxu0 0.0
        %2196 = vmatpush1.xpose.msra.mxu0 0.0
        %2197 = vmatprep.subr.mxu0 0.0
        %2198 = vmatpush1.xpose.msra.mxu0 0.0
        %2199 = vmatprep.subr.mxu0 0.0
        %2200 = vmatpush1.xpose.msra.mxu0 0.0
        %2201 = vmatprep.subr.mxu0 0.0
        %2202 = vmatpush1.xpose.msra.mxu0 0.0
        %2203 = vmatprep.subr.mxu0 0.0
        %2204 = vmatpush1.xpose.msra.mxu0 0.0
        %2205 = vmatprep.subr.mxu0 0.0
        %2206 = vmatpush1.xpose.msra.mxu0 0.0
        %2207 = vmatprep.subr.mxu0 0.0
        %2208 = vmatpush1.xpose.msra.mxu0 0.0
        %2209 = vmatprep.subr.mxu0 0.0
        %2210 = vmatpush1.xpose.msra.mxu0 0.0
        %2211 = vmatprep.subr.mxu0 0.0
        %2212 = vmatpush1.xpose.msra.mxu0 0.0
        %2213 = vmatprep.subr.mxu0 0.0
        %2214 = vmatpush1.xpose.msra.mxu0 0.0
        %2215 = vmatprep.subr.mxu0 0.0
        %2216 = vmatpush1.xpose.msra.mxu0 0.0
        %2217 = vmatprep.subr.mxu0 0.0
        %2218 = vmatpush1.xpose.msra.mxu0 0.0
        %2219 = vmatprep.mubr.f32.mxu0 0.0
        %2220 = vmatmul.mubr.f32.gmra.mrb[0].mxu0 %v2151
        %v2221 = vpop.f32.mrb[0].mxu0
        %v2222 = vadd.f32 0.0, %v2221
        %v2223 = vpop.f32.mrb[0].mxu0
        %2224 = vdwg.mxu0
        %2226 = vrot.lane.b32.xlu0 %v2005, 120
        %v2227 = vpop.permute.xlu0 %2226
        %v2228 = vsel %vm631, %v2005, 0
        %v2230 = vsel %vm631, %v2227, 0
        %2232 = vmatprep.subr.mxu0 0.0
        %2233 = vmatpush1.xpose.msra.mxu0 %v2230
        %2234 = vmatprep.subr.mxu0 0.0
        %2235 = vmatpush1.xpose.msra.mxu0 0.0
        %2236 = vmatprep.subr.mxu0 0.0
        %2237 = vmatpush1.xpose.msra.mxu0 0.0
        %2238 = vmatprep.subr.mxu0 0.0
        %2239 = vmatpush1.xpose.msra.mxu0 0.0
        %2240 = vmatprep.subr.mxu0 0.0
        %2241 = vmatpush1.xpose.msra.mxu0 0.0
        %2242 = vmatprep.subr.mxu0 0.0
        %2243 = vmatpush1.xpose.msra.mxu0 0.0
        %2244 = vmatprep.subr.mxu0 0.0
        %2245 = vmatpush1.xpose.msra.mxu0 0.0
        %2246 = vmatprep.subr.mxu0 0.0
        %2247 = vmatpush1.xpose.msra.mxu0 0.0
        %2248 = vmatprep.subr.mxu0 0.0
        %2249 = vmatpush1.xpose.msra.mxu0 0.0
        %2250 = vmatprep.subr.mxu0 0.0
        %2251 = vmatpush1.xpose.msra.mxu0 0.0
        %2252 = vmatprep.subr.mxu0 0.0
        %2253 = vmatpush1.xpose.msra.mxu0 0.0
        %2254 = vmatprep.subr.mxu0 0.0
        %2255 = vmatpush1.xpose.msra.mxu0 0.0
        %2256 = vmatprep.subr.mxu0 0.0
        %2257 = vmatpush1.xpose.msra.mxu0 0.0
        %2258 = vmatprep.subr.mxu0 0.0
        %2259 = vmatpush1.xpose.msra.mxu0 0.0
        %2260 = vmatprep.subr.mxu0 0.0
        %2261 = vmatpush1.xpose.msra.mxu0 0.0
        %2262 = vmatprep.subr.mxu0 0.0
        %2263 = vmatpush1.xpose.msra.mxu0 0.0
        %2264 = vmatprep.subr.mxu0 0.0
        %2265 = vmatpush1.xpose.msra.mxu0 0.0
        %2266 = vmatprep.subr.mxu0 0.0
        %2267 = vmatpush1.xpose.msra.mxu0 0.0
        %2268 = vmatprep.subr.mxu0 0.0
        %2269 = vmatpush1.xpose.msra.mxu0 0.0
        %2270 = vmatprep.subr.mxu0 0.0
        %2271 = vmatpush1.xpose.msra.mxu0 0.0
        %2272 = vmatprep.subr.mxu0 0.0
        %2273 = vmatpush1.xpose.msra.mxu0 0.0
        %2274 = vmatprep.subr.mxu0 0.0
        %2275 = vmatpush1.xpose.msra.mxu0 0.0
        %2276 = vmatprep.subr.mxu0 0.0
        %2277 = vmatpush1.xpose.msra.mxu0 0.0
        %2278 = vmatprep.subr.mxu0 0.0
        %2279 = vmatpush1.xpose.msra.mxu0 0.0
        %2280 = vmatprep.subr.mxu0 0.0
        %2281 = vmatpush1.xpose.msra.mxu0 0.0
        %2282 = vmatprep.subr.mxu0 0.0
        %2283 = vmatpush1.xpose.msra.mxu0 0.0
        %2284 = vmatprep.subr.mxu0 0.0
        %2285 = vmatpush1.xpose.msra.mxu0 0.0
        %2286 = vmatprep.subr.mxu0 0.0
        %2287 = vmatpush1.xpose.msra.mxu0 0.0
        %2288 = vmatprep.subr.mxu0 0.0
        %2289 = vmatpush1.xpose.msra.mxu0 0.0
        %2290 = vmatprep.subr.mxu0 0.0
        %2291 = vmatpush1.xpose.msra.mxu0 0.0
        %2292 = vmatprep.subr.mxu0 0.0
        %2293 = vmatpush1.xpose.msra.mxu0 0.0
        %2294 = vmatprep.subr.mxu0 0.0
        %2295 = vmatpush1.xpose.msra.mxu0 0.0
        %2296 = vmatprep.mubr.f32.mxu0 0.0
        %2297 = vmatmul.mubr.f32.gmra.mrb[0].mxu0 %v2228
        %v2298 = vpop.f32.mrb[0].mxu0
        %v2299 = vadd.f32 0.0, %v2298
        %v2300 = vpop.f32.mrb[0].mxu0
        %2301 = vdwg.mxu0
        %2303 = vrot.lane.b32.xlu0 %v2075, 120
        %v2304 = vpop.permute.xlu0 %2303
        %v2305 = vsel %vm631, %v2075, 0
        %v2307 = vsel %vm631, %v2304, 0
        %2309 = vmatprep.subr.mxu0 0.0
        %2310 = vmatpush1.xpose.msra.mxu0 %v2307
        %2311 = vmatprep.subr.mxu0 0.0
        %2312 = vmatpush1.xpose.msra.mxu0 0.0
        %2313 = vmatprep.subr.mxu0 0.0
        %2314 = vmatpush1.xpose.msra.mxu0 0.0
        %2315 = vmatprep.subr.mxu0 0.0
        %2316 = vmatpush1.xpose.msra.mxu0 0.0
        %2317 = vmatprep.subr.mxu0 0.0
        %2318 = vmatpush1.xpose.msra.mxu0 0.0
        %2319 = vmatprep.subr.mxu0 0.0
        %2320 = vmatpush1.xpose.msra.mxu0 0.0
        %2321 = vmatprep.subr.mxu0 0.0
        %2322 = vmatpush1.xpose.msra.mxu0 0.0
        %2323 = vmatprep.subr.mxu0 0.0
        %2324 = vmatpush1.xpose.msra.mxu0 0.0
        %2325 = vmatprep.subr.mxu0 0.0
        %2326 = vmatpush1.xpose.msra.mxu0 0.0
        %2327 = vmatprep.subr.mxu0 0.0
        %2328 = vmatpush1.xpose.msra.mxu0 0.0
        %2329 = vmatprep.subr.mxu0 0.0
        %2330 = vmatpush1.xpose.msra.mxu0 0.0
        %2331 = vmatprep.subr.mxu0 0.0
        %2332 = vmatpush1.xpose.msra.mxu0 0.0
        %2333 = vmatprep.subr.mxu0 0.0
        %2334 = vmatpush1.xpose.msra.mxu0 0.0
        %2335 = vmatprep.subr.mxu0 0.0
        %2336 = vmatpush1.xpose.msra.mxu0 0.0
        %2337 = vmatprep.subr.mxu0 0.0
        %2338 = vmatpush1.xpose.msra.mxu0 0.0
        %2339 = vmatprep.subr.mxu0 0.0
        %2340 = vmatpush1.xpose.msra.mxu0 0.0
        %2341 = vmatprep.subr.mxu0 0.0
        %2342 = vmatpush1.xpose.msra.mxu0 0.0
        %2343 = vmatprep.subr.mxu0 0.0
        %2344 = vmatpush1.xpose.msra.mxu0 0.0
        %2345 = vmatprep.subr.mxu0 0.0
        %2346 = vmatpush1.xpose.msra.mxu0 0.0
        %2347 = vmatprep.subr.mxu0 0.0
        %2348 = vmatpush1.xpose.msra.mxu0 0.0
        %2349 = vmatprep.subr.mxu0 0.0
        %2350 = vmatpush1.xpose.msra.mxu0 0.0
        %2351 = vmatprep.subr.mxu0 0.0
        %2352 = vmatpush1.xpose.msra.mxu0 0.0
        %2353 = vmatprep.subr.mxu0 0.0
        %2354 = vmatpush1.xpose.msra.mxu0 0.0
        %2355 = vmatprep.subr.mxu0 0.0
        %2356 = vmatpush1.xpose.msra.mxu0 0.0
        %2357 = vmatprep.subr.mxu0 0.0
        %2358 = vmatpush1.xpose.msra.mxu0 0.0
        %2359 = vmatprep.subr.mxu0 0.0
        %2360 = vmatpush1.xpose.msra.mxu0 0.0
        %2361 = vmatprep.subr.mxu0 0.0
        %2362 = vmatpush1.xpose.msra.mxu0 0.0
        %2363 = vmatprep.subr.mxu0 0.0
        %2364 = vmatpush1.xpose.msra.mxu0 0.0
        %2365 = vmatprep.subr.mxu0 0.0
        %2366 = vmatpush1.xpose.msra.mxu0 0.0
        %2367 = vmatprep.subr.mxu0 0.0
        %2368 = vmatpush1.xpose.msra.mxu0 0.0
        %2369 = vmatprep.subr.mxu0 0.0
        %2370 = vmatpush1.xpose.msra.mxu0 0.0
        %2371 = vmatprep.subr.mxu0 0.0
        %2372 = vmatpush1.xpose.msra.mxu0 0.0
        %2373 = vmatprep.mubr.f32.mxu0 0.0
        %2374 = vmatmul.mubr.f32.gmra.mrb[0].mxu0 %v2305
        %v2375 = vpop.f32.mrb[0].mxu0
        %v2376 = vadd.f32 0.0, %v2375
        %v2377 = vpop.f32.mrb[0].mxu0
        %2378 = vdwg.mxu0
        %2380 = vrot.lane.b32.xlu0 %v2145, 120
        %v2381 = vpop.permute.xlu0 %2380
        %v2382 = vsel %vm631, %v2145, 0
        %v2384 = vsel %vm631, %v2381, 0
        %2386 = vmatprep.subr.mxu0 0.0
        %2387 = vmatpush1.xpose.msra.mxu0 %v2384
        %2388 = vmatprep.subr.mxu0 0.0
        %2389 = vmatpush1.xpose.msra.mxu0 0.0
        %2390 = vmatprep.subr.mxu0 0.0
        %2391 = vmatpush1.xpose.msra.mxu0 0.0
        %2392 = vmatprep.subr.mxu0 0.0
        %2393 = vmatpush1.xpose.msra.mxu0 0.0
        %2394 = vmatprep.subr.mxu0 0.0
        %2395 = vmatpush1.xpose.msra.mxu0 0.0
        %2396 = vmatprep.subr.mxu0 0.0
        %2397 = vmatpush1.xpose.msra.mxu0 0.0
        %2398 = vmatprep.subr.mxu0 0.0
        %2399 = vmatpush1.xpose.msra.mxu0 0.0
        %2400 = vmatprep.subr.mxu0 0.0
        %2401 = vmatpush1.xpose.msra.mxu0 0.0
        %2402 = vmatprep.subr.mxu0 0.0
        %2403 = vmatpush1.xpose.msra.mxu0 0.0
        %2404 = vmatprep.subr.mxu0 0.0
        %2405 = vmatpush1.xpose.msra.mxu0 0.0
        %2406 = vmatprep.subr.mxu0 0.0
        %2407 = vmatpush1.xpose.msra.mxu0 0.0
        %2408 = vmatprep.subr.mxu0 0.0
        %2409 = vmatpush1.xpose.msra.mxu0 0.0
        %2410 = vmatprep.subr.mxu0 0.0
        %2411 = vmatpush1.xpose.msra.mxu0 0.0
        %2412 = vmatprep.subr.mxu0 0.0
        %2413 = vmatpush1.xpose.msra.mxu0 0.0
        %2414 = vmatprep.subr.mxu0 0.0
        %2415 = vmatpush1.xpose.msra.mxu0 0.0
        %2416 = vmatprep.subr.mxu0 0.0
        %2417 = vmatpush1.xpose.msra.mxu0 0.0
        %2418 = vmatprep.subr.mxu0 0.0
        %2419 = vmatpush1.xpose.msra.mxu0 0.0
        %2420 = vmatprep.subr.mxu0 0.0
        %2421 = vmatpush1.xpose.msra.mxu0 0.0
        %2422 = vmatprep.subr.mxu0 0.0
        %2423 = vmatpush1.xpose.msra.mxu0 0.0
        %2424 = vmatprep.subr.mxu0 0.0
        %2425 = vmatpush1.xpose.msra.mxu0 0.0
        %2426 = vmatprep.subr.mxu0 0.0
        %2427 = vmatpush1.xpose.msra.mxu0 0.0
        %2428 = vmatprep.subr.mxu0 0.0
        %2429 = vmatpush1.xpose.msra.mxu0 0.0
        %2430 = vmatprep.subr.mxu0 0.0
        %2431 = vmatpush1.xpose.msra.mxu0 0.0
        %2432 = vmatprep.subr.mxu0 0.0
        %2433 = vmatpush1.xpose.msra.mxu0 0.0
        %2434 = vmatprep.subr.mxu0 0.0
        %2435 = vmatpush1.xpose.msra.mxu0 0.0
        %2436 = vmatprep.subr.mxu0 0.0
        %2437 = vmatpush1.xpose.msra.mxu0 0.0
        %2438 = vmatprep.subr.mxu0 0.0
        %2439 = vmatpush1.xpose.msra.mxu0 0.0
        %2440 = vmatprep.subr.mxu0 0.0
        %2441 = vmatpush1.xpose.msra.mxu0 0.0
        %2442 = vmatprep.subr.mxu0 0.0
        %2443 = vmatpush1.xpose.msra.mxu0 0.0
        %2444 = vmatprep.subr.mxu0 0.0
        %2445 = vmatpush1.xpose.msra.mxu0 0.0
        %2446 = vmatprep.subr.mxu0 0.0
        %2447 = vmatpush1.xpose.msra.mxu0 0.0
        %2448 = vmatprep.subr.mxu0 0.0
        %2449 = vmatpush1.xpose.msra.mxu0 0.0
        %2450 = vmatprep.mubr.f32.mxu0 0.0
        %2451 = vmatmul.mubr.f32.gmra.mrb[0].mxu0 %v2382
        %v2452 = vpop.f32.mrb[0].mxu0
        %v2453 = vadd.f32 0.0, %v2452
        %v2454 = vpop.f32.mrb[0].mxu0
        %2455 = vdwg.mxu0
        %v2456 = vsel %vm631, %v2222, -inf
        %2457 = vmax.xlane.f32.xlu0 %v2456
        %v2458 = vpop.xlane.xlu0 %2457
        %v2459 = vsel %vm631, %v2299, -inf
        %2460 = vmax.xlane.f32.xlu0 %v2459
        %v2461 = vpop.xlane.xlu0 %2460
        %v2462 = vsel %vm631, %v2376, -inf
        %2463 = vmax.xlane.f32.xlu0 %v2462
        %v2464 = vpop.xlane.xlu0 %2463
        %v2465 = vsel %vm631, %v2453, -inf
        %2466 = vmax.xlane.f32.xlu0 %v2465
        %v2467 = vpop.xlane.xlu0 %2466
        %v2468 = vsub.f32 %v2222, %v2458
        %v2469 = vsub.f32 %v2299, %v2461
        %v2470 = vsub.f32 %v2376, %v2464
        %v2471 = vsub.f32 %v2453, %v2467
        %v2472 = vmul.f32 %v2468, 1.442695
        %v2473 = vpow.pop %v2472
        %v2474 = vmul.f32 %v2469, 1.442695
        %v2475 = vpow.pop %v2474
        %v2476 = vmul.f32 %v2470, 1.442695
        %v2477 = vpow.pop %v2476
        %v2478 = vmul.f32 %v2471, 1.442695
        %v2479 = vpow.pop %v2478
        %v2480 = vsel %vm631, %v2473, 0.0
        %2481 = vadd.xlane.f32.xlu0 %v2480
        %v2482 = vpop.xlane.xlu0 %2481
        %v2483 = vsel %vm631, %v2475, 0.0
        %2484 = vadd.xlane.f32.xlu0 %v2483
        %v2485 = vpop.xlane.xlu0 %2484
        %v2486 = vsel %vm631, %v2477, 0.0
        %2487 = vadd.xlane.f32.xlu0 %v2486
        %v2488 = vpop.xlane.xlu0 %2487
        %v2489 = vsel %vm631, %v2479, 0.0
        %2490 = vadd.xlane.f32.xlu0 %v2489
        %v2491 = vpop.xlane.xlu0 %2490
        %v2492 = vrcp.pop %v2482
        %v2493 = vrcp.pop %v2485
        %v2494 = vrcp.pop %v2488
        %v2495 = vrcp.pop %v2491
        %v2496 = vmul.f32 %v2473, %v2492
        %v2497 = vmul.f32 %v2475, %v2493
        %v2498 = vmul.f32 %v2477, %v2494
        %v2499 = vmul.f32 %v2479, %v2495
        %2500 = vrot.lane.b32.xlu0 %v1935, 112
        %v2501 = vpop.permute.xlu0 %2500
        %v2504 = vsel %vm631, %v2496, 0
        %2506 = vmatprep.subr.mxu0 0.0
        %2507 = vmatpush1.msra.mxu0 %v2501
        %2508 = vmatprep.subr.mxu0 0.0
        %2509 = vmatpush1.msra.mxu0 0.0
        %2510 = vmatprep.subr.mxu0 0.0
        %2511 = vmatpush1.msra.mxu0 0.0
        %2512 = vmatprep.subr.mxu0 0.0
        %2513 = vmatpush1.msra.mxu0 0.0
        %2514 = vmatprep.subr.mxu0 0.0
        %2515 = vmatpush1.msra.mxu0 0.0
        %2516 = vmatprep.subr.mxu0 0.0
        %2517 = vmatpush1.msra.mxu0 0.0
        %2518 = vmatprep.subr.mxu0 0.0
        %2519 = vmatpush1.msra.mxu0 0.0
        %2520 = vmatprep.subr.mxu0 0.0
        %2521 = vmatpush1.msra.mxu0 0.0
        %2522 = vmatprep.subr.mxu0 0.0
        %2523 = vmatpush1.msra.mxu0 0.0
        %2524 = vmatprep.subr.mxu0 0.0
        %2525 = vmatpush1.msra.mxu0 0.0
        %2526 = vmatprep.subr.mxu0 0.0
        %2527 = vmatpush1.msra.mxu0 0.0
        %2528 = vmatprep.subr.mxu0 0.0
        %2529 = vmatpush1.msra.mxu0 0.0
        %2530 = vmatprep.subr.mxu0 0.0
        %2531 = vmatpush1.msra.mxu0 0.0
        %2532 = vmatprep.subr.mxu0 0.0
        %2533 = vmatpush1.msra.mxu0 0.0
        %2534 = vmatprep.subr.mxu0 0.0
        %2535 = vmatpush1.msra.mxu0 0.0
        %2536 = vmatprep.subr.mxu0 0.0
        %2537 = vmatpush1.msra.mxu0 0.0
        %2538 = vmatprep.subr.mxu0 0.0
        %2539 = vmatpush1.msra.mxu0 0.0
        %2540 = vmatprep.subr.mxu0 0.0
        %2541 = vmatpush1.msra.mxu0 0.0
        %2542 = vmatprep.subr.mxu0 0.0
        %2543 = vmatpush1.msra.mxu0 0.0
        %2544 = vmatprep.subr.mxu0 0.0
        %2545 = vmatpush1.msra.mxu0 0.0
        %2546 = vmatprep.subr.mxu0 0.0
        %2547 = vmatpush1.msra.mxu0 0.0
        %2548 = vmatprep.subr.mxu0 0.0
        %2549 = vmatpush1.msra.mxu0 0.0
        %2550 = vmatprep.subr.mxu0 0.0
        %2551 = vmatpush1.msra.mxu0 0.0
        %2552 = vmatprep.subr.mxu0 0.0
        %2553 = vmatpush1.msra.mxu0 0.0
        %2554 = vmatprep.subr.mxu0 0.0
        %2555 = vmatpush1.msra.mxu0 0.0
        %2556 = vmatprep.subr.mxu0 0.0
        %2557 = vmatpush1.msra.mxu0 0.0
        %2558 = vmatprep.subr.mxu0 0.0
        %2559 = vmatpush1.msra.mxu0 0.0
        %2560 = vmatprep.subr.mxu0 0.0
        %2561 = vmatpush1.msra.mxu0 0.0
        %2562 = vmatprep.subr.mxu0 0.0
        %2563 = vmatpush1.msra.mxu0 0.0
        %2564 = vmatprep.subr.mxu0 0.0
        %2565 = vmatpush1.msra.mxu0 0.0
        %2566 = vmatprep.subr.mxu0 0.0
        %2567 = vmatpush1.msra.mxu0 0.0
        %2568 = vmatprep.subr.mxu0 0.0
        %2569 = vmatpush1.msra.mxu0 0.0
        %2570 = vmatprep.mubr.f32.mxu0 0.0
        %2571 = vmatmul.mubr.f32.gmra.mrb[0].mxu0 %v2504
        %v2572 = vpop.f32.mrb[0].mxu0
        %v2573 = vadd.f32 0.0, %v2572
        %v2574 = vpop.f32.mrb[0].mxu0
        %2575 = vdwg.mxu0
        %2576 = vrot.lane.b32.xlu0 %v2005, 112
        %v2577 = vpop.permute.xlu0 %2576
        %v2580 = vsel %vm631, %v2497, 0
        %2582 = vmatprep.subr.mxu0 0.0
        %2583 = vmatpush1.msra.mxu0 %v2577
        %2584 = vmatprep.subr.mxu0 0.0
        %2585 = vmatpush1.msra.mxu0 0.0
        %2586 = vmatprep.subr.mxu0 0.0
        %2587 = vmatpush1.msra.mxu0 0.0
        %2588 = vmatprep.subr.mxu0 0.0
        %2589 = vmatpush1.msra.mxu0 0.0
        %2590 = vmatprep.subr.mxu0 0.0
        %2591 = vmatpush1.msra.mxu0 0.0
        %2592 = vmatprep.subr.mxu0 0.0
        %2593 = vmatpush1.msra.mxu0 0.0
        %2594 = vmatprep.subr.mxu0 0.0
        %2595 = vmatpush1.msra.mxu0 0.0
        %2596 = vmatprep.subr.mxu0 0.0
        %2597 = vmatpush1.msra.mxu0 0.0
        %2598 = vmatprep.subr.mxu0 0.0
        %2599 = vmatpush1.msra.mxu0 0.0
        %2600 = vmatprep.subr.mxu0 0.0
        %2601 = vmatpush1.msra.mxu0 0.0
        %2602 = vmatprep.subr.mxu0 0.0
        %2603 = vmatpush1.msra.mxu0 0.0
        %2604 = vmatprep.subr.mxu0 0.0
        %2605 = vmatpush1.msra.mxu0 0.0
        %2606 = vmatprep.subr.mxu0 0.0
        %2607 = vmatpush1.msra.mxu0 0.0
        %2608 = vmatprep.subr.mxu0 0.0
        %2609 = vmatpush1.msra.mxu0 0.0
        %2610 = vmatprep.subr.mxu0 0.0
        %2611 = vmatpush1.msra.mxu0 0.0
        %2612 = vmatprep.subr.mxu0 0.0
        %2613 = vmatpush1.msra.mxu0 0.0
        %2614 = vmatprep.subr.mxu0 0.0
        %2615 = vmatpush1.msra.mxu0 0.0
        %2616 = vmatprep.subr.mxu0 0.0
        %2617 = vmatpush1.msra.mxu0 0.0
        %2618 = vmatprep.subr.mxu0 0.0
        %2619 = vmatpush1.msra.mxu0 0.0
        %2620 = vmatprep.subr.mxu0 0.0
        %2621 = vmatpush1.msra.mxu0 0.0
        %2622 = vmatprep.subr.mxu0 0.0
        %2623 = vmatpush1.msra.mxu0 0.0
        %2624 = vmatprep.subr.mxu0 0.0
        %2625 = vmatpush1.msra.mxu0 0.0
        %2626 = vmatprep.subr.mxu0 0.0
        %2627 = vmatpush1.msra.mxu0 0.0
        %2628 = vmatprep.subr.mxu0 0.0
        %2629 = vmatpush1.msra.mxu0 0.0
        %2630 = vmatprep.subr.mxu0 0.0
        %2631 = vmatpush1.msra.mxu0 0.0
        %2632 = vmatprep.subr.mxu0 0.0
        %2633 = vmatpush1.msra.mxu0 0.0
        %2634 = vmatprep.subr.mxu0 0.0
        %2635 = vmatpush1.msra.mxu0 0.0
        %2636 = vmatprep.subr.mxu0 0.0
        %2637 = vmatpush1.msra.mxu0 0.0
        %2638 = vmatprep.subr.mxu0 0.0
        %2639 = vmatpush1.msra.mxu0 0.0
        %2640 = vmatprep.subr.mxu0 0.0
        %2641 = vmatpush1.msra.mxu0 0.0
        %2642 = vmatprep.subr.mxu0 0.0
        %2643 = vmatpush1.msra.mxu0 0.0
        %2644 = vmatprep.subr.mxu0 0.0
        %2645 = vmatpush1.msra.mxu0 0.0
        %2646 = vmatprep.mubr.f32.mxu0 0.0
        %2647 = vmatmul.mubr.f32.gmra.mrb[0].mxu0 %v2580
        %v2648 = vpop.f32.mrb[0].mxu0
        %v2649 = vadd.f32 0.0, %v2648
        %v2650 = vpop.f32.mrb[0].mxu0
        %2651 = vdwg.mxu0
        %2652 = vrot.lane.b32.xlu0 %v2075, 112
        %v2653 = vpop.permute.xlu0 %2652
        %v2656 = vsel %vm631, %v2498, 0
        %2658 = vmatprep.subr.mxu0 0.0
        %2659 = vmatpush1.msra.mxu0 %v2653
        %2660 = vmatprep.subr.mxu0 0.0
        %2661 = vmatpush1.msra.mxu0 0.0
        %2662 = vmatprep.subr.mxu0 0.0
        %2663 = vmatpush1.msra.mxu0 0.0
        %2664 = vmatprep.subr.mxu0 0.0
        %2665 = vmatpush1.msra.mxu0 0.0
        %2666 = vmatprep.subr.mxu0 0.0
        %2667 = vmatpush1.msra.mxu0 0.0
        %2668 = vmatprep.subr.mxu0 0.0
        %2669 = vmatpush1.msra.mxu0 0.0
        %2670 = vmatprep.subr.mxu0 0.0
        %2671 = vmatpush1.msra.mxu0 0.0
        %2672 = vmatprep.subr.mxu0 0.0
        %2673 = vmatpush1.msra.mxu0 0.0
        %2674 = vmatprep.subr.mxu0 0.0
        %2675 = vmatpush1.msra.mxu0 0.0
        %2676 = vmatprep.subr.mxu0 0.0
        %2677 = vmatpush1.msra.mxu0 0.0
        %2678 = vmatprep.subr.mxu0 0.0
        %2679 = vmatpush1.msra.mxu0 0.0
        %2680 = vmatprep.subr.mxu0 0.0
        %2681 = vmatpush1.msra.mxu0 0.0
        %2682 = vmatprep.subr.mxu0 0.0
        %2683 = vmatpush1.msra.mxu0 0.0
        %2684 = vmatprep.subr.mxu0 0.0
        %2685 = vmatpush1.msra.mxu0 0.0
        %2686 = vmatprep.subr.mxu0 0.0
        %2687 = vmatpush1.msra.mxu0 0.0
        %2688 = vmatprep.subr.mxu0 0.0
        %2689 = vmatpush1.msra.mxu0 0.0
        %2690 = vmatprep.subr.mxu0 0.0
        %2691 = vmatpush1.msra.mxu0 0.0
        %2692 = vmatprep.subr.mxu0 0.0
        %2693 = vmatpush1.msra.mxu0 0.0
        %2694 = vmatprep.subr.mxu0 0.0
        %2695 = vmatpush1.msra.mxu0 0.0
        %2696 = vmatprep.subr.mxu0 0.0
        %2697 = vmatpush1.msra.mxu0 0.0
        %2698 = vmatprep.subr.mxu0 0.0
        %2699 = vmatpush1.msra.mxu0 0.0
        %2700 = vmatprep.subr.mxu0 0.0
        %2701 = vmatpush1.msra.mxu0 0.0
        %2702 = vmatprep.subr.mxu0 0.0
        %2703 = vmatpush1.msra.mxu0 0.0
        %2704 = vmatprep.subr.mxu0 0.0
        %2705 = vmatpush1.msra.mxu0 0.0
        %2706 = vmatprep.subr.mxu0 0.0
        %2707 = vmatpush1.msra.mxu0 0.0
        %2708 = vmatprep.subr.mxu0 0.0
        %2709 = vmatpush1.msra.mxu0 0.0
        %2710 = vmatprep.subr.mxu0 0.0
        %2711 = vmatpush1.msra.mxu0 0.0
        %2712 = vmatprep.subr.mxu0 0.0
        %2713 = vmatpush1.msra.mxu0 0.0
        %2714 = vmatprep.subr.mxu0 0.0
        %2715 = vmatpush1.msra.mxu0 0.0
        %2716 = vmatprep.subr.mxu0 0.0
        %2717 = vmatpush1.msra.mxu0 0.0
        %2718 = vmatprep.subr.mxu0 0.0
        %2719 = vmatpush1.msra.mxu0 0.0
        %2720 = vmatprep.subr.mxu0 0.0
        %2721 = vmatpush1.msra.mxu0 0.0
        %2722 = vmatprep.mubr.f32.mxu0 0.0
        %2723 = vmatmul.mubr.f32.gmra.mrb[0].mxu0 %v2656
        %v2724 = vpop.f32.mrb[0].mxu0
        %v2725 = vadd.f32 0.0, %v2724
        %v2726 = vpop.f32.mrb[0].mxu0
        %2727 = vdwg.mxu0
        %2728 = vrot.lane.b32.xlu0 %v2145, 112
        %v2729 = vpop.permute.xlu0 %2728
        %v2732 = vsel %vm631, %v2499, 0
        %2734 = vmatprep.subr.mxu0 0.0
        %2735 = vmatpush1.msra.mxu0 %v2729
        %2736 = vmatprep.subr.mxu0 0.0
        %2737 = vmatpush1.msra.mxu0 0.0
        %2738 = vmatprep.subr.mxu0 0.0
        %2739 = vmatpush1.msra.mxu0 0.0
        %2740 = vmatprep.subr.mxu0 0.0
        %2741 = vmatpush1.msra.mxu0 0.0
        %2742 = vmatprep.subr.mxu0 0.0
        %2743 = vmatpush1.msra.mxu0 0.0
        %2744 = vmatprep.subr.mxu0 0.0
        %2745 = vmatpush1.msra.mxu0 0.0
        %2746 = vmatprep.subr.mxu0 0.0
        %2747 = vmatpush1.msra.mxu0 0.0
        %2748 = vmatprep.subr.mxu0 0.0
        %2749 = vmatpush1.msra.mxu0 0.0
        %2750 = vmatprep.subr.mxu0 0.0
        %2751 = vmatpush1.msra.mxu0 0.0
        %2752 = vmatprep.subr.mxu0 0.0
        %2753 = vmatpush1.msra.mxu0 0.0
        %2754 = vmatprep.subr.mxu0 0.0
        %2755 = vmatpush1.msra.mxu0 0.0
        %2756 = vmatprep.subr.mxu0 0.0
        %2757 = vmatpush1.msra.mxu0 0.0
        %2758 = vmatprep.subr.mxu0 0.0
        %2759 = vmatpush1.msra.mxu0 0.0
        %2760 = vmatprep.subr.mxu0 0.0
        %2761 = vmatpush1.msra.mxu0 0.0
        %2762 = vmatprep.subr.mxu0 0.0
        %2763 = vmatpush1.msra.mxu0 0.0
        %2764 = vmatprep.subr.mxu0 0.0
        %2765 = vmatpush1.msra.mxu0 0.0
        %2766 = vmatprep.subr.mxu0 0.0
        %2767 = vmatpush1.msra.mxu0 0.0
        %2768 = vmatprep.subr.mxu0 0.0
        %2769 = vmatpush1.msra.mxu0 0.0
        %2770 = vmatprep.subr.mxu0 0.0
        %2771 = vmatpush1.msra.mxu0 0.0
        %2772 = vmatprep.subr.mxu0 0.0
        %2773 = vmatpush1.msra.mxu0 0.0
        %2774 = vmatprep.subr.mxu0 0.0
        %2775 = vmatpush1.msra.mxu0 0.0
        %2776 = vmatprep.subr.mxu0 0.0
        %2777 = vmatpush1.msra.mxu0 0.0
        %2778 = vmatprep.subr.mxu0 0.0
        %2779 = vmatpush1.msra.mxu0 0.0
        %2780 = vmatprep.subr.mxu0 0.0
        %2781 = vmatpush1.msra.mxu0 0.0
        %2782 = vmatprep.subr.mxu0 0.0
        %2783 = vmatpush1.msra.mxu0 0.0
        %2784 = vmatprep.subr.mxu0 0.0
        %2785 = vmatpush1.msra.mxu0 0.0
        %2786 = vmatprep.subr.mxu0 0.0
        %2787 = vmatpush1.msra.mxu0 0.0
        %2788 = vmatprep.subr.mxu0 0.0
        %2789 = vmatpush1.msra.mxu0 0.0
        %2790 = vmatprep.subr.mxu0 0.0
        %2791 = vmatpush1.msra.mxu0 0.0
        %2792 = vmatprep.subr.mxu0 0.0
        %2793 = vmatpush1.msra.mxu0 0.0
        %2794 = vmatprep.subr.mxu0 0.0
        %2795 = vmatpush1.msra.mxu0 0.0
        %2796 = vmatprep.subr.mxu0 0.0
        %2797 = vmatpush1.msra.mxu0 0.0
        %2798 = vmatprep.mubr.f32.mxu0 0.0
        %2799 = vmatmul.mubr.f32.gmra.mrb[0].mxu0 %v2732
        %v2800 = vpop.f32.mrb[0].mxu0
        %v2801 = vadd.f32 0.0, %v2800
        %v2802 = vpop.f32.mrb[0].mxu0
        %2803 = vdwg.mxu0
        %v2805 = vsel %vm631, %v2573, 0
        %2807 = vmatprep.subr.mxu0 0.0
        %2808 = vmatpush1.msra.mxu0 %v1813
        %2809 = vmatprep.subr.mxu0 0.0
        %2810 = vmatpush1.msra.mxu0 0.0
        %2811 = vmatprep.subr.mxu0 0.0
        %2812 = vmatpush1.msra.mxu0 0.0
        %2813 = vmatprep.subr.mxu0 0.0
        %2814 = vmatpush1.msra.mxu0 0.0
        %2815 = vmatprep.subr.mxu0 0.0
        %2816 = vmatpush1.msra.mxu0 0.0
        %2817 = vmatprep.subr.mxu0 0.0
        %2818 = vmatpush1.msra.mxu0 0.0
        %2819 = vmatprep.subr.mxu0 0.0
        %2820 = vmatpush1.msra.mxu0 0.0
        %2821 = vmatprep.subr.mxu0 0.0
        %2822 = vmatpush1.msra.mxu0 0.0
        %2823 = vmatprep.subr.mxu0 0.0
        %2824 = vmatpush1.msra.mxu0 0.0
        %2825 = vmatprep.subr.mxu0 0.0
        %2826 = vmatpush1.msra.mxu0 0.0
        %2827 = vmatprep.subr.mxu0 0.0
        %2828 = vmatpush1.msra.mxu0 0.0
        %2829 = vmatprep.subr.mxu0 0.0
        %2830 = vmatpush1.msra.mxu0 0.0
        %2831 = vmatprep.subr.mxu0 0.0
        %2832 = vmatpush1.msra.mxu0 0.0
        %2833 = vmatprep.subr.mxu0 0.0
        %2834 = vmatpush1.msra.mxu0 0.0
        %2835 = vmatprep.subr.mxu0 0.0
        %2836 = vmatpush1.msra.mxu0 0.0
        %2837 = vmatprep.subr.mxu0 0.0
        %2838 = vmatpush1.msra.mxu0 0.0
        %2839 = vmatprep.subr.mxu0 0.0
        %2840 = vmatpush1.msra.mxu0 0.0
        %2841 = vmatprep.subr.mxu0 0.0
        %2842 = vmatpush1.msra.mxu0 0.0
        %2843 = vmatprep.subr.mxu0 0.0
        %2844 = vmatpush1.msra.mxu0 0.0
        %2845 = vmatprep.subr.mxu0 0.0
        %2846 = vmatpush1.msra.mxu0 0.0
        %2847 = vmatprep.subr.mxu0 0.0
        %2848 = vmatpush1.msra.mxu0 0.0
        %2849 = vmatprep.subr.mxu0 0.0
        %2850 = vmatpush1.msra.mxu0 0.0
        %2851 = vmatprep.subr.mxu0 0.0
        %2852 = vmatpush1.msra.mxu0 0.0
        %2853 = vmatprep.subr.mxu0 0.0
        %2854 = vmatpush1.msra.mxu0 0.0
        %2855 = vmatprep.subr.mxu0 0.0
        %2856 = vmatpush1.msra.mxu0 0.0
        %2857 = vmatprep.subr.mxu0 0.0
        %2858 = vmatpush1.msra.mxu0 0.0
        %2859 = vmatprep.subr.mxu0 0.0
        %2860 = vmatpush1.msra.mxu0 0.0
        %2861 = vmatprep.subr.mxu0 0.0
        %2862 = vmatpush1.msra.mxu0 0.0
        %2863 = vmatprep.subr.mxu0 0.0
        %2864 = vmatpush1.msra.mxu0 0.0
        %2865 = vmatprep.subr.mxu0 0.0
        %2866 = vmatpush1.msra.mxu0 0.0
        %2867 = vmatprep.subr.mxu0 0.0
        %2868 = vmatpush1.msra.mxu0 0.0
        %2869 = vmatprep.subr.mxu0 0.0
        %2870 = vmatpush1.msra.mxu0 0.0
        %2871 = vmatprep.mubr.f32.mxu0 0.0
        %2872 = vmatmul.mubr.f32.gmra.mrb[0].mxu0 %v2805
        %v2873 = vpop.f32.mrb[0].mxu0
        %v2874 = vadd.f32 0.0, %v2873
        %v2875 = vpop.f32.mrb[0].mxu0
        %2876 = vdwg.mxu0
        %v2878 = vsel %vm631, %v2649, 0
        %2880 = vmatprep.subr.mxu0 0.0
        %2881 = vmatpush1.msra.mxu0 %v1814
        %2882 = vmatprep.subr.mxu0 0.0
        %2883 = vmatpush1.msra.mxu0 0.0
        %2884 = vmatprep.subr.mxu0 0.0
        %2885 = vmatpush1.msra.mxu0 0.0
        %2886 = vmatprep.subr.mxu0 0.0
        %2887 = vmatpush1.msra.mxu0 0.0
        %2888 = vmatprep.subr.mxu0 0.0
        %2889 = vmatpush1.msra.mxu0 0.0
        %2890 = vmatprep.subr.mxu0 0.0
        %2891 = vmatpush1.msra.mxu0 0.0
        %2892 = vmatprep.subr.mxu0 0.0
        %2893 = vmatpush1.msra.mxu0 0.0
        %2894 = vmatprep.subr.mxu0 0.0
        %2895 = vmatpush1.msra.mxu0 0.0
        %2896 = vmatprep.subr.mxu0 0.0
        %2897 = vmatpush1.msra.mxu0 0.0
        %2898 = vmatprep.subr.mxu0 0.0
        %2899 = vmatpush1.msra.mxu0 0.0
        %2900 = vmatprep.subr.mxu0 0.0
        %2901 = vmatpush1.msra.mxu0 0.0
        %2902 = vmatprep.subr.mxu0 0.0
        %2903 = vmatpush1.msra.mxu0 0.0
        %2904 = vmatprep.subr.mxu0 0.0
        %2905 = vmatpush1.msra.mxu0 0.0
        %2906 = vmatprep.subr.mxu0 0.0
        %2907 = vmatpush1.msra.mxu0 0.0
        %2908 = vmatprep.subr.mxu0 0.0
        %2909 = vmatpush1.msra.mxu0 0.0
        %2910 = vmatprep.subr.mxu0 0.0
        %2911 = vmatpush1.msra.mxu0 0.0
        %2912 = vmatprep.subr.mxu0 0.0
        %2913 = vmatpush1.msra.mxu0 0.0
        %2914 = vmatprep.subr.mxu0 0.0
        %2915 = vmatpush1.msra.mxu0 0.0
        %2916 = vmatprep.subr.mxu0 0.0
        %2917 = vmatpush1.msra.mxu0 0.0
        %2918 = vmatprep.subr.mxu0 0.0
        %2919 = vmatpush1.msra.mxu0 0.0
        %2920 = vmatprep.subr.mxu0 0.0
        %2921 = vmatpush1.msra.mxu0 0.0
        %2922 = vmatprep.subr.mxu0 0.0
        %2923 = vmatpush1.msra.mxu0 0.0
        %2924 = vmatprep.subr.mxu0 0.0
        %2925 = vmatpush1.msra.mxu0 0.0
        %2926 = vmatprep.subr.mxu0 0.0
        %2927 = vmatpush1.msra.mxu0 0.0
        %2928 = vmatprep.subr.mxu0 0.0
        %2929 = vmatpush1.msra.mxu0 0.0
        %2930 = vmatprep.subr.mxu0 0.0
        %2931 = vmatpush1.msra.mxu0 0.0
        %2932 = vmatprep.subr.mxu0 0.0
        %2933 = vmatpush1.msra.mxu0 0.0
        %2934 = vmatprep.subr.mxu0 0.0
        %2935 = vmatpush1.msra.mxu0 0.0
        %2936 = vmatprep.subr.mxu0 0.0
        %2937 = vmatpush1.msra.mxu0 0.0
        %2938 = vmatprep.subr.mxu0 0.0
        %2939 = vmatpush1.msra.mxu0 0.0
        %2940 = vmatprep.subr.mxu0 0.0
        %2941 = vmatpush1.msra.mxu0 0.0
        %2942 = vmatprep.subr.mxu0 0.0
        %2943 = vmatpush1.msra.mxu0 0.0
        %2944 = vmatprep.mubr.f32.mxu0 0.0
        %2945 = vmatmul.mubr.f32.gmra.mrb[0].mxu0 %v2878
        %v2946 = vpop.f32.mrb[0].mxu0
        %v2947 = vadd.f32 0.0, %v2946
        %v2948 = vpop.f32.mrb[0].mxu0
        %2949 = vdwg.mxu0
        %v2951 = vsel %vm631, %v2725, 0
        %2953 = vmatprep.subr.mxu0 0.0
        %2954 = vmatpush1.msra.mxu0 %v1815
        %2955 = vmatprep.subr.mxu0 0.0
        %2956 = vmatpush1.msra.mxu0 0.0
        %2957 = vmatprep.subr.mxu0 0.0
        %2958 = vmatpush1.msra.mxu0 0.0
        %2959 = vmatprep.subr.mxu0 0.0
        %2960 = vmatpush1.msra.mxu0 0.0
        %2961 = vmatprep.subr.mxu0 0.0
        %2962 = vmatpush1.msra.mxu0 0.0
        %2963 = vmatprep.subr.mxu0 0.0
        %2964 = vmatpush1.msra.mxu0 0.0
        %2965 = vmatprep.subr.mxu0 0.0
        %2966 = vmatpush1.msra.mxu0 0.0
        %2967 = vmatprep.subr.mxu0 0.0
        %2968 = vmatpush1.msra.mxu0 0.0
        %2969 = vmatprep.subr.mxu0 0.0
        %2970 = vmatpush1.msra.mxu0 0.0
        %2971 = vmatprep.subr.mxu0 0.0
        %2972 = vmatpush1.msra.mxu0 0.0
        %2973 = vmatprep.subr.mxu0 0.0
        %2974 = vmatpush1.msra.mxu0 0.0
        %2975 = vmatprep.subr.mxu0 0.0
        %2976 = vmatpush1.msra.mxu0 0.0
        %2977 = vmatprep.subr.mxu0 0.0
        %2978 = vmatpush1.msra.mxu0 0.0
        %2979 = vmatprep.subr.mxu0 0.0
        %2980 = vmatpush1.msra.mxu0 0.0
        %2981 = vmatprep.subr.mxu0 0.0
        %2982 = vmatpush1.msra.mxu0 0.0
        %2983 = vmatprep.subr.mxu0 0.0
        %2984 = vmatpush1.msra.mxu0 0.0
        %2985 = vmatprep.subr.mxu0 0.0
        %2986 = vmatpush1.msra.mxu0 0.0
        %2987 = vmatprep.subr.mxu0 0.0
        %2988 = vmatpush1.msra.mxu0 0.0
        %2989 = vmatprep.subr.mxu0 0.0
        %2990 = vmatpush1.msra.mxu0 0.0
        %2991 = vmatprep.subr.mxu0 0.0
        %2992 = vmatpush1.msra.mxu0 0.0
        %2993 = vmatprep.subr.mxu0 0.0
        %2994 = vmatpush1.msra.mxu0 0.0
        %2995 = vmatprep.subr.mxu0 0.0
        %2996 = vmatpush1.msra.mxu0 0.0
        %2997 = vmatprep.subr.mxu0 0.0
        %2998 = vmatpush1.msra.mxu0 0.0
        %2999 = vmatprep.subr.mxu0 0.0
        %3000 = vmatpush1.msra.mxu0 0.0
        %3001 = vmatprep.subr.mxu0 0.0
        %3002 = vmatpush1.msra.mxu0 0.0
        %3003 = vmatprep.subr.mxu0 0.0
        %3004 = vmatpush1.msra.mxu0 0.0
        %3005 = vmatprep.subr.mxu0 0.0
        %3006 = vmatpush1.msra.mxu0 0.0
        %3007 = vmatprep.subr.mxu0 0.0
        %3008 = vmatpush1.msra.mxu0 0.0
        %3009 = vmatprep.subr.mxu0 0.0
        %3010 = vmatpush1.msra.mxu0 0.0
        %3011 = vmatprep.subr.mxu0 0.0
        %3012 = vmatpush1.msra.mxu0 0.0
        %3013 = vmatprep.subr.mxu0 0.0
        %3014 = vmatpush1.msra.mxu0 0.0
        %3015 = vmatprep.subr.mxu0 0.0
        %3016 = vmatpush1.msra.mxu0 0.0
        %3017 = vmatprep.mubr.f32.mxu0 0.0
        %3018 = vmatmul.mubr.f32.gmra.mrb[0].mxu0 %v2951
        %v3019 = vpop.f32.mrb[0].mxu0
        %v3020 = vadd.f32 0.0, %v3019
        %v3021 = vpop.f32.mrb[0].mxu0
        %3022 = vdwg.mxu0
        %v3024 = vsel %vm631, %v2801, 0
        %3026 = vmatprep.subr.mxu0 0.0
        %3027 = vmatpush1.msra.mxu0 %v1816
        %3028 = vmatprep.subr.mxu0 0.0
        %3029 = vmatpush1.msra.mxu0 0.0
        %3030 = vmatprep.subr.mxu0 0.0
        %3031 = vmatpush1.msra.mxu0 0.0
        %3032 = vmatprep.subr.mxu0 0.0
        %3033 = vmatpush1.msra.mxu0 0.0
        %3034 = vmatprep.subr.mxu0 0.0
        %3035 = vmatpush1.msra.mxu0 0.0
        %3036 = vmatprep.subr.mxu0 0.0
        %3037 = vmatpush1.msra.mxu0 0.0
        %3038 = vmatprep.subr.mxu0 0.0
        %3039 = vmatpush1.msra.mxu0 0.0
        %3040 = vmatprep.subr.mxu0 0.0
        %3041 = vmatpush1.msra.mxu0 0.0
        %3042 = vmatprep.subr.mxu0 0.0
        %3043 = vmatpush1.msra.mxu0 0.0
        %3044 = vmatprep.subr.mxu0 0.0
        %3045 = vmatpush1.msra.mxu0 0.0
        %3046 = vmatprep.subr.mxu0 0.0
        %3047 = vmatpush1.msra.mxu0 0.0
        %3048 = vmatprep.subr.mxu0 0.0
        %3049 = vmatpush1.msra.mxu0 0.0
        %3050 = vmatprep.subr.mxu0 0.0
        %3051 = vmatpush1.msra.mxu0 0.0
        %3052 = vmatprep.subr.mxu0 0.0
        %3053 = vmatpush1.msra.mxu0 0.0
        %3054 = vmatprep.subr.mxu0 0.0
        %3055 = vmatpush1.msra.mxu0 0.0
        %3056 = vmatprep.subr.mxu0 0.0
        %3057 = vmatpush1.msra.mxu0 0.0
        %3058 = vmatprep.subr.mxu0 0.0
        %3059 = vmatpush1.msra.mxu0 0.0
        %3060 = vmatprep.subr.mxu0 0.0
        %3061 = vmatpush1.msra.mxu0 0.0
        %3062 = vmatprep.subr.mxu0 0.0
        %3063 = vmatpush1.msra.mxu0 0.0
        %3064 = vmatprep.subr.mxu0 0.0
        %3065 = vmatpush1.msra.mxu0 0.0
        %3066 = vmatprep.subr.mxu0 0.0
        %3067 = vmatpush1.msra.mxu0 0.0
        %3068 = vmatprep.subr.mxu0 0.0
        %3069 = vmatpush1.msra.mxu0 0.0
        %3070 = vmatprep.subr.mxu0 0.0
        %3071 = vmatpush1.msra.mxu0 0.0
        %3072 = vmatprep.subr.mxu0 0.0
        %3073 = vmatpush1.msra.mxu0 0.0
        %3074 = vmatprep.subr.mxu0 0.0
        %3075 = vmatpush1.msra.mxu0 0.0
        %3076 = vmatprep.subr.mxu0 0.0
        %3077 = vmatpush1.msra.mxu0 0.0
        %3078 = vmatprep.subr.mxu0 0.0
        %3079 = vmatpush1.msra.mxu0 0.0
        %3080 = vmatprep.subr.mxu0 0.0
        %3081 = vmatpush1.msra.mxu0 0.0
        %3082 = vmatprep.subr.mxu0 0.0
        %3083 = vmatpush1.msra.mxu0 0.0
        %3084 = vmatprep.subr.mxu0 0.0
        %3085 = vmatpush1.msra.mxu0 0.0
        %3086 = vmatprep.subr.mxu0 0.0
        %3087 = vmatpush1.msra.mxu0 0.0
        %3088 = vmatprep.subr.mxu0 0.0
        %3089 = vmatpush1.msra.mxu0 0.0
        %3090 = vmatprep.mubr.f32.mxu0 0.0
        %3091 = vmatmul.mubr.f32.gmra.mrb[0].mxu0 %v3024
        %v3092 = vpop.f32.mrb[0].mxu0
        %v3093 = vadd.f32 0.0, %v3092
        %v3094 = vpop.f32.mrb[0].mxu0
        %3095 = vdwg.mxu0
        %v3096 = vsel %vm344, %v2874, 0.0
        %v3097 = vsel %vm344, %v2947, 0.0
        %v3098 = vadd.f32 %v3096, %v3097
        %v3099 = vsel %vm344, %v3020, 0.0
        %v3100 = vadd.f32 %v3098, %v3099
        %v3101 = vsel %vm344, %v3093, 0.0
        %v3102 = vadd.f32 %v3100, %v3101
        %v3103 = vlaneseq
        %v3104 = vshrl.u32 %v3103, 7
        %v3105 = vsub.s32 1, %v3104
        %v3106 = vrot.slane %v1840, %v3105
        %v3107 = vadd.f32 %v3102, %v3106
        %v3108 = vadd.f32 %v1789, %v3107
        %v3109 = vsel %vm344, %v3108, 0.0
        %3110 = vadd.xlane.f32.xlu0 %v3109
        %v3111 = vpop.xlane.xlu0 %3110
        %v3112 = vmul.f32 %v3111, %v1593
        %v3113 = vsub.f32 %v3108, %v3112
        %v3114 = vmul.f32 %v3113, %v3113
        %v3115 = vsel %vm344, %v3114, 0.0
        %3116 = vadd.xlane.f32.xlu0 %v3115
        %v3117 = vpop.xlane.xlu0 %3116
        %v3118 = vmul.f32 %v3117, %v1593
        %v3119 = vadd.f32 %v3118, 1e-05
        %v3120 = vrsqrt.pop %v3119
        %v3121 = vmul.f32 %v3113, %v3120
        %v3122 = vlaneseq
        %v3123 = vshrl.u32 %v3122, 7
        %v3124 = vsub.s32 2, %v3123
        %v3125 = vrot.slane %v1840, %v3124
        %v3126 = vmul.f32 %v3121, %v3125
        %v3127 = vlaneseq
        %v3128 = vshrl.u32 %v3127, 7
        %v3129 = vsub.s32 3, %v3128
        %v3130 = vrot.slane %v1840, %v3129
        %v3131 = vadd.f32 %v3126, %v3130
        %v3132 = vlaneseq
        %v3133 = vshrl.u32 %v3132, 7
        %v3134 = vsub.s32 0, %v3133
        %v3135 = vrot.slane %v1840, %v3134
        %v3137 = vsel %vm344, %v3131, 0
        %3139 = vmatprep.subr.mxu0 0.0
        %3140 = vmatpush1.msra.mxu0 %v1818
        %3141 = vmatprep.subr.mxu0 0.0
        %3142 = vmatpush1.msra.mxu0 %v1819
        %3143 = vmatprep.subr.mxu0 0.0
        %3144 = vmatpush1.msra.mxu0 %v1820
        %3145 = vmatprep.subr.mxu0 0.0
        %3146 = vmatpush1.msra.mxu0 %v1821
        %3147 = vmatprep.subr.mxu0 0.0
        %3148 = vmatpush1.msra.mxu0 0.0
        %3149 = vmatprep.subr.mxu0 0.0
        %3150 = vmatpush1.msra.mxu0 0.0
        %3151 = vmatprep.subr.mxu0 0.0
        %3152 = vmatpush1.msra.mxu0 0.0
        %3153 = vmatprep.subr.mxu0 0.0
        %3154 = vmatpush1.msra.mxu0 0.0
        %3155 = vmatprep.subr.mxu0 0.0
        %3156 = vmatpush1.msra.mxu0 0.0
        %3157 = vmatprep.subr.mxu0 0.0
        %3158 = vmatpush1.msra.mxu0 0.0
        %3159 = vmatprep.subr.mxu0 0.0
        %3160 = vmatpush1.msra.mxu0 0.0
        %3161 = vmatprep.subr.mxu0 0.0
        %3162 = vmatpush1.msra.mxu0 0.0
        %3163 = vmatprep.subr.mxu0 0.0
        %3164 = vmatpush1.msra.mxu0 0.0
        %3165 = vmatprep.subr.mxu0 0.0
        %3166 = vmatpush1.msra.mxu0 0.0
        %3167 = vmatprep.subr.mxu0 0.0
        %3168 = vmatpush1.msra.mxu0 0.0
        %3169 = vmatprep.subr.mxu0 0.0
        %3170 = vmatpush1.msra.mxu0 0.0
        %3171 = vmatprep.subr.mxu0 0.0
        %3172 = vmatpush1.msra.mxu0 0.0
        %3173 = vmatprep.subr.mxu0 0.0
        %3174 = vmatpush1.msra.mxu0 0.0
        %3175 = vmatprep.subr.mxu0 0.0
        %3176 = vmatpush1.msra.mxu0 0.0
        %3177 = vmatprep.subr.mxu0 0.0
        %3178 = vmatpush1.msra.mxu0 0.0
        %3179 = vmatprep.subr.mxu0 0.0
        %3180 = vmatpush1.msra.mxu0 0.0
        %3181 = vmatprep.subr.mxu0 0.0
        %3182 = vmatpush1.msra.mxu0 0.0
        %3183 = vmatprep.subr.mxu0 0.0
        %3184 = vmatpush1.msra.mxu0 0.0
        %3185 = vmatprep.subr.mxu0 0.0
        %3186 = vmatpush1.msra.mxu0 0.0
        %3187 = vmatprep.subr.mxu0 0.0
        %3188 = vmatpush1.msra.mxu0 0.0
        %3189 = vmatprep.subr.mxu0 0.0
        %3190 = vmatpush1.msra.mxu0 0.0
        %3191 = vmatprep.subr.mxu0 0.0
        %3192 = vmatpush1.msra.mxu0 0.0
        %3193 = vmatprep.subr.mxu0 0.0
        %3194 = vmatpush1.msra.mxu0 0.0
        %3195 = vmatprep.subr.mxu0 0.0
        %3196 = vmatpush1.msra.mxu0 0.0
        %3197 = vmatprep.subr.mxu0 0.0
        %3198 = vmatpush1.msra.mxu0 0.0
        %3199 = vmatprep.subr.mxu0 0.0
        %3200 = vmatpush1.msra.mxu0 0.0
        %3201 = vmatprep.subr.mxu0 0.0
        %3202 = vmatpush1.msra.mxu0 0.0
        %3203 = vmatprep.mubr.f32.mxu0 0.0
        %3204 = vmatmul.mubr.f32.gmra.mrb[0].mxu0 %v3137
        %v3205 = vpop.f32.mrb[0].mxu0
        %v3206 = vadd.f32 %v3135, %v3205
        %v3207 = vpop.f32.mrb[0].mxu0
        %3208 = vdwg.mxu0
        %v3209 = vmax.f32 %v3206, 0.0
        %v3210 = vlaneseq
        %v3211 = vshrl.u32 %v3210, 7
        %v3212 = vsub.s32 4, %v3211
        %v3213 = vrot.slane %v1840, %v3212
        %3214 = vmatprep.subr.mxu0 0.0
        %3215 = vmatpush1.msra.mxu0 %v1823
        %3216 = vmatprep.subr.mxu0 0.0
        %3217 = vmatpush1.msra.mxu0 %v1824
        %3218 = vmatprep.subr.mxu0 0.0
        %3219 = vmatpush1.msra.mxu0 %v1825
        %3220 = vmatprep.subr.mxu0 0.0
        %3221 = vmatpush1.msra.mxu0 %v1826
        %3222 = vmatprep.subr.mxu0 0.0
        %3223 = vmatpush1.msra.mxu0 %v1827
        %3224 = vmatprep.subr.mxu0 0.0
        %3225 = vmatpush1.msra.mxu0 %v1828
        %3226 = vmatprep.subr.mxu0 0.0
        %3227 = vmatpush1.msra.mxu0 %v1829
        %3228 = vmatprep.subr.mxu0 0.0
        %3229 = vmatpush1.msra.mxu0 %v1830
        %3230 = vmatprep.subr.mxu0 0.0
        %3231 = vmatpush1.msra.mxu0 %v1831
        %3232 = vmatprep.subr.mxu0 0.0
        %3233 = vmatpush1.msra.mxu0 %v1832
        %3234 = vmatprep.subr.mxu0 0.0
        %3235 = vmatpush1.msra.mxu0 %v1833
        %3236 = vmatprep.subr.mxu0 0.0
        %3237 = vmatpush1.msra.mxu0 %v1834
        %3238 = vmatprep.subr.mxu0 0.0
        %3239 = vmatpush1.msra.mxu0 %v1835
        %3240 = vmatprep.subr.mxu0 0.0
        %3241 = vmatpush1.msra.mxu0 %v1836
        %3242 = vmatprep.subr.mxu0 0.0
        %3243 = vmatpush1.msra.mxu0 %v1837
        %3244 = vmatprep.subr.mxu0 0.0
        %3245 = vmatpush1.msra.mxu0 %v1838
        %3246 = vmatprep.subr.mxu0 0.0
        %3247 = vmatpush1.msra.mxu0 0.0
        %3248 = vmatprep.subr.mxu0 0.0
        %3249 = vmatpush1.msra.mxu0 0.0
        %3250 = vmatprep.subr.mxu0 0.0
        %3251 = vmatpush1.msra.mxu0 0.0
        %3252 = vmatprep.subr.mxu0 0.0
        %3253 = vmatpush1.msra.mxu0 0.0
        %3254 = vmatprep.subr.mxu0 0.0
        %3255 = vmatpush1.msra.mxu0 0.0
        %3256 = vmatprep.subr.mxu0 0.0
        %3257 = vmatpush1.msra.mxu0 0.0
        %3258 = vmatprep.subr.mxu0 0.0
        %3259 = vmatpush1.msra.mxu0 0.0
        %3260 = vmatprep.subr.mxu0 0.0
        %3261 = vmatpush1.msra.mxu0 0.0
        %3262 = vmatprep.subr.mxu0 0.0
        %3263 = vmatpush1.msra.mxu0 0.0
        %3264 = vmatprep.subr.mxu0 0.0
        %3265 = vmatpush1.msra.mxu0 0.0
        %3266 = vmatprep.subr.mxu0 0.0
        %3267 = vmatpush1.msra.mxu0 0.0
        %3268 = vmatprep.subr.mxu0 0.0
        %3269 = vmatpush1.msra.mxu0 0.0
        %3270 = vmatprep.subr.mxu0 0.0
        %3271 = vmatpush1.msra.mxu0 0.0
        %3272 = vmatprep.subr.mxu0 0.0
        %3273 = vmatpush1.msra.mxu0 0.0
        %3274 = vmatprep.subr.mxu0 0.0
        %3275 = vmatpush1.msra.mxu0 0.0
        %3276 = vmatprep.subr.mxu0 0.0
        %3277 = vmatpush1.msra.mxu0 0.0
        %3278 = vmatprep.mubr.f32.mxu0 0.0
        %3279 = vmatmul.mubr.f32.gmra.mrb[0].mxu0 %v3209
        %v3280 = vpop.f32.mrb[0].mxu0
        %v3281 = vadd.f32 %v3213, %v3280
        %v3282 = vpop.f32.mrb[0].mxu0
        %3283 = vdwg.mxu0
        %v3284 = vadd.f32 %v3131, %v3281
        %v3285 = vsel %vm344, %v3284, 0.0
        %3286 = vadd.xlane.f32.xlu0 %v3285
        %v3287 = vpop.xlane.xlu0 %3286
        %v3288 = vmul.f32 %v3287, %v1593
        %v3289 = vsub.f32 %v3284, %v3288
        %v3290 = vmul.f32 %v3289, %v3289
        %v3291 = vsel %vm344, %v3290, 0.0
        %3292 = vadd.xlane.f32.xlu0 %v3291
        %v3293 = vpop.xlane.xlu0 %3292
        %v3294 = vmul.f32 %v3293, %v1593
        %v3295 = vadd.f32 %v3294, 1e-05
        %v3296 = vrsqrt.pop %v3295
        %v3297 = vmul.f32 %v3289, %v3296
        %v3298 = vlaneseq
        %v3299 = vshrl.u32 %v3298, 7
        %v3300 = vsub.s32 5, %v3299
        %v3301 = vrot.slane %v1840, %v3300
        %v3302 = vmul.f32 %v3297, %v3301
        %v3303 = vlaneseq
        %v3304 = vshrl.u32 %v3303, 7
        %v3305 = vsub.s32 6, %v3304
        %v3306 = vrot.slane %v1840, %v3305
        %v3307 = vadd.f32 %v3302, %v3306
        %3308 = vst.msk [vmem:[%s269] sm:$0xff] %vm344, %v3307
        %s3309 = sand.u32 %s181, 1
        %s3310 = scalar_lea.sflag [#allocation3], %s3309
        %s3311 = sand.u32 %s181, 1
        %s3312 = smul.addr %s3311, 8
        %s3313 = scalar_lea.vmem [#allocation2], %s3312
        // Predicated region
        $region49: #{tpu_custom_call.1} parent=47 // pred_check
          %p3314 = pneg %p191
        $region50: #{tpu_custom_call.1} parent=47 // pred_check_branch
          %3316 = sbr.rel (%p3314) target = $region52
        $region51: #{tpu_custom_call.1} parent=47 // pred_region
          %s3318 = ssub.s32 128, 128
          %3319 = vsyncadd %s3310, %s3318
          %s3320 = smul.addr %s21, 128
          %s3321 = scalar_lea.hbm %s7, %s3320
          %s3323 = sshll.u32 %s3313, 4
          %s3324 = int_to_ptr.vmem [resolvable:$true] %s3323
          %3326 = dma.vmem_to_hbm [thread:$0]  %s3324, 128, %s3321, %s3310
        $region52: #{tpu_custom_call.1} parent=47 // pred_fallthru
          _
      $region48: #{tpu_custom_call.1} parent=5 // pred_fallthru
        _
      %p3327 = scmp.le.s32.totalorder 2, %s16
      // Predicated region
      $region53: #{tpu_custom_call.1} parent=5 // pred_check
        %p3328 = pneg %p3327
      $region54: #{tpu_custom_call.1} parent=5 // pred_check_branch
        %3330 = sbr.rel (%p3328) target = $region56
      $region55: #{tpu_custom_call.1} parent=5 // pred_region
        %s3331 = ssub.s32 %s16, 2
        // Predicated region
        $region57: #{tpu_custom_call.1} parent=55 // pred_check
          %p3332 = pneg %p197
        $region58: #{tpu_custom_call.1} parent=55 // pred_check_branch
          %3334 = sbr.rel (%p3332) target = $region60
        $region59: #{tpu_custom_call.1} parent=55 // pred_region
          %s3335 = sand.u32 %s182, 1
          %s3336 = scalar_lea.sflag [#allocation3], %s3335
          %s3337 = sand.u32 %s182, 1
          %s3338 = smul.addr %s3337, 8
          %s3339 = scalar_lea.vmem [#allocation2], %s3338
          %3340 = dma.done %s3336, 128
        $region60: #{tpu_custom_call.1} parent=55 // pred_fallthru
          _
      $region56: #{tpu_custom_call.1} parent=5 // pred_fallthru
        _
    $region6: #{tpu_custom_call.1} parent=1 // loop_footer
      %s20 = sadd.s32 1, %s16
    $region7: #{tpu_custom_call.1} parent=1 // loop_footer_branch
      %15 = sbr.rel target = $region3
    $region8: #{tpu_custom_call.1} parent=1 // loop_exit
      _
    %3341 = vsyncpa [#allocation3], 1
    %s3342 = scalar_lea.sflag [#allocation3], 1
    %3343 = vsyncpa %s3342, 1

</llo_original>
